<compile_context>
chip_gen: v7x
topology: tpu7x:2x2x1
jax: 0.10.0
libtpu: 0.0.40
codegen_flags: <defaults>
</compile_context>

<pallas_src>
import numpy as np
import jax
import jax.numpy as jnp
from jax.experimental import pallas as pl
from jax.experimental.pallas import tpu as pltpu

STATE_SIZE = 32
HIDDEN = 128
BN_EPS = 1e-5


def _normalize_groups(h):
    """Per-group BatchNorm (training-mode) batch-statistic normalization.

    h: (Gt, B, F); statistics are computed over axis=1 (the per-group batch
    axis), never over the flattened Gt*B axis.  Affine is folded elsewhere.
    """
    mean = jnp.mean(h, axis=1, keepdims=True)
    hc = h - mean                                  # reuse centered h for var
    var = jnp.mean(hc * hc, axis=1, keepdims=True)
    return hc * jax.lax.rsqrt(var + BN_EPS)


def critic_kernel(state_ref, w1_ref, w2_ref, w3_ref, w4_ref, bias_ref, out_ref):
    gt, b, s = state_ref.shape
    bp = bias_ref[...]                             # (8, 128) packed fused biases (f32)

    def layer(h3, w_ref, bias_row):
        # bn (stats only, f32) -> bf16 at the dot boundary -> fused linear (f32 acc).
        hn = _normalize_groups(h3)
        hf = hn.reshape(gt * b, hn.shape[-1]).astype(jnp.bfloat16)
        y = jnp.dot(hf, w_ref[...], preferred_element_type=jnp.float32) + bias_row
        return y.reshape(gt, b, HIDDEN)

    h = jnp.maximum(layer(state_ref[...], w1_ref, bp[0:1, :]), 0.0)   # bn1+fc1+relu
    h = jnp.maximum(layer(h, w2_ref, bp[1:2, :]), 0.0)                # bn2+fc2+relu
    h = jnp.maximum(layer(h, w3_ref, bp[2:3, :]), 0.0)                # bn3+fc3+relu
    # bn4 + fc4 (padded to a lane-dense 128-wide head).  Pre-tanh: the tanh and
    # the column-0 slice happen in the wrapper (no EUP work on 127 zero lanes).
    out_ref[...] = layer(h, w4_ref, bp[3:4, :])


def fold_params(raw_params):
    """Fold BN affine into the following Linear and pack the small tensors.

    Returns (w1, w2, w3, w4_padded, bias_pack) — weights in bf16 (MXU
    operands), biases packed into one lane-dense (8, 128) f32 array.
    """
    (g1, be1, w1, b1, g2, be2, w2, b2,
     g3, be3, w3, b3, g4, be4, w4, b4) = raw_params

    def fold(gamma, beta, w, b):
        wf = (gamma.reshape(-1, 1) * w).astype(jnp.float32)   # scale rows by gamma
        bf = (beta @ w + b).astype(jnp.float32)               # (1, out)
        return wf, bf

    w1f, b1f = fold(g1, be1, w1, b1)
    w2f, b2f = fold(g2, be2, w2, b2)
    w3f, b3f = fold(g3, be3, w3, b3)
    w4f, b4f = fold(g4, be4, w4, b4)

    # Pad fc4 to a lane-dense 128-wide head; column 0 is the real Q output.
    w4p = jnp.zeros((HIDDEN, HIDDEN), jnp.float32).at[:, 0:1].set(w4f)
    b4p = jnp.zeros((1, HIDDEN), jnp.float32).at[:, 0:1].set(b4f)

    bias_pack = jnp.zeros((8, HIDDEN), jnp.float32)
    bias_pack = bias_pack.at[0:1, :].set(b1f)
    bias_pack = bias_pack.at[1:2, :].set(b2f)
    bias_pack = bias_pack.at[2:3, :].set(b3f)
    bias_pack = bias_pack.at[3:4, :].set(b4p)

    return (w1f.astype(jnp.bfloat16), w2f.astype(jnp.bfloat16),
            w3f.astype(jnp.bfloat16), w4p.astype(jnp.bfloat16), bias_pack)


def _pick_group_tile(g, b):
    # Fill the MXU M dimension: target >= 256 flattened rows (Gt*B) per step.
    gt = max(1, min(g, pl.cdiv(256, b)))
    # But keep >= 2 grid steps when possible so ("parallel",) can shard steps
    # across v7x's two TensorCores (pure overhead amortization on v5e/v6e).
    if g > 1 and pl.cdiv(g, gt) < 2:
        gt = pl.cdiv(g, 2)
    return gt


def critic_forward(state, folded_params, group_tile=None):
    """state: (G, B, state_size) or (B, state_size) f32 -> (..., 1) f32 Q.

    Each leading-group slice is one independent BatchNorm batch (one module
    forward() call).  Weights stay VMEM-resident across the grid (every
    weight's index_map returns block (0, 0)); the state/output tiles are
    streamed and double-buffered.
    """
    w1, w2, w3, w4, bias_pack = folded_params
    squeeze = state.ndim == 2
    if squeeze:
        state = state[None]
    g, b, s = state.shape

    gt = group_tile if group_tile is not None else _pick_group_tile(g, b)
    steps = pl.cdiv(g, gt)

    cost = pl.CostEstimate(
        flops=2 * g * b * (s * HIDDEN + 3 * HIDDEN * HIDDEN),
        transcendentals=g * (s + 3 * HIDDEN),          # one rsqrt per (group, feature)
        bytes_accessed=(state.size + g * b * HIDDEN + bias_pack.size) * 4
                       + (w1.size + w2.size + w3.size + w4.size) * 2,
    )

    out = pl.pallas_call(
        critic_kernel,
        out_shape=jax.ShapeDtypeStruct((g, b, HIDDEN), jnp.float32),
        grid=(steps,),
        in_specs=[
            pl.BlockSpec((gt, b, s), lambda i: (i, 0, 0)),        # state tile (streamed)
            pl.BlockSpec((s, HIDDEN), lambda i: (0, 0)),          # w1  (VMEM-resident, bf16)
            pl.BlockSpec((HIDDEN, HIDDEN), lambda i: (0, 0)),     # w2
            pl.BlockSpec((HIDDEN, HIDDEN), lambda i: (0, 0)),     # w3
            pl.BlockSpec((HIDDEN, HIDDEN), lambda i: (0, 0)),     # w4 (padded 128-wide head)
            pl.BlockSpec((8, HIDDEN), lambda i: (0, 0)),          # packed fused biases
        ],
        out_specs=pl.BlockSpec((gt, b, HIDDEN), lambda i: (i, 0, 0)),
        compiler_params=pltpu.CompilerParams(
            dimension_semantics=("parallel",)),                   # 2x on v7x megacore
        cost_estimate=cost,
    )(state, w1, w2, w3, w4, bias_pack)

    q = jnp.tanh(out[..., 0:1])                     # tanh over G*B scalars in the wrapper
    return q[0] if squeeze else q


def init_params(key, state_size=STATE_SIZE, hidden=HIDDEN):
    """Synthetic params mirroring CriticNetwork.__init__ / reset_parameters().

    Linear weights use reset_parameters() ranges (limit = 1/sqrt(out_features)
    for fc1-3, 0.003 for fc4); biases use the default Linear range
    1/sqrt(in_features).  BN affine defaults are gamma=1, beta=0; we perturb
    them slightly so the affine-folding path is genuinely exercised.
    """
    keys = jax.random.split(key, 16)

    def uniform(k, shape, limit):
        return jax.random.uniform(k, shape, jnp.float32, -limit, limit)

    w1 = uniform(keys[0], (state_size, hidden), 1.0 / np.sqrt(hidden))
    b1 = uniform(keys[1], (1, hidden), 1.0 / np.sqrt(state_size))
    w2 = uniform(keys[2], (hidden, hidden), 1.0 / np.sqrt(hidden))
    b2 = uniform(keys[3], (1, hidden), 1.0 / np.sqrt(hidden))
    w3 = uniform(keys[4], (hidden, hidden), 1.0 / np.sqrt(hidden))
    b3 = uniform(keys[5], (1, hidden), 1.0 / np.sqrt(hidden))
    w4 = uniform(keys[6], (hidden, 1), 0.003)
    b4 = uniform(keys[7], (1, 1), 1.0 / np.sqrt(hidden))

    def bn_params(kg, kb, n):
        gamma = 1.0 + 0.1 * jax.random.normal(kg, (1, n), jnp.float32)
        beta = 0.1 * jax.random.normal(kb, (1, n), jnp.float32)
        return gamma, beta

    g1, be1 = bn_params(keys[8], keys[9], state_size)
    g2, be2 = bn_params(keys[10], keys[11], hidden)
    g3, be3 = bn_params(keys[12], keys[13], hidden)
    g4, be4 = bn_params(keys[14], keys[15], hidden)

    return (g1, be1, w1, b1, g2, be2, w2, b2,
            g3, be3, w3, b3, g4, be4, w4, b4)


def critic_forward_ref(state, raw_params):
    """Pure-JAX, un-fused, f32 reference of the original module forward pass."""
    (g1, be1, w1, b1, g2, be2, w2, b2,
     g3, be3, w3, b3, g4, be4, w4, b4) = raw_params

    def bn(x, gamma, beta):
        mean = jnp.mean(x, axis=0, keepdims=True)
        var = jnp.mean((x - mean) ** 2, axis=0, keepdims=True)
        return (x - mean) * jax.lax.rsqrt(var + BN_EPS) * gamma + beta

    def one(s):
        h = jnp.maximum(bn(s, g1, be1) @ w1 + b1, 0.0)
        h = jnp.maximum(bn(h, g2, be2) @ w2 + b2, 0.0)
        h = jnp.maximum(bn(h, g3, be3) @ w3 + b3, 0.0)
        # TODO(synk): tanh on a critic Q head is unusual for DDPG, but it is
        # exactly what the reference module's forward() does, so we keep it.
        return jnp.tanh(bn(h, g4, be4) @ w4 + b4)

    if state.ndim == 2:
        return one(state)
    return jax.vmap(one)(state)


if __name__ == "__main__":
    key = jax.random.PRNGKey(0)
    k_state, k_params = jax.random.split(key)

    # 64 independent evaluation batches of 8 states each -> group-blocked into
    # 2 grid steps of 32 groups (256-row matmul LHS per step).
    GROUPS, BATCH = 64, 8
    state = jax.random.normal(k_state, (GROUPS, BATCH, STATE_SIZE), jnp.float32)

    raw_params = init_params(k_params)
    folded_params = fold_params(raw_params)

    q = critic_forward(state, folded_params)
    q = jax.block_until_ready(q)

    q_ref = critic_forward_ref(state, raw_params)
    assert q.shape == (GROUPS, BATCH, 1)
    # bf16 matmul operands (f32 accumulation) -> relaxed tolerance vs the f32 reference.
    np.testing.assert_allclose(np.asarray(q), np.asarray(q_ref), rtol=5e-2, atol=5e-3)

    print("KERNEL_OK")
</pallas_src>

<mosaic_0001>
module attributes {stable_mosaic.version = 11 : i64} {
  func.func @critic_kernel(%arg0: i32, %arg1: memref<32x8x32xf32, #tpu.memory_space<vmem>>, %arg2: memref<32x128xbf16, #tpu.memory_space<vmem>>, %arg3: memref<128x128xbf16, #tpu.memory_space<vmem>>, %arg4: memref<128x128xbf16, #tpu.memory_space<vmem>>, %arg5: memref<128x128xbf16, #tpu.memory_space<vmem>>, %arg6: memref<8x128xf32, #tpu.memory_space<vmem>>, %arg7: memref<32x8x128xf32, #tpu.memory_space<vmem>>) attributes {dimension_semantics = [#tpu.dimension_semantics<parallel>], iteration_bounds = array<i64: 2>, scalar_prefetch = 0 : i64, scratch_operands = 0 : i64, tpu.core_type = #tpu.core_type<tc>, window_params = [{transform_indices = @transform_0, window_bounds = array<i64: 32, 8, 32>}, {pipeline_mode = #tpu.pipeline_mode<synchronous>, transform_indices = @transform_1, window_bounds = array<i64: 32, 128>}, {pipeline_mode = #tpu.pipeline_mode<synchronous>, transform_indices = @transform_2, window_bounds = array<i64: 128, 128>}, {pipeline_mode = #tpu.pipeline_mode<synchronous>, transform_indices = @transform_3, window_bounds = array<i64: 128, 128>}, {pipeline_mode = #tpu.pipeline_mode<synchronous>, transform_indices = @transform_4, window_bounds = array<i64: 128, 128>}, {pipeline_mode = #tpu.pipeline_mode<synchronous>, transform_indices = @transform_5, window_bounds = array<i64: 8, 128>}, {transform_indices = @transform_6, window_bounds = array<i64: 32, 8, 128>}]} {
    %c0 = arith.constant 0 : index
    %c0_0 = arith.constant 0 : index
    %0 = vector.load %arg6[%c0, %c0_0] : memref<8x128xf32, #tpu.memory_space<vmem>>, vector<8x128xf32>
    %c0_1 = arith.constant 0 : index
    %c0_2 = arith.constant 0 : index
    %c0_3 = arith.constant 0 : index
    %1 = vector.load %arg1[%c0_1, %c0_2, %c0_3] : memref<32x8x32xf32, #tpu.memory_space<vmem>>, vector<32x8x32xf32>
    %2 = vector.extract_strided_slice %0 {offsets = [0, 0], sizes = [1, 128], strides = [1, 1]} : vector<8x128xf32> to vector<1x128xf32>
    %cst = arith.constant dense<0.000000e+00> : vector<32x32xf32>
    %3 = vector.multi_reduction <add>, %1, %cst [1] : vector<32x8x32xf32> to vector<32x32xf32>
    %4 = vector.shape_cast %3 : vector<32x32xf32> to vector<32x1x32xf32>
    %cst_4 = arith.constant 8.000000e+00 : f32
    %5 = vector.broadcast %cst_4 : f32 to vector<32x1x32xf32>
    %6 = arith.divf %4, %5 : vector<32x1x32xf32>
    %7 = vector.broadcast %6 : vector<32x1x32xf32> to vector<32x8x32xf32>
    %8 = arith.subf %1, %7 : vector<32x8x32xf32>
    %9 = arith.mulf %8, %8 : vector<32x8x32xf32>
    %cst_5 = arith.constant dense<0.000000e+00> : vector<32x32xf32>
    %10 = vector.multi_reduction <add>, %9, %cst_5 [1] : vector<32x8x32xf32> to vector<32x32xf32>
    %11 = vector.shape_cast %10 : vector<32x32xf32> to vector<32x1x32xf32>
    %cst_6 = arith.constant 8.000000e+00 : f32
    %12 = vector.broadcast %cst_6 : f32 to vector<32x1x32xf32>
    %13 = arith.divf %11, %12 : vector<32x1x32xf32>
    %cst_7 = arith.constant 9.99999974E-6 : f32
    %14 = vector.broadcast %cst_7 : f32 to vector<32x1x32xf32>
    %15 = arith.addf %13, %14 : vector<32x1x32xf32>
    %16 = math.rsqrt %15 : vector<32x1x32xf32>
    %17 = vector.broadcast %16 : vector<32x1x32xf32> to vector<32x8x32xf32>
    %18 = arith.mulf %8, %17 : vector<32x8x32xf32>
    %19 = vector.shape_cast %18 : vector<32x8x32xf32> to vector<256x32xf32>
    %20 = arith.truncf %19 : vector<256x32xf32> to vector<256x32xbf16>
    %c0_8 = arith.constant 0 : index
    %c0_9 = arith.constant 0 : index
    %21 = vector.load %arg2[%c0_8, %c0_9] : memref<32x128xbf16, #tpu.memory_space<vmem>>, vector<32x128xbf16>
    %cst_10 = arith.constant dense<0.000000e+00> : vector<256x128xf32>
    %22 = tpu.matmul %20, %21, %cst_10 {dimension_numbers = #tpu.dot_dimension_numbers<[1], [0], [0], [1], [0, 0, 1, 1], [], []>} : vector<256x32xbf16>, vector<32x128xbf16>, vector<256x128xf32> -> vector<256x128xf32>
    %23 = vector.broadcast %2 : vector<1x128xf32> to vector<256x128xf32>
    %24 = arith.addf %22, %23 : vector<256x128xf32>
    %25 = vector.shape_cast %24 : vector<256x128xf32> to vector<32x8x128xf32>
    %cst_11 = arith.constant 0.000000e+00 : f32
    %26 = vector.broadcast %cst_11 : f32 to vector<32x8x128xf32>
    %27 = arith.maximumf %25, %26 : vector<32x8x128xf32>
    %28 = vector.extract_strided_slice %0 {offsets = [1, 0], sizes = [1, 128], strides = [1, 1]} : vector<8x128xf32> to vector<1x128xf32>
    %cst_12 = arith.constant dense<0.000000e+00> : vector<32x128xf32>
    %29 = vector.multi_reduction <add>, %27, %cst_12 [1] : vector<32x8x128xf32> to vector<32x128xf32>
    %30 = vector.shape_cast %29 : vector<32x128xf32> to vector<32x1x128xf32>
    %cst_13 = arith.constant 8.000000e+00 : f32
    %31 = vector.broadcast %cst_13 : f32 to vector<32x1x128xf32>
    %32 = arith.divf %30, %31 : vector<32x1x128xf32>
    %33 = vector.broadcast %32 : vector<32x1x128xf32> to vector<32x8x128xf32>
    %34 = arith.subf %27, %33 : vector<32x8x128xf32>
    %35 = arith.mulf %34, %34 : vector<32x8x128xf32>
    %cst_14 = arith.constant dense<0.000000e+00> : vector<32x128xf32>
    %36 = vector.multi_reduction <add>, %35, %cst_14 [1] : vector<32x8x128xf32> to vector<32x128xf32>
    %37 = vector.shape_cast %36 : vector<32x128xf32> to vector<32x1x128xf32>
    %cst_15 = arith.constant 8.000000e+00 : f32
    %38 = vector.broadcast %cst_15 : f32 to vector<32x1x128xf32>
    %39 = arith.divf %37, %38 : vector<32x1x128xf32>
    %cst_16 = arith.constant 9.99999974E-6 : f32
    %40 = vector.broadcast %cst_16 : f32 to vector<32x1x128xf32>
    %41 = arith.addf %39, %40 : vector<32x1x128xf32>
    %42 = math.rsqrt %41 : vector<32x1x128xf32>
    %43 = vector.broadcast %42 : vector<32x1x128xf32> to vector<32x8x128xf32>
    %44 = arith.mulf %34, %43 : vector<32x8x128xf32>
    %45 = vector.shape_cast %44 : vector<32x8x128xf32> to vector<256x128xf32>
    %46 = arith.truncf %45 : vector<256x128xf32> to vector<256x128xbf16>
    %c0_17 = arith.constant 0 : index
    %c0_18 = arith.constant 0 : index
    %47 = vector.load %arg3[%c0_17, %c0_18] : memref<128x128xbf16, #tpu.memory_space<vmem>>, vector<128x128xbf16>
    %cst_19 = arith.constant dense<0.000000e+00> : vector<256x128xf32>
    %48 = tpu.matmul %46, %47, %cst_19 {dimension_numbers = #tpu.dot_dimension_numbers<[1], [0], [0], [1], [0, 0, 1, 1], [], []>} : vector<256x128xbf16>, vector<128x128xbf16>, vector<256x128xf32> -> vector<256x128xf32>
    %49 = vector.broadcast %28 : vector<1x128xf32> to vector<256x128xf32>
    %50 = arith.addf %48, %49 : vector<256x128xf32>
    %51 = vector.shape_cast %50 : vector<256x128xf32> to vector<32x8x128xf32>
    %cst_20 = arith.constant 0.000000e+00 : f32
    %52 = vector.broadcast %cst_20 : f32 to vector<32x8x128xf32>
    %53 = arith.maximumf %51, %52 : vector<32x8x128xf32>
    %54 = vector.extract_strided_slice %0 {offsets = [2, 0], sizes = [1, 128], strides = [1, 1]} : vector<8x128xf32> to vector<1x128xf32>
    %cst_21 = arith.constant dense<0.000000e+00> : vector<32x128xf32>
    %55 = vector.multi_reduction <add>, %53, %cst_21 [1] : vector<32x8x128xf32> to vector<32x128xf32>
    %56 = vector.shape_cast %55 : vector<32x128xf32> to vector<32x1x128xf32>
    %cst_22 = arith.constant 8.000000e+00 : f32
    %57 = vector.broadcast %cst_22 : f32 to vector<32x1x128xf32>
    %58 = arith.divf %56, %57 : vector<32x1x128xf32>
    %59 = vector.broadcast %58 : vector<32x1x128xf32> to vector<32x8x128xf32>
    %60 = arith.subf %53, %59 : vector<32x8x128xf32>
    %61 = arith.mulf %60, %60 : vector<32x8x128xf32>
    %cst_23 = arith.constant dense<0.000000e+00> : vector<32x128xf32>
    %62 = vector.multi_reduction <add>, %61, %cst_23 [1] : vector<32x8x128xf32> to vector<32x128xf32>
    %63 = vector.shape_cast %62 : vector<32x128xf32> to vector<32x1x128xf32>
    %cst_24 = arith.constant 8.000000e+00 : f32
    %64 = vector.broadcast %cst_24 : f32 to vector<32x1x128xf32>
    %65 = arith.divf %63, %64 : vector<32x1x128xf32>
    %cst_25 = arith.constant 9.99999974E-6 : f32
    %66 = vector.broadcast %cst_25 : f32 to vector<32x1x128xf32>
    %67 = arith.addf %65, %66 : vector<32x1x128xf32>
    %68 = math.rsqrt %67 : vector<32x1x128xf32>
    %69 = vector.broadcast %68 : vector<32x1x128xf32> to vector<32x8x128xf32>
    %70 = arith.mulf %60, %69 : vector<32x8x128xf32>
    %71 = vector.shape_cast %70 : vector<32x8x128xf32> to vector<256x128xf32>
    %72 = arith.truncf %71 : vector<256x128xf32> to vector<256x128xbf16>
    %c0_26 = arith.constant 0 : index
    %c0_27 = arith.constant 0 : index
    %73 = vector.load %arg4[%c0_26, %c0_27] : memref<128x128xbf16, #tpu.memory_space<vmem>>, vector<128x128xbf16>
    %cst_28 = arith.constant dense<0.000000e+00> : vector<256x128xf32>
    %74 = tpu.matmul %72, %73, %cst_28 {dimension_numbers = #tpu.dot_dimension_numbers<[1], [0], [0], [1], [0, 0, 1, 1], [], []>} : vector<256x128xbf16>, vector<128x128xbf16>, vector<256x128xf32> -> vector<256x128xf32>
    %75 = vector.broadcast %54 : vector<1x128xf32> to vector<256x128xf32>
    %76 = arith.addf %74, %75 : vector<256x128xf32>
    %77 = vector.shape_cast %76 : vector<256x128xf32> to vector<32x8x128xf32>
    %cst_29 = arith.constant 0.000000e+00 : f32
    %78 = vector.broadcast %cst_29 : f32 to vector<32x8x128xf32>
    %79 = arith.maximumf %77, %78 : vector<32x8x128xf32>
    %80 = vector.extract_strided_slice %0 {offsets = [3, 0], sizes = [1, 128], strides = [1, 1]} : vector<8x128xf32> to vector<1x128xf32>
    %cst_30 = arith.constant dense<0.000000e+00> : vector<32x128xf32>
    %81 = vector.multi_reduction <add>, %79, %cst_30 [1] : vector<32x8x128xf32> to vector<32x128xf32>
    %82 = vector.shape_cast %81 : vector<32x128xf32> to vector<32x1x128xf32>
    %cst_31 = arith.constant 8.000000e+00 : f32
    %83 = vector.broadcast %cst_31 : f32 to vector<32x1x128xf32>
    %84 = arith.divf %82, %83 : vector<32x1x128xf32>
    %85 = vector.broadcast %84 : vector<32x1x128xf32> to vector<32x8x128xf32>
    %86 = arith.subf %79, %85 : vector<32x8x128xf32>
    %87 = arith.mulf %86, %86 : vector<32x8x128xf32>
    %cst_32 = arith.constant dense<0.000000e+00> : vector<32x128xf32>
    %88 = vector.multi_reduction <add>, %87, %cst_32 [1] : vector<32x8x128xf32> to vector<32x128xf32>
    %89 = vector.shape_cast %88 : vector<32x128xf32> to vector<32x1x128xf32>
    %cst_33 = arith.constant 8.000000e+00 : f32
    %90 = vector.broadcast %cst_33 : f32 to vector<32x1x128xf32>
    %91 = arith.divf %89, %90 : vector<32x1x128xf32>
    %cst_34 = arith.constant 9.99999974E-6 : f32
    %92 = vector.broadcast %cst_34 : f32 to vector<32x1x128xf32>
    %93 = arith.addf %91, %92 : vector<32x1x128xf32>
    %94 = math.rsqrt %93 : vector<32x1x128xf32>
    %95 = vector.broadcast %94 : vector<32x1x128xf32> to vector<32x8x128xf32>
    %96 = arith.mulf %86, %95 : vector<32x8x128xf32>
    %97 = vector.shape_cast %96 : vector<32x8x128xf32> to vector<256x128xf32>
    %98 = arith.truncf %97 : vector<256x128xf32> to vector<256x128xbf16>
    %c0_35 = arith.constant 0 : index
    %c0_36 = arith.constant 0 : index
    %99 = vector.load %arg5[%c0_35, %c0_36] : memref<128x128xbf16, #tpu.memory_space<vmem>>, vector<128x128xbf16>
    %cst_37 = arith.constant dense<0.000000e+00> : vector<256x128xf32>
    %100 = tpu.matmul %98, %99, %cst_37 {dimension_numbers = #tpu.dot_dimension_numbers<[1], [0], [0], [1], [0, 0, 1, 1], [], []>} : vector<256x128xbf16>, vector<128x128xbf16>, vector<256x128xf32> -> vector<256x128xf32>
    %101 = vector.broadcast %80 : vector<1x128xf32> to vector<256x128xf32>
    %102 = arith.addf %100, %101 : vector<256x128xf32>
    %103 = vector.shape_cast %102 : vector<256x128xf32> to vector<32x8x128xf32>
    %c0_38 = arith.constant 0 : index
    %c0_39 = arith.constant 0 : index
    %c0_40 = arith.constant 0 : index
    %104 = vector.load %arg7[%c0_38, %c0_39, %c0_40] : memref<32x8x128xf32, #tpu.memory_space<vmem>>, vector<32x8x128xf32>
    tpu.vector_store %arg7[%c0_38, %c0_39, %c0_40], %103 {strides = array<i32>} : memref<32x8x128xf32, #tpu.memory_space<vmem>>, vector<32x8x128xf32>,
    return
  }
  func.func @transform_0(%arg0: i32) -> (i32, i32, i32) {
    %c0_i32 = arith.constant 0 : i32
    %c0_i32_0 = arith.constant 0 : i32
    %c0_i32_1 = arith.constant 0 : i32
    return %arg0, %c0_i32, %c0_i32_0 : i32, i32, i32
  }
  func.func @transform_1(%arg0: i32) -> (i32, i32) {
    %c0_i32 = arith.constant 0 : i32
    %c0_i32_0 = arith.constant 0 : i32
    %c0_i32_1 = arith.constant 0 : i32
    return %c0_i32, %c0_i32_0 : i32, i32
  }
  func.func @transform_2(%arg0: i32) -> (i32, i32) {
    %c0_i32 = arith.constant 0 : i32
    %c0_i32_0 = arith.constant 0 : i32
    %c0_i32_1 = arith.constant 0 : i32
    return %c0_i32, %c0_i32_0 : i32, i32
  }
  func.func @transform_3(%arg0: i32) -> (i32, i32) {
    %c0_i32 = arith.constant 0 : i32
    %c0_i32_0 = arith.constant 0 : i32
    %c0_i32_1 = arith.constant 0 : i32
    return %c0_i32, %c0_i32_0 : i32, i32
  }
  func.func @transform_4(%arg0: i32) -> (i32, i32) {
    %c0_i32 = arith.constant 0 : i32
    %c0_i32_0 = arith.constant 0 : i32
    %c0_i32_1 = arith.constant 0 : i32
    return %c0_i32, %c0_i32_0 : i32, i32
  }
  func.func @transform_5(%arg0: i32) -> (i32, i32) {
    %c0_i32 = arith.constant 0 : i32
    %c0_i32_0 = arith.constant 0 : i32
    %c0_i32_1 = arith.constant 0 : i32
    return %c0_i32, %c0_i32_0 : i32, i32
  }
  func.func @transform_6(%arg0: i32) -> (i32, i32, i32) {
    %c0_i32 = arith.constant 0 : i32
    %c0_i32_0 = arith.constant 0 : i32
    %c0_i32_1 = arith.constant 0 : i32
    return %arg0, %c0_i32, %c0_i32_0 : i32, i32, i32
  }
}

</mosaic_0001>

<llo_original>
// kernel: tpu_custom_call.1
$region0: #{tpu_custom_call.1}
  #allocation0 [shape = 'u32[]', space=smem, size = 0x4, offset = 0x4, fixed_abs, tag = 'smem constant byte address 0x4 - core index']
  #allocation1 [shape = 'u32[144,128]{1,0:T(1,128)}', space=vmem, size = 0x12000, scoped, tag = 'internal scratch']
  %s0 = inlined_call_operand.vmem [shape: f32[64,8,32], index: 0, kind: input, shape index: {}]
  %s1 = inlined_call_operand.vmem [shape: bf16[32,128], index: 1, kind: input, shape index: {}]
  %s2 = inlined_call_operand.vmem [shape: bf16[128,128], index: 2, kind: input, shape index: {}]
  %s3 = inlined_call_operand.vmem [shape: bf16[128,128], index: 3, kind: input, shape index: {}]
  %s4 = inlined_call_operand.vmem [shape: bf16[128,128], index: 4, kind: input, shape index: {}]
  %s5 = inlined_call_operand.vmem [shape: f32[8,128], index: 5, kind: input, shape index: {}]
  %s6 = inlined_call_operand.hbm [shape: f32[64,8,128], index: 6, kind: output, shape index: {}]
  %s7 = sld [smem:[#allocation0]]
  $region57: #{tpu_custom_call.1} parent=0
    _
  %s9 = ssub.s32 1, %s7
  %s10 = scalar_select 0, %s9, %s7
  $region1: #{tpu_custom_call.1} parent=0
    #allocation2 [shape = 'u8[262144]{0}', space=vmem, size = 0x40000, scoped, tag = 'output window, operand 0']
    #allocation3 [shape = 's32[2]{0}', space=sflag, size = 0x8, scoped, tag = 'scoped memory for tpu_custom_call.1']
    %11 = vsyncpa [#allocation3], 0
    %s12 = scalar_lea.sflag [#allocation3], 1
    %13 = vsyncpa %s12, 0
    loop: start=0, step=1, limit=4
    $region2: #{tpu_custom_call.1} parent=1 // loop_pre_header
      _
    $region3: #{tpu_custom_call.1} parent=1 // loop_header
      %s15 = sphi 0, %s19
      %p16 = scmp.ge.s32.totalorder %s15, 4
      %s25 = sphi 0, %s27
      %s28 = sphi 0, %s25
      %s29 = sphi 0, %s28
      %s45 = sphi 0, %s29
      %s49 = sphi 0, %s49
      %s51 = sphi 0, %s49
      %s52 = sphi 0, %s51
      %s66 = sphi 0, %s52
      %s70 = sphi 0, %s70
      %s72 = sphi 0, %s70
      %s73 = sphi 0, %s72
      %s87 = sphi 0, %s73
      %s91 = sphi 0, %s91
      %s93 = sphi 0, %s91
      %s94 = sphi 0, %s93
      %s108 = sphi 0, %s94
      %s112 = sphi 0, %s112
      %s114 = sphi 0, %s112
      %s115 = sphi 0, %s114
      %s129 = sphi 0, %s115
      %s133 = sphi 0, %s133
      %s135 = sphi 0, %s133
      %s136 = sphi 0, %s135
      %s150 = sphi 0, %s136
      %s156 = sphi 0, %s158
      %s159 = sphi 0, %s156
      %s160 = sphi 0, %s159
      %s176 = sphi 0, %s160
    $region4: #{tpu_custom_call.1} parent=1 // loop_header_branch
      %18 = sbr.rel (%p16) target = $region8
    $region5: #{tpu_custom_call.1} parent=1 // loop_body
      %s20 = ssub.s32 %s15, 1
      %s21 = ssub.s32 %s15, 2
      %s22 = sadd.s32 %s15, 1
      %s23 = ssub.s32 %s15, %s22
      %p24 = scmp.eq.s32.totalorder %s23, 0
      %s26 = sadd.s32 %s25, 1
      %s27 = scalar_select %p24, %s25, %s26
      %p30 = pneg %p24
      %p31 = scmp.eq.s32.totalorder %s15, 1
      %p32 = por %p30, %p31
      %p33 = scmp.ne.s32.totalorder %s25, %s28
      %p34 = scmp.eq.s32.totalorder %s15, 0
      %p35 = por %p33, %p34
      %p36 = scmp.ne.s32.totalorder %s25, %s28
      %p37 = scmp.eq.s32.totalorder %s20, 1
      %p38 = por %p36, %p37
      %p39 = scmp.ne.s32.totalorder %s28, %s29
      %p40 = scmp.eq.s32.totalorder %s20, 0
      %p41 = por %p39, %p40
      %p42 = scmp.ne.s32.totalorder %s28, %s29
      %p43 = scmp.eq.s32.totalorder %s21, 1
      %p44 = por %p42, %p43
      %p46 = scmp.ne.s32.totalorder %s29, %s45
      %p47 = scmp.eq.s32.totalorder %s21, 0
      %p48 = por %p46, %p47
      %s50 = sadd.s32 %s49, 1
      %p53 = scmp.eq.s32.totalorder %s15, 1
      %p54 = scmp.ne.s32.totalorder %s49, %s51
      %p55 = scmp.eq.s32.totalorder %s15, 0
      %p56 = por %p54, %p55
      %p57 = scmp.ne.s32.totalorder %s49, %s51
      %p58 = scmp.eq.s32.totalorder %s20, 1
      %p59 = por %p57, %p58
      %p60 = scmp.ne.s32.totalorder %s51, %s52
      %p61 = scmp.eq.s32.totalorder %s20, 0
      %p62 = por %p60, %p61
      %p63 = scmp.ne.s32.totalorder %s51, %s52
      %p64 = scmp.eq.s32.totalorder %s21, 1
      %p65 = por %p63, %p64
      %p67 = scmp.ne.s32.totalorder %s52, %s66
      %p68 = scmp.eq.s32.totalorder %s21, 0
      %p69 = por %p67, %p68
      %s71 = sadd.s32 %s70, 1
      %p74 = scmp.eq.s32.totalorder %s15, 1
      %p75 = scmp.ne.s32.totalorder %s70, %s72
      %p76 = scmp.eq.s32.totalorder %s15, 0
      %p77 = por %p75, %p76
      %p78 = scmp.ne.s32.totalorder %s70, %s72
      %p79 = scmp.eq.s32.totalorder %s20, 1
      %p80 = por %p78, %p79
      %p81 = scmp.ne.s32.totalorder %s72, %s73
      %p82 = scmp.eq.s32.totalorder %s20, 0
      %p83 = por %p81, %p82
      %p84 = scmp.ne.s32.totalorder %s72, %s73
      %p85 = scmp.eq.s32.totalorder %s21, 1
      %p86 = por %p84, %p85
      %p88 = scmp.ne.s32.totalorder %s73, %s87
      %p89 = scmp.eq.s32.totalorder %s21, 0
      %p90 = por %p88, %p89
      %s92 = sadd.s32 %s91, 1
      %p95 = scmp.eq.s32.totalorder %s15, 1
      %p96 = scmp.ne.s32.totalorder %s91, %s93
      %p97 = scmp.eq.s32.totalorder %s15, 0
      %p98 = por %p96, %p97
      %p99 = scmp.ne.s32.totalorder %s91, %s93
      %p100 = scmp.eq.s32.totalorder %s20, 1
      %p101 = por %p99, %p100
      %p102 = scmp.ne.s32.totalorder %s93, %s94
      %p103 = scmp.eq.s32.totalorder %s20, 0
      %p104 = por %p102, %p103
      %p105 = scmp.ne.s32.totalorder %s93, %s94
      %p106 = scmp.eq.s32.totalorder %s21, 1
      %p107 = por %p105, %p106
      %p109 = scmp.ne.s32.totalorder %s94, %s108
      %p110 = scmp.eq.s32.totalorder %s21, 0
      %p111 = por %p109, %p110
      %s113 = sadd.s32 %s112, 1
      %p116 = scmp.eq.s32.totalorder %s15, 1
      %p117 = scmp.ne.s32.totalorder %s112, %s114
      %p118 = scmp.eq.s32.totalorder %s15, 0
      %p119 = por %p117, %p118
      %p120 = scmp.ne.s32.totalorder %s112, %s114
      %p121 = scmp.eq.s32.totalorder %s20, 1
      %p122 = por %p120, %p121
      %p123 = scmp.ne.s32.totalorder %s114, %s115
      %p124 = scmp.eq.s32.totalorder %s20, 0
      %p125 = por %p123, %p124
      %p126 = scmp.ne.s32.totalorder %s114, %s115
      %p127 = scmp.eq.s32.totalorder %s21, 1
      %p128 = por %p126, %p127
      %p130 = scmp.ne.s32.totalorder %s115, %s129
      %p131 = scmp.eq.s32.totalorder %s21, 0
      %p132 = por %p130, %p131
      %s134 = sadd.s32 %s133, 1
      %p137 = scmp.eq.s32.totalorder %s15, 1
      %p138 = scmp.ne.s32.totalorder %s133, %s135
      %p139 = scmp.eq.s32.totalorder %s15, 0
      %p140 = por %p138, %p139
      %p141 = scmp.ne.s32.totalorder %s133, %s135
      %p142 = scmp.eq.s32.totalorder %s20, 1
      %p143 = por %p141, %p142
      %p144 = scmp.ne.s32.totalorder %s135, %s136
      %p145 = scmp.eq.s32.totalorder %s20, 0
      %p146 = por %p144, %p145
      %p147 = scmp.ne.s32.totalorder %s135, %s136
      %p148 = scmp.eq.s32.totalorder %s21, 1
      %p149 = por %p147, %p148
      %p151 = scmp.ne.s32.totalorder %s136, %s150
      %p152 = scmp.eq.s32.totalorder %s21, 0
      %p153 = por %p151, %p152
      %s154 = ssub.s32 %s15, %s22
      %p155 = scmp.eq.s32.totalorder %s154, 0
      %s157 = sadd.s32 %s156, 1
      %s158 = scalar_select %p155, %s156, %s157
      %p161 = pneg %p155
      %p162 = scmp.eq.s32.totalorder %s15, 1
      %p163 = por %p161, %p162
      %p164 = scmp.ne.s32.totalorder %s156, %s159
      %p165 = scmp.eq.s32.totalorder %s15, 0
      %p166 = por %p164, %p165
      %p167 = scmp.ne.s32.totalorder %s156, %s159
      %p168 = scmp.eq.s32.totalorder %s20, 1
      %p169 = por %p167, %p168
      %p170 = scmp.ne.s32.totalorder %s159, %s160
      %p171 = scmp.eq.s32.totalorder %s20, 0
      %p172 = por %p170, %p171
      %p173 = scmp.ne.s32.totalorder %s159, %s160
      %p174 = scmp.eq.s32.totalorder %s21, 1
      %p175 = por %p173, %p174
      %p177 = scmp.ne.s32.totalorder %s160, %s176
      %p178 = scmp.eq.s32.totalorder %s21, 0
      %p179 = por %p177, %p178
      %p180 = scmp.le.s32.totalorder 1, %s15
      %p181 = scmp.lt.s32.totalorder %s15, 3
      %p182 = pnand %p180, %p181
      %p183 = pneg %p182
      // Predicated region
      $region9: #{tpu_custom_call.1} parent=5 // pred_check
        _
      $region10: #{tpu_custom_call.1} parent=5 // pred_check_branch
        %185 = sbr.rel (%p182) target = $region12
      $region11: #{tpu_custom_call.1} parent=5 // pred_region
        %s186 = ssub.s32 %s15, 1
        // Predicated region
        $region13: #{tpu_custom_call.1} parent=11 // pred_check
          %p187 = pneg %p62
        $region14: #{tpu_custom_call.1} parent=11 // pred_check_branch
          %189 = sbr.rel (%p187) target = $region16
        $region15: #{tpu_custom_call.1} parent=11 // pred_region
          _
        $region16: #{tpu_custom_call.1} parent=11 // pred_fallthru
          _
        // Predicated region
        $region17: #{tpu_custom_call.1} parent=11 // pred_check
          %p190 = pneg %p83
        $region18: #{tpu_custom_call.1} parent=11 // pred_check_branch
          %192 = sbr.rel (%p190) target = $region20
        $region19: #{tpu_custom_call.1} parent=11 // pred_region
          _
        $region20: #{tpu_custom_call.1} parent=11 // pred_fallthru
          _
        // Predicated region
        $region21: #{tpu_custom_call.1} parent=11 // pred_check
          %p193 = pneg %p104
        $region22: #{tpu_custom_call.1} parent=11 // pred_check_branch
          %195 = sbr.rel (%p193) target = $region24
        $region23: #{tpu_custom_call.1} parent=11 // pred_region
          _
        $region24: #{tpu_custom_call.1} parent=11 // pred_fallthru
          _
        // Predicated region
        $region25: #{tpu_custom_call.1} parent=11 // pred_check
          %p196 = pneg %p125
        $region26: #{tpu_custom_call.1} parent=11 // pred_check_branch
          %198 = sbr.rel (%p196) target = $region28
        $region27: #{tpu_custom_call.1} parent=11 // pred_region
          _
        $region28: #{tpu_custom_call.1} parent=11 // pred_fallthru
          _
        // Predicated region
        $region29: #{tpu_custom_call.1} parent=11 // pred_check
          %p199 = pneg %p146
        $region30: #{tpu_custom_call.1} parent=11 // pred_check_branch
          %201 = sbr.rel (%p199) target = $region32
        $region31: #{tpu_custom_call.1} parent=11 // pred_region
          _
        $region32: #{tpu_custom_call.1} parent=11 // pred_fallthru
          _
      $region12: #{tpu_custom_call.1} parent=5 // pred_fallthru
        _
      %p202 = scmp.lt.s32.totalorder %s15, 2
      // Predicated region
      $region33: #{tpu_custom_call.1} parent=5 // pred_check
        %p203 = pneg %p202
      $region34: #{tpu_custom_call.1} parent=5 // pred_check_branch
        %205 = sbr.rel (%p203) target = $region36
      $region35: #{tpu_custom_call.1} parent=5 // pred_region
        // Predicated region
        $region37: #{tpu_custom_call.1} parent=35 // pred_check
          %p206 = pneg %p35
        $region38: #{tpu_custom_call.1} parent=35 // pred_check_branch
          %208 = sbr.rel (%p206) target = $region40
        $region39: #{tpu_custom_call.1} parent=35 // pred_region
          %s209 = smul.u32 32, %s15
          %p210 = scmp.lt.s32.totalorder %s209, 63
          %s211 = scalar_select %p210, %s209, 63
          %s212 = smul.addr %s211, 8
          %s213 = scalar_lea.vmem %s0, %s212
          %s214 = smul.u32 32, %s15
        $region40: #{tpu_custom_call.1} parent=35 // pred_fallthru
          _
      $region36: #{tpu_custom_call.1} parent=5 // pred_fallthru
        _
      %p215 = scmp.le.s32.totalorder 1, %s15
      %p216 = scmp.lt.s32.totalorder %s15, 3
      %p217 = pnand %p215, %p216
      %p218 = pneg %p217
      // Predicated region
      $region41: #{tpu_custom_call.1} parent=5 // pred_check
        _
      $region42: #{tpu_custom_call.1} parent=5 // pred_check_branch
        %220 = sbr.rel (%p217) target = $region44
      $region43: #{tpu_custom_call.1} parent=5 // pred_region
        %s221 = ssub.s32 %s15, 1
        %s222 = smul.u32 32, %s20
        %p223 = scmp.lt.s32.totalorder %s222, 63
        %s224 = scalar_select %p223, %s222, 63
        %s225 = smul.addr %s224, 8
        %s226 = scalar_lea.vmem %s0, %s225
        %p227 = pneg %p41
        %p228 = pneg %p38
        %p229 = pneg %p62
        %p230 = pneg %p59
        %p231 = pneg %p83
        %p232 = pneg %p80
        %p233 = pneg %p104
        %p234 = pneg %p101
        %p235 = pneg %p125
        %p236 = pneg %p122
        %p237 = pneg %p146
        %p238 = pneg %p143
        %p239 = pneg %p172
        %p240 = pneg %p169
        %s241 = sand.u32 %s159, 1
        %s242 = scalar_lea.sflag [#allocation3], %s241
        %s243 = sand.u32 %s159, 1
        %s244 = smul.addr %s243, 256
        %s245 = scalar_lea.vmem [#allocation2], %s244
        %s246 = smul.u32 32, %s20
        %p247 = scmp.lt.s32.totalorder %s246, 63
        %s248 = scalar_select %p247, %s246, 63
        %s249 = smul.addr %s248, 8
        %s250 = scalar_lea.vmem %s0, %s249
        %s251 = smul.u32 32, %s20
        %s252 = smul.u32 32, %s20
        %v254 = vld [vmem:[%s5] sm:$0xff]
        %v255 = vld [vmem:[%s250] sm:$0xff]
        %v256 = vld [vmem:[%s250 + $0x8] sm:$0xff]
        %v257 = vld [vmem:[%s250 + $0x10] sm:$0xff]
        %v258 = vld [vmem:[%s250 + $0x18] sm:$0xff]
        %v259 = vld [vmem:[%s250 + $0x20] sm:$0xff]
        %v260 = vld [vmem:[%s250 + $0x28] sm:$0xff]
        %v261 = vld [vmem:[%s250 + $0x30] sm:$0xff]
        %v262 = vld [vmem:[%s250 + $0x38] sm:$0xff]
        %v263 = vld [vmem:[%s250 + $0x40] sm:$0xff]
        %v264 = vld [vmem:[%s250 + $0x48] sm:$0xff]
        %v265 = vld [vmem:[%s250 + $0x50] sm:$0xff]
        %v266 = vld [vmem:[%s250 + $0x58] sm:$0xff]
        %v267 = vld [vmem:[%s250 + $0x60] sm:$0xff]
        %v268 = vld [vmem:[%s250 + $0x68] sm:$0xff]
        %v269 = vld [vmem:[%s250 + $0x70] sm:$0xff]
        %v270 = vld [vmem:[%s250 + $0x78] sm:$0xff]
        %v271 = vld [vmem:[%s250 + $0x80] sm:$0xff]
        %v272 = vld [vmem:[%s250 + $0x88] sm:$0xff]
        %v273 = vld [vmem:[%s250 + $0x90] sm:$0xff]
        %v274 = vld [vmem:[%s250 + $0x98] sm:$0xff]
        %v275 = vld [vmem:[%s250 + $0xa0] sm:$0xff]
        %v276 = vld [vmem:[%s250 + $0xa8] sm:$0xff]
        %v277 = vld [vmem:[%s250 + $0xb0] sm:$0xff]
        %v278 = vld [vmem:[%s250 + $0xb8] sm:$0xff]
        %v279 = vld [vmem:[%s250 + $0xc0] sm:$0xff]
        %v280 = vld [vmem:[%s250 + $0xc8] sm:$0xff]
        %v281 = vld [vmem:[%s250 + $0xd0] sm:$0xff]
        %v282 = vld [vmem:[%s250 + $0xd8] sm:$0xff]
        %v283 = vld [vmem:[%s250 + $0xe0] sm:$0xff]
        %v284 = vld [vmem:[%s250 + $0xe8] sm:$0xff]
        %v285 = vld [vmem:[%s250 + $0xf0] sm:$0xff]
        %v286 = vld [vmem:[%s250 + $0xf8] sm:$0xff]
        %vm287 = vcmask 261120
        %v288 = vsel %vm287, %v255, 0.0
        %v289 = vrot.slane %v288, 4
        %v290 = vadd.f32 %v288, %v289
        %v291 = vrot.slane %v290, 2
        %v292 = vadd.f32 %v290, %v291
        %v293 = vrot.slane %v292, 1
        %v294 = vadd.f32 %v292, %v293
        %v295 = vsel %vm287, %v256, 0.0
        %v296 = vrot.slane %v295, 4
        %v297 = vadd.f32 %v295, %v296
        %v298 = vrot.slane %v297, 2
        %v299 = vadd.f32 %v297, %v298
        %v300 = vrot.slane %v299, 1
        %v301 = vadd.f32 %v299, %v300
        %v302 = vsel %vm287, %v257, 0.0
        %v303 = vrot.slane %v302, 4
        %v304 = vadd.f32 %v302, %v303
        %v305 = vrot.slane %v304, 2
        %v306 = vadd.f32 %v304, %v305
        %v307 = vrot.slane %v306, 1
        %v308 = vadd.f32 %v306, %v307
        %v309 = vsel %vm287, %v258, 0.0
        %v310 = vrot.slane %v309, 4
        %v311 = vadd.f32 %v309, %v310
        %v312 = vrot.slane %v311, 2
        %v313 = vadd.f32 %v311, %v312
        %v314 = vrot.slane %v313, 1
        %v315 = vadd.f32 %v313, %v314
        %v316 = vsel %vm287, %v259, 0.0
        %v317 = vrot.slane %v316, 4
        %v318 = vadd.f32 %v316, %v317
        %v319 = vrot.slane %v318, 2
        %v320 = vadd.f32 %v318, %v319
        %v321 = vrot.slane %v320, 1
        %v322 = vadd.f32 %v320, %v321
        %v323 = vsel %vm287, %v260, 0.0
        %v324 = vrot.slane %v323, 4
        %v325 = vadd.f32 %v323, %v324
        %v326 = vrot.slane %v325, 2
        %v327 = vadd.f32 %v325, %v326
        %v328 = vrot.slane %v327, 1
        %v329 = vadd.f32 %v327, %v328
        %v330 = vsel %vm287, %v261, 0.0
        %v331 = vrot.slane %v330, 4
        %v332 = vadd.f32 %v330, %v331
        %v333 = vrot.slane %v332, 2
        %v334 = vadd.f32 %v332, %v333
        %v335 = vrot.slane %v334, 1
        %v336 = vadd.f32 %v334, %v335
        %v337 = vsel %vm287, %v262, 0.0
        %v338 = vrot.slane %v337, 4
        %v339 = vadd.f32 %v337, %v338
        %v340 = vrot.slane %v339, 2
        %v341 = vadd.f32 %v339, %v340
        %v342 = vrot.slane %v341, 1
        %v343 = vadd.f32 %v341, %v342
        %v344 = vsel %vm287, %v263, 0.0
        %v345 = vrot.slane %v344, 4
        %v346 = vadd.f32 %v344, %v345
        %v347 = vrot.slane %v346, 2
        %v348 = vadd.f32 %v346, %v347
        %v349 = vrot.slane %v348, 1
        %v350 = vadd.f32 %v348, %v349
        %v351 = vsel %vm287, %v264, 0.0
        %v352 = vrot.slane %v351, 4
        %v353 = vadd.f32 %v351, %v352
        %v354 = vrot.slane %v353, 2
        %v355 = vadd.f32 %v353, %v354
        %v356 = vrot.slane %v355, 1
        %v357 = vadd.f32 %v355, %v356
        %v358 = vsel %vm287, %v265, 0.0
        %v359 = vrot.slane %v358, 4
        %v360 = vadd.f32 %v358, %v359
        %v361 = vrot.slane %v360, 2
        %v362 = vadd.f32 %v360, %v361
        %v363 = vrot.slane %v362, 1
        %v364 = vadd.f32 %v362, %v363
        %v365 = vsel %vm287, %v266, 0.0
        %v366 = vrot.slane %v365, 4
        %v367 = vadd.f32 %v365, %v366
        %v368 = vrot.slane %v367, 2
        %v369 = vadd.f32 %v367, %v368
        %v370 = vrot.slane %v369, 1
        %v371 = vadd.f32 %v369, %v370
        %v372 = vsel %vm287, %v267, 0.0
        %v373 = vrot.slane %v372, 4
        %v374 = vadd.f32 %v372, %v373
        %v375 = vrot.slane %v374, 2
        %v376 = vadd.f32 %v374, %v375
        %v377 = vrot.slane %v376, 1
        %v378 = vadd.f32 %v376, %v377
        %v379 = vsel %vm287, %v268, 0.0
        %v380 = vrot.slane %v379, 4
        %v381 = vadd.f32 %v379, %v380
        %v382 = vrot.slane %v381, 2
        %v383 = vadd.f32 %v381, %v382
        %v384 = vrot.slane %v383, 1
        %v385 = vadd.f32 %v383, %v384
        %v386 = vsel %vm287, %v269, 0.0
        %v387 = vrot.slane %v386, 4
        %v388 = vadd.f32 %v386, %v387
        %v389 = vrot.slane %v388, 2
        %v390 = vadd.f32 %v388, %v389
        %v391 = vrot.slane %v390, 1
        %v392 = vadd.f32 %v390, %v391
        %v393 = vsel %vm287, %v270, 0.0
        %v394 = vrot.slane %v393, 4
        %v395 = vadd.f32 %v393, %v394
        %v396 = vrot.slane %v395, 2
        %v397 = vadd.f32 %v395, %v396
        %v398 = vrot.slane %v397, 1
        %v399 = vadd.f32 %v397, %v398
        %v400 = vsel %vm287, %v271, 0.0
        %v401 = vrot.slane %v400, 4
        %v402 = vadd.f32 %v400, %v401
        %v403 = vrot.slane %v402, 2
        %v404 = vadd.f32 %v402, %v403
        %v405 = vrot.slane %v404, 1
        %v406 = vadd.f32 %v404, %v405
        %v407 = vsel %vm287, %v272, 0.0
        %v408 = vrot.slane %v407, 4
        %v409 = vadd.f32 %v407, %v408
        %v410 = vrot.slane %v409, 2
        %v411 = vadd.f32 %v409, %v410
        %v412 = vrot.slane %v411, 1
        %v413 = vadd.f32 %v411, %v412
        %v414 = vsel %vm287, %v273, 0.0
        %v415 = vrot.slane %v414, 4
        %v416 = vadd.f32 %v414, %v415
        %v417 = vrot.slane %v416, 2
        %v418 = vadd.f32 %v416, %v417
        %v419 = vrot.slane %v418, 1
        %v420 = vadd.f32 %v418, %v419
        %v421 = vsel %vm287, %v274, 0.0
        %v422 = vrot.slane %v421, 4
        %v423 = vadd.f32 %v421, %v422
        %v424 = vrot.slane %v423, 2
        %v425 = vadd.f32 %v423, %v424
        %v426 = vrot.slane %v425, 1
        %v427 = vadd.f32 %v425, %v426
        %v428 = vsel %vm287, %v275, 0.0
        %v429 = vrot.slane %v428, 4
        %v430 = vadd.f32 %v428, %v429
        %v431 = vrot.slane %v430, 2
        %v432 = vadd.f32 %v430, %v431
        %v433 = vrot.slane %v432, 1
        %v434 = vadd.f32 %v432, %v433
        %v435 = vsel %vm287, %v276, 0.0
        %v436 = vrot.slane %v435, 4
        %v437 = vadd.f32 %v435, %v436
        %v438 = vrot.slane %v437, 2
        %v439 = vadd.f32 %v437, %v438
        %v440 = vrot.slane %v439, 1
        %v441 = vadd.f32 %v439, %v440
        %v442 = vsel %vm287, %v277, 0.0
        %v443 = vrot.slane %v442, 4
        %v444 = vadd.f32 %v442, %v443
        %v445 = vrot.slane %v444, 2
        %v446 = vadd.f32 %v444, %v445
        %v447 = vrot.slane %v446, 1
        %v448 = vadd.f32 %v446, %v447
        %v449 = vsel %vm287, %v278, 0.0
        %v450 = vrot.slane %v449, 4
        %v451 = vadd.f32 %v449, %v450
        %v452 = vrot.slane %v451, 2
        %v453 = vadd.f32 %v451, %v452
        %v454 = vrot.slane %v453, 1
        %v455 = vadd.f32 %v453, %v454
        %v456 = vsel %vm287, %v279, 0.0
        %v457 = vrot.slane %v456, 4
        %v458 = vadd.f32 %v456, %v457
        %v459 = vrot.slane %v458, 2
        %v460 = vadd.f32 %v458, %v459
        %v461 = vrot.slane %v460, 1
        %v462 = vadd.f32 %v460, %v461
        %v463 = vsel %vm287, %v280, 0.0
        %v464 = vrot.slane %v463, 4
        %v465 = vadd.f32 %v463, %v464
        %v466 = vrot.slane %v465, 2
        %v467 = vadd.f32 %v465, %v466
        %v468 = vrot.slane %v467, 1
        %v469 = vadd.f32 %v467, %v468
        %v470 = vsel %vm287, %v281, 0.0
        %v471 = vrot.slane %v470, 4
        %v472 = vadd.f32 %v470, %v471
        %v473 = vrot.slane %v472, 2
        %v474 = vadd.f32 %v472, %v473
        %v475 = vrot.slane %v474, 1
        %v476 = vadd.f32 %v474, %v475
        %v477 = vsel %vm287, %v282, 0.0
        %v478 = vrot.slane %v477, 4
        %v479 = vadd.f32 %v477, %v478
        %v480 = vrot.slane %v479, 2
        %v481 = vadd.f32 %v479, %v480
        %v482 = vrot.slane %v481, 1
        %v483 = vadd.f32 %v481, %v482
        %v484 = vsel %vm287, %v283, 0.0
        %v485 = vrot.slane %v484, 4
        %v486 = vadd.f32 %v484, %v485
        %v487 = vrot.slane %v486, 2
        %v488 = vadd.f32 %v486, %v487
        %v489 = vrot.slane %v488, 1
        %v490 = vadd.f32 %v488, %v489
        %v491 = vsel %vm287, %v284, 0.0
        %v492 = vrot.slane %v491, 4
        %v493 = vadd.f32 %v491, %v492
        %v494 = vrot.slane %v493, 2
        %v495 = vadd.f32 %v493, %v494
        %v496 = vrot.slane %v495, 1
        %v497 = vadd.f32 %v495, %v496
        %v498 = vsel %vm287, %v285, 0.0
        %v499 = vrot.slane %v498, 4
        %v500 = vadd.f32 %v498, %v499
        %v501 = vrot.slane %v500, 2
        %v502 = vadd.f32 %v500, %v501
        %v503 = vrot.slane %v502, 1
        %v504 = vadd.f32 %v502, %v503
        %v505 = vsel %vm287, %v286, 0.0
        %v506 = vrot.slane %v505, 4
        %v507 = vadd.f32 %v505, %v506
        %v508 = vrot.slane %v507, 2
        %v509 = vadd.f32 %v507, %v508
        %v510 = vrot.slane %v509, 1
        %v511 = vadd.f32 %v509, %v510
        %v512 = vrcp.pop 8.0
        %v513 = vmul.f32 %v294, %v512
        %v514 = vmul.f32 %v301, %v512
        %v515 = vmul.f32 %v308, %v512
        %v516 = vmul.f32 %v315, %v512
        %v517 = vmul.f32 %v322, %v512
        %v518 = vmul.f32 %v329, %v512
        %v519 = vmul.f32 %v336, %v512
        %v520 = vmul.f32 %v343, %v512
        %v521 = vmul.f32 %v350, %v512
        %v522 = vmul.f32 %v357, %v512
        %v523 = vmul.f32 %v364, %v512
        %v524 = vmul.f32 %v371, %v512
        %v525 = vmul.f32 %v378, %v512
        %v526 = vmul.f32 %v385, %v512
        %v527 = vmul.f32 %v392, %v512
        %v528 = vmul.f32 %v399, %v512
        %v529 = vmul.f32 %v406, %v512
        %v530 = vmul.f32 %v413, %v512
        %v531 = vmul.f32 %v420, %v512
        %v532 = vmul.f32 %v427, %v512
        %v533 = vmul.f32 %v434, %v512
        %v534 = vmul.f32 %v441, %v512
        %v535 = vmul.f32 %v448, %v512
        %v536 = vmul.f32 %v455, %v512
        %v537 = vmul.f32 %v462, %v512
        %v538 = vmul.f32 %v469, %v512
        %v539 = vmul.f32 %v476, %v512
        %v540 = vmul.f32 %v483, %v512
        %v541 = vmul.f32 %v490, %v512
        %v542 = vmul.f32 %v497, %v512
        %v543 = vmul.f32 %v504, %v512
        %v544 = vmul.f32 %v511, %v512
        %v545 = vsub.f32 %v255, %v513
        %v546 = vsub.f32 %v256, %v514
        %v547 = vsub.f32 %v257, %v515
        %v548 = vsub.f32 %v258, %v516
        %v549 = vsub.f32 %v259, %v517
        %v550 = vsub.f32 %v260, %v518
        %v551 = vsub.f32 %v261, %v519
        %v552 = vsub.f32 %v262, %v520
        %v553 = vsub.f32 %v263, %v521
        %v554 = vsub.f32 %v264, %v522
        %v555 = vsub.f32 %v265, %v523
        %v556 = vsub.f32 %v266, %v524
        %v557 = vsub.f32 %v267, %v525
        %v558 = vsub.f32 %v268, %v526
        %v559 = vsub.f32 %v269, %v527
        %v560 = vsub.f32 %v270, %v528
        %v561 = vsub.f32 %v271, %v529
        %v562 = vsub.f32 %v272, %v530
        %v563 = vsub.f32 %v273, %v531
        %v564 = vsub.f32 %v274, %v532
        %v565 = vsub.f32 %v275, %v533
        %v566 = vsub.f32 %v276, %v534
        %v567 = vsub.f32 %v277, %v535
        %v568 = vsub.f32 %v278, %v536
        %v569 = vsub.f32 %v279, %v537
        %v570 = vsub.f32 %v280, %v538
        %v571 = vsub.f32 %v281, %v539
        %v572 = vsub.f32 %v282, %v540
        %v573 = vsub.f32 %v283, %v541
        %v574 = vsub.f32 %v284, %v542
        %v575 = vsub.f32 %v285, %v543
        %v576 = vsub.f32 %v286, %v544
        %v577 = vmul.f32 %v545, %v545
        %v578 = vmul.f32 %v546, %v546
        %v579 = vmul.f32 %v547, %v547
        %v580 = vmul.f32 %v548, %v548
        %v581 = vmul.f32 %v549, %v549
        %v582 = vmul.f32 %v550, %v550
        %v583 = vmul.f32 %v551, %v551
        %v584 = vmul.f32 %v552, %v552
        %v585 = vmul.f32 %v553, %v553
        %v586 = vmul.f32 %v554, %v554
        %v587 = vmul.f32 %v555, %v555
        %v588 = vmul.f32 %v556, %v556
        %v589 = vmul.f32 %v557, %v557
        %v590 = vmul.f32 %v558, %v558
        %v591 = vmul.f32 %v559, %v559
        %v592 = vmul.f32 %v560, %v560
        %v593 = vmul.f32 %v561, %v561
        %v594 = vmul.f32 %v562, %v562
        %v595 = vmul.f32 %v563, %v563
        %v596 = vmul.f32 %v564, %v564
        %v597 = vmul.f32 %v565, %v565
        %v598 = vmul.f32 %v566, %v566
        %v599 = vmul.f32 %v567, %v567
        %v600 = vmul.f32 %v568, %v568
        %v601 = vmul.f32 %v569, %v569
        %v602 = vmul.f32 %v570, %v570
        %v603 = vmul.f32 %v571, %v571
        %v604 = vmul.f32 %v572, %v572
        %v605 = vmul.f32 %v573, %v573
        %v606 = vmul.f32 %v574, %v574
        %v607 = vmul.f32 %v575, %v575
        %v608 = vmul.f32 %v576, %v576
        %v609 = vsel %vm287, %v577, 0.0
        %v610 = vrot.slane %v609, 4
        %v611 = vadd.f32 %v609, %v610
        %v612 = vrot.slane %v611, 2
        %v613 = vadd.f32 %v611, %v612
        %v614 = vrot.slane %v613, 1
        %v615 = vadd.f32 %v613, %v614
        %v616 = vsel %vm287, %v578, 0.0
        %v617 = vrot.slane %v616, 4
        %v618 = vadd.f32 %v616, %v617
        %v619 = vrot.slane %v618, 2
        %v620 = vadd.f32 %v618, %v619
        %v621 = vrot.slane %v620, 1
        %v622 = vadd.f32 %v620, %v621
        %v623 = vsel %vm287, %v579, 0.0
        %v624 = vrot.slane %v623, 4
        %v625 = vadd.f32 %v623, %v624
        %v626 = vrot.slane %v625, 2
        %v627 = vadd.f32 %v625, %v626
        %v628 = vrot.slane %v627, 1
        %v629 = vadd.f32 %v627, %v628
        %v630 = vsel %vm287, %v580, 0.0
        %v631 = vrot.slane %v630, 4
        %v632 = vadd.f32 %v630, %v631
        %v633 = vrot.slane %v632, 2
        %v634 = vadd.f32 %v632, %v633
        %v635 = vrot.slane %v634, 1
        %v636 = vadd.f32 %v634, %v635
        %v637 = vsel %vm287, %v581, 0.0
        %v638 = vrot.slane %v637, 4
        %v639 = vadd.f32 %v637, %v638
        %v640 = vrot.slane %v639, 2
        %v641 = vadd.f32 %v639, %v640
        %v642 = vrot.slane %v641, 1
        %v643 = vadd.f32 %v641, %v642
        %v644 = vsel %vm287, %v582, 0.0
        %v645 = vrot.slane %v644, 4
        %v646 = vadd.f32 %v644, %v645
        %v647 = vrot.slane %v646, 2
        %v648 = vadd.f32 %v646, %v647
        %v649 = vrot.slane %v648, 1
        %v650 = vadd.f32 %v648, %v649
        %v651 = vsel %vm287, %v583, 0.0
        %v652 = vrot.slane %v651, 4
        %v653 = vadd.f32 %v651, %v652
        %v654 = vrot.slane %v653, 2
        %v655 = vadd.f32 %v653, %v654
        %v656 = vrot.slane %v655, 1
        %v657 = vadd.f32 %v655, %v656
        %v658 = vsel %vm287, %v584, 0.0
        %v659 = vrot.slane %v658, 4
        %v660 = vadd.f32 %v658, %v659
        %v661 = vrot.slane %v660, 2
        %v662 = vadd.f32 %v660, %v661
        %v663 = vrot.slane %v662, 1
        %v664 = vadd.f32 %v662, %v663
        %v665 = vsel %vm287, %v585, 0.0
        %v666 = vrot.slane %v665, 4
        %v667 = vadd.f32 %v665, %v666
        %v668 = vrot.slane %v667, 2
        %v669 = vadd.f32 %v667, %v668
        %v670 = vrot.slane %v669, 1
        %v671 = vadd.f32 %v669, %v670
        %v672 = vsel %vm287, %v586, 0.0
        %v673 = vrot.slane %v672, 4
        %v674 = vadd.f32 %v672, %v673
        %v675 = vrot.slane %v674, 2
        %v676 = vadd.f32 %v674, %v675
        %v677 = vrot.slane %v676, 1
        %v678 = vadd.f32 %v676, %v677
        %v679 = vsel %vm287, %v587, 0.0
        %v680 = vrot.slane %v679, 4
        %v681 = vadd.f32 %v679, %v680
        %v682 = vrot.slane %v681, 2
        %v683 = vadd.f32 %v681, %v682
        %v684 = vrot.slane %v683, 1
        %v685 = vadd.f32 %v683, %v684
        %v686 = vsel %vm287, %v588, 0.0
        %v687 = vrot.slane %v686, 4
        %v688 = vadd.f32 %v686, %v687
        %v689 = vrot.slane %v688, 2
        %v690 = vadd.f32 %v688, %v689
        %v691 = vrot.slane %v690, 1
        %v692 = vadd.f32 %v690, %v691
        %v693 = vsel %vm287, %v589, 0.0
        %v694 = vrot.slane %v693, 4
        %v695 = vadd.f32 %v693, %v694
        %v696 = vrot.slane %v695, 2
        %v697 = vadd.f32 %v695, %v696
        %v698 = vrot.slane %v697, 1
        %v699 = vadd.f32 %v697, %v698
        %v700 = vsel %vm287, %v590, 0.0
        %v701 = vrot.slane %v700, 4
        %v702 = vadd.f32 %v700, %v701
        %v703 = vrot.slane %v702, 2
        %v704 = vadd.f32 %v702, %v703
        %v705 = vrot.slane %v704, 1
        %v706 = vadd.f32 %v704, %v705
        %v707 = vsel %vm287, %v591, 0.0
        %v708 = vrot.slane %v707, 4
        %v709 = vadd.f32 %v707, %v708
        %v710 = vrot.slane %v709, 2
        %v711 = vadd.f32 %v709, %v710
        %v712 = vrot.slane %v711, 1
        %v713 = vadd.f32 %v711, %v712
        %v714 = vsel %vm287, %v592, 0.0
        %v715 = vrot.slane %v714, 4
        %v716 = vadd.f32 %v714, %v715
        %v717 = vrot.slane %v716, 2
        %v718 = vadd.f32 %v716, %v717
        %v719 = vrot.slane %v718, 1
        %v720 = vadd.f32 %v718, %v719
        %v721 = vsel %vm287, %v593, 0.0
        %v722 = vrot.slane %v721, 4
        %v723 = vadd.f32 %v721, %v722
        %v724 = vrot.slane %v723, 2
        %v725 = vadd.f32 %v723, %v724
        %v726 = vrot.slane %v725, 1
        %v727 = vadd.f32 %v725, %v726
        %v728 = vsel %vm287, %v594, 0.0
        %v729 = vrot.slane %v728, 4
        %v730 = vadd.f32 %v728, %v729
        %v731 = vrot.slane %v730, 2
        %v732 = vadd.f32 %v730, %v731
        %v733 = vrot.slane %v732, 1
        %v734 = vadd.f32 %v732, %v733
        %v735 = vsel %vm287, %v595, 0.0
        %v736 = vrot.slane %v735, 4
        %v737 = vadd.f32 %v735, %v736
        %v738 = vrot.slane %v737, 2
        %v739 = vadd.f32 %v737, %v738
        %v740 = vrot.slane %v739, 1
        %v741 = vadd.f32 %v739, %v740
        %v742 = vsel %vm287, %v596, 0.0
        %v743 = vrot.slane %v742, 4
        %v744 = vadd.f32 %v742, %v743
        %v745 = vrot.slane %v744, 2
        %v746 = vadd.f32 %v744, %v745
        %v747 = vrot.slane %v746, 1
        %v748 = vadd.f32 %v746, %v747
        %v749 = vsel %vm287, %v597, 0.0
        %v750 = vrot.slane %v749, 4
        %v751 = vadd.f32 %v749, %v750
        %v752 = vrot.slane %v751, 2
        %v753 = vadd.f32 %v751, %v752
        %v754 = vrot.slane %v753, 1
        %v755 = vadd.f32 %v753, %v754
        %v756 = vsel %vm287, %v598, 0.0
        %v757 = vrot.slane %v756, 4
        %v758 = vadd.f32 %v756, %v757
        %v759 = vrot.slane %v758, 2
        %v760 = vadd.f32 %v758, %v759
        %v761 = vrot.slane %v760, 1
        %v762 = vadd.f32 %v760, %v761
        %v763 = vsel %vm287, %v599, 0.0
        %v764 = vrot.slane %v763, 4
        %v765 = vadd.f32 %v763, %v764
        %v766 = vrot.slane %v765, 2
        %v767 = vadd.f32 %v765, %v766
        %v768 = vrot.slane %v767, 1
        %v769 = vadd.f32 %v767, %v768
        %v770 = vsel %vm287, %v600, 0.0
        %v771 = vrot.slane %v770, 4
        %v772 = vadd.f32 %v770, %v771
        %v773 = vrot.slane %v772, 2
        %v774 = vadd.f32 %v772, %v773
        %v775 = vrot.slane %v774, 1
        %v776 = vadd.f32 %v774, %v775
        %v777 = vsel %vm287, %v601, 0.0
        %v778 = vrot.slane %v777, 4
        %v779 = vadd.f32 %v777, %v778
        %v780 = vrot.slane %v779, 2
        %v781 = vadd.f32 %v779, %v780
        %v782 = vrot.slane %v781, 1
        %v783 = vadd.f32 %v781, %v782
        %v784 = vsel %vm287, %v602, 0.0
        %v785 = vrot.slane %v784, 4
        %v786 = vadd.f32 %v784, %v785
        %v787 = vrot.slane %v786, 2
        %v788 = vadd.f32 %v786, %v787
        %v789 = vrot.slane %v788, 1
        %v790 = vadd.f32 %v788, %v789
        %v791 = vsel %vm287, %v603, 0.0
        %v792 = vrot.slane %v791, 4
        %v793 = vadd.f32 %v791, %v792
        %v794 = vrot.slane %v793, 2
        %v795 = vadd.f32 %v793, %v794
        %v796 = vrot.slane %v795, 1
        %v797 = vadd.f32 %v795, %v796
        %v798 = vsel %vm287, %v604, 0.0
        %v799 = vrot.slane %v798, 4
        %v800 = vadd.f32 %v798, %v799
        %v801 = vrot.slane %v800, 2
        %v802 = vadd.f32 %v800, %v801
        %v803 = vrot.slane %v802, 1
        %v804 = vadd.f32 %v802, %v803
        %v805 = vsel %vm287, %v605, 0.0
        %v806 = vrot.slane %v805, 4
        %v807 = vadd.f32 %v805, %v806
        %v808 = vrot.slane %v807, 2
        %v809 = vadd.f32 %v807, %v808
        %v810 = vrot.slane %v809, 1
        %v811 = vadd.f32 %v809, %v810
        %v812 = vsel %vm287, %v606, 0.0
        %v813 = vrot.slane %v812, 4
        %v814 = vadd.f32 %v812, %v813
        %v815 = vrot.slane %v814, 2
        %v816 = vadd.f32 %v814, %v815
        %v817 = vrot.slane %v816, 1
        %v818 = vadd.f32 %v816, %v817
        %v819 = vsel %vm287, %v607, 0.0
        %v820 = vrot.slane %v819, 4
        %v821 = vadd.f32 %v819, %v820
        %v822 = vrot.slane %v821, 2
        %v823 = vadd.f32 %v821, %v822
        %v824 = vrot.slane %v823, 1
        %v825 = vadd.f32 %v823, %v824
        %v826 = vsel %vm287, %v608, 0.0
        %v827 = vrot.slane %v826, 4
        %v828 = vadd.f32 %v826, %v827
        %v829 = vrot.slane %v828, 2
        %v830 = vadd.f32 %v828, %v829
        %v831 = vrot.slane %v830, 1
        %v832 = vadd.f32 %v830, %v831
        %v833 = vmul.f32 %v615, %v512
        %v834 = vmul.f32 %v622, %v512
        %v835 = vmul.f32 %v629, %v512
        %v836 = vmul.f32 %v636, %v512
        %v837 = vmul.f32 %v643, %v512
        %v838 = vmul.f32 %v650, %v512
        %v839 = vmul.f32 %v657, %v512
        %v840 = vmul.f32 %v664, %v512
        %v841 = vmul.f32 %v671, %v512
        %v842 = vmul.f32 %v678, %v512
        %v843 = vmul.f32 %v685, %v512
        %v844 = vmul.f32 %v692, %v512
        %v845 = vmul.f32 %v699, %v512
        %v846 = vmul.f32 %v706, %v512
        %v847 = vmul.f32 %v713, %v512
        %v848 = vmul.f32 %v720, %v512
        %v849 = vmul.f32 %v727, %v512
        %v850 = vmul.f32 %v734, %v512
        %v851 = vmul.f32 %v741, %v512
        %v852 = vmul.f32 %v748, %v512
        %v853 = vmul.f32 %v755, %v512
        %v854 = vmul.f32 %v762, %v512
        %v855 = vmul.f32 %v769, %v512
        %v856 = vmul.f32 %v776, %v512
        %v857 = vmul.f32 %v783, %v512
        %v858 = vmul.f32 %v790, %v512
        %v859 = vmul.f32 %v797, %v512
        %v860 = vmul.f32 %v804, %v512
        %v861 = vmul.f32 %v811, %v512
        %v862 = vmul.f32 %v818, %v512
        %v863 = vmul.f32 %v825, %v512
        %v864 = vmul.f32 %v832, %v512
        %v865 = vadd.f32 %v833, 1e-05
        %v866 = vadd.f32 %v834, 1e-05
        %v867 = vadd.f32 %v835, 1e-05
        %v868 = vadd.f32 %v836, 1e-05
        %v869 = vadd.f32 %v837, 1e-05
        %v870 = vadd.f32 %v838, 1e-05
        %v871 = vadd.f32 %v839, 1e-05
        %v872 = vadd.f32 %v840, 1e-05
        %v873 = vadd.f32 %v841, 1e-05
        %v874 = vadd.f32 %v842, 1e-05
        %v875 = vadd.f32 %v843, 1e-05
        %v876 = vadd.f32 %v844, 1e-05
        %v877 = vadd.f32 %v845, 1e-05
        %v878 = vadd.f32 %v846, 1e-05
        %v879 = vadd.f32 %v847, 1e-05
        %v880 = vadd.f32 %v848, 1e-05
        %v881 = vadd.f32 %v849, 1e-05
        %v882 = vadd.f32 %v850, 1e-05
        %v883 = vadd.f32 %v851, 1e-05
        %v884 = vadd.f32 %v852, 1e-05
        %v885 = vadd.f32 %v853, 1e-05
        %v886 = vadd.f32 %v854, 1e-05
        %v887 = vadd.f32 %v855, 1e-05
        %v888 = vadd.f32 %v856, 1e-05
        %v889 = vadd.f32 %v857, 1e-05
        %v890 = vadd.f32 %v858, 1e-05
        %v891 = vadd.f32 %v859, 1e-05
        %v892 = vadd.f32 %v860, 1e-05
        %v893 = vadd.f32 %v861, 1e-05
        %v894 = vadd.f32 %v862, 1e-05
        %v895 = vadd.f32 %v863, 1e-05
        %v896 = vadd.f32 %v864, 1e-05
        %v897 = vrsqrt.pop %v865
        %v898 = vrsqrt.pop %v866
        %v899 = vrsqrt.pop %v867
        %v900 = vrsqrt.pop %v868
        %v901 = vrsqrt.pop %v869
        %v902 = vrsqrt.pop %v870
        %v903 = vrsqrt.pop %v871
        %v904 = vrsqrt.pop %v872
        %v905 = vrsqrt.pop %v873
        %v906 = vrsqrt.pop %v874
        %v907 = vrsqrt.pop %v875
        %v908 = vrsqrt.pop %v876
        %v909 = vrsqrt.pop %v877
        %v910 = vrsqrt.pop %v878
        %v911 = vrsqrt.pop %v879
        %v912 = vrsqrt.pop %v880
        %v913 = vrsqrt.pop %v881
        %v914 = vrsqrt.pop %v882
        %v915 = vrsqrt.pop %v883
        %v916 = vrsqrt.pop %v884
        %v917 = vrsqrt.pop %v885
        %v918 = vrsqrt.pop %v886
        %v919 = vrsqrt.pop %v887
        %v920 = vrsqrt.pop %v888
        %v921 = vrsqrt.pop %v889
        %v922 = vrsqrt.pop %v890
        %v923 = vrsqrt.pop %v891
        %v924 = vrsqrt.pop %v892
        %v925 = vrsqrt.pop %v893
        %v926 = vrsqrt.pop %v894
        %v927 = vrsqrt.pop %v895
        %v928 = vrsqrt.pop %v896
        %v929 = vmul.f32 %v545, %v897
        %v930 = vmul.f32 %v546, %v898
        %v931 = vmul.f32 %v547, %v899
        %v932 = vmul.f32 %v548, %v900
        %v933 = vmul.f32 %v549, %v901
        %v934 = vmul.f32 %v550, %v902
        %v935 = vmul.f32 %v551, %v903
        %v936 = vmul.f32 %v552, %v904
        %v937 = vmul.f32 %v553, %v905
        %v938 = vmul.f32 %v554, %v906
        %v939 = vmul.f32 %v555, %v907
        %v940 = vmul.f32 %v556, %v908
        %v941 = vmul.f32 %v557, %v909
        %v942 = vmul.f32 %v558, %v910
        %v943 = vmul.f32 %v559, %v911
        %v944 = vmul.f32 %v560, %v912
        %v945 = vmul.f32 %v561, %v913
        %v946 = vmul.f32 %v562, %v914
        %v947 = vmul.f32 %v563, %v915
        %v948 = vmul.f32 %v564, %v916
        %v949 = vmul.f32 %v565, %v917
        %v950 = vmul.f32 %v566, %v918
        %v951 = vmul.f32 %v567, %v919
        %v952 = vmul.f32 %v568, %v920
        %v953 = vmul.f32 %v569, %v921
        %v954 = vmul.f32 %v570, %v922
        %v955 = vmul.f32 %v571, %v923
        %v956 = vmul.f32 %v572, %v924
        %v957 = vmul.f32 %v573, %v925
        %v958 = vmul.f32 %v574, %v926
        %v959 = vmul.f32 %v575, %v927
        %v960 = vmul.f32 %v576, %v928
        %v961 = vpack.c.bf16 %v930, %v929
        %v962 = vpack.c.bf16 %v932, %v931
        %v963 = vpack.c.bf16 %v934, %v933
        %v964 = vpack.c.bf16 %v936, %v935
        %v965 = vpack.c.bf16 %v938, %v937
        %v966 = vpack.c.bf16 %v940, %v939
        %v967 = vpack.c.bf16 %v942, %v941
        %v968 = vpack.c.bf16 %v944, %v943
        %v969 = vpack.c.bf16 %v946, %v945
        %v970 = vpack.c.bf16 %v948, %v947
        %v971 = vpack.c.bf16 %v950, %v949
        %v972 = vpack.c.bf16 %v952, %v951
        %v973 = vpack.c.bf16 %v954, %v953
        %v974 = vpack.c.bf16 %v956, %v955
        %v975 = vpack.c.bf16 %v958, %v957
        %v976 = vpack.c.bf16 %v960, %v959
        %v977 = vld [vmem:[%s1] sm:$0xf]
        %v978 = vld [vmem:[%s1 + $0x4] sm:$0xf]
        %v979 = vld [vmem:[%s1 + $0x8] sm:$0xf]
        %v980 = vld [vmem:[%s1 + $0xc] sm:$0xf]
        %v981 = vlaneseq
        %v982 = vshrl.u32 %v981, 7
        %v983 = vsub.s32 0, %v982
        %v984 = vrot.slane %v254, %v983
        %v989 = vunpack.c.l.b16 %v977
        %v990 = vunpack.c.l.b16 %v978
        %v991 = vunpack.c.l.b16 %v979
        %v992 = vunpack.c.l.b16 %v980
        %v993 = vpack.c.b16 %v990, %v989
        %v994 = vpack.c.b16 %v992, %v991
        %v998 = vsel %vm287, %v961, 0
        %v1001 = vsel %vm287, %v962, 0
        %v1004 = vsel %vm287, %v963, 0
        %v1007 = vsel %vm287, %v964, 0
        %v1010 = vsel %vm287, %v965, 0
        %v1013 = vsel %vm287, %v966, 0
        %v1016 = vsel %vm287, %v967, 0
        %v1019 = vsel %vm287, %v968, 0
        %v1022 = vsel %vm287, %v969, 0
        %v1025 = vsel %vm287, %v970, 0
        %v1028 = vsel %vm287, %v971, 0
        %v1031 = vsel %vm287, %v972, 0
        %v1034 = vsel %vm287, %v973, 0
        %v1037 = vsel %vm287, %v974, 0
        %v1040 = vsel %vm287, %v975, 0
        %v1043 = vsel %vm287, %v976, 0
        %1045 = vmatprep.subr.bf16.mxu0 0
        %1046 = vmatpush1.bf16.msra.mxu0 %v993
        %1047 = vmatprep.subr.bf16.mxu0 0
        %1048 = vmatpush1.bf16.msra.mxu0 %v994
        %1049 = vmatprep.subr.bf16.mxu0 0
        %1050 = vmatpush1.bf16.msra.mxu0 0
        %1051 = vmatprep.subr.bf16.mxu0 0
        %1052 = vmatpush1.bf16.msra.mxu0 0
        %1053 = vmatprep.subr.bf16.mxu0 0
        %1054 = vmatpush1.bf16.msra.mxu0 0
        %1055 = vmatprep.subr.bf16.mxu0 0
        %1056 = vmatpush1.bf16.msra.mxu0 0
        %1057 = vmatprep.subr.bf16.mxu0 0
        %1058 = vmatpush1.bf16.msra.mxu0 0
        %1059 = vmatprep.subr.bf16.mxu0 0
        %1060 = vmatpush1.bf16.msra.mxu0 0
        %1061 = vmatprep.subr.bf16.mxu0 0
        %1062 = vmatpush1.bf16.msra.mxu0 0
        %1063 = vmatprep.subr.bf16.mxu0 0
        %1064 = vmatpush1.bf16.msra.mxu0 0
        %1065 = vmatprep.subr.bf16.mxu0 0
        %1066 = vmatpush1.bf16.msra.mxu0 0
        %1067 = vmatprep.subr.bf16.mxu0 0
        %1068 = vmatpush1.bf16.msra.mxu0 0
        %1069 = vmatprep.subr.bf16.mxu0 0
        %1070 = vmatpush1.bf16.msra.mxu0 0
        %1071 = vmatprep.subr.bf16.mxu0 0
        %1072 = vmatpush1.bf16.msra.mxu0 0
        %1073 = vmatprep.subr.bf16.mxu0 0
        %1074 = vmatpush1.bf16.msra.mxu0 0
        %1075 = vmatprep.subr.bf16.mxu0 0
        %1076 = vmatpush1.bf16.msra.mxu0 0
        %1077 = vmatprep.mubr.bf16.mxu0 0
        %1078 = vmatmul.mubr.bf16.gmra.mrb[0].mxu0 %v998
        %v1079 = vpop.f32.mrb[0].mxu0
        %v1080 = vadd.f32 %v984, %v1079
        %v1081 = vpop.f32.mrb[0].mxu0
        %v1082 = vpop.f32.mrb[0].mxu0
        %v1083 = vadd.f32 %v984, %v1082
        %v1084 = vpop.f32.mrb[0].mxu0
        %1085 = vmatprep.mubr.bf16.mxu0 0
        %1086 = vmatmul.mubr.bf16.gmra.mrb[0].mxu0 %v1001
        %v1087 = vpop.f32.mrb[0].mxu0
        %v1088 = vadd.f32 %v984, %v1087
        %v1089 = vpop.f32.mrb[0].mxu0
        %v1090 = vpop.f32.mrb[0].mxu0
        %v1091 = vadd.f32 %v984, %v1090
        %v1092 = vpop.f32.mrb[0].mxu0
        %1093 = vmatprep.mubr.bf16.mxu0 0
        %1094 = vmatmul.mubr.bf16.gmra.mrb[0].mxu0 %v1004
        %v1095 = vpop.f32.mrb[0].mxu0
        %v1096 = vadd.f32 %v984, %v1095
        %v1097 = vpop.f32.mrb[0].mxu0
        %v1098 = vpop.f32.mrb[0].mxu0
        %v1099 = vadd.f32 %v984, %v1098
        %v1100 = vpop.f32.mrb[0].mxu0
        %1101 = vmatprep.mubr.bf16.mxu0 0
        %1102 = vmatmul.mubr.bf16.gmra.mrb[0].mxu0 %v1007
        %v1103 = vpop.f32.mrb[0].mxu0
        %v1104 = vadd.f32 %v984, %v1103
        %v1105 = vpop.f32.mrb[0].mxu0
        %v1106 = vpop.f32.mrb[0].mxu0
        %v1107 = vadd.f32 %v984, %v1106
        %v1108 = vpop.f32.mrb[0].mxu0
        %1109 = vmatprep.mubr.bf16.mxu0 0
        %1110 = vmatmul.mubr.bf16.gmra.mrb[0].mxu0 %v1010
        %v1111 = vpop.f32.mrb[0].mxu0
        %v1112 = vadd.f32 %v984, %v1111
        %v1113 = vpop.f32.mrb[0].mxu0
        %v1114 = vpop.f32.mrb[0].mxu0
        %v1115 = vadd.f32 %v984, %v1114
        %v1116 = vpop.f32.mrb[0].mxu0
        %1117 = vmatprep.mubr.bf16.mxu0 0
        %1118 = vmatmul.mubr.bf16.gmra.mrb[0].mxu0 %v1013
        %v1119 = vpop.f32.mrb[0].mxu0
        %v1120 = vadd.f32 %v984, %v1119
        %v1121 = vpop.f32.mrb[0].mxu0
        %v1122 = vpop.f32.mrb[0].mxu0
        %v1123 = vadd.f32 %v984, %v1122
        %v1124 = vpop.f32.mrb[0].mxu0
        %1125 = vmatprep.mubr.bf16.mxu0 0
        %1126 = vmatmul.mubr.bf16.gmra.mrb[0].mxu0 %v1016
        %v1127 = vpop.f32.mrb[0].mxu0
        %v1128 = vadd.f32 %v984, %v1127
        %v1129 = vpop.f32.mrb[0].mxu0
        %v1130 = vpop.f32.mrb[0].mxu0
        %v1131 = vadd.f32 %v984, %v1130
        %v1132 = vpop.f32.mrb[0].mxu0
        %1133 = vmatprep.mubr.bf16.mxu0 0
        %1134 = vmatmul.mubr.bf16.gmra.mrb[0].mxu0 %v1019
        %v1135 = vpop.f32.mrb[0].mxu0
        %v1136 = vadd.f32 %v984, %v1135
        %v1137 = vpop.f32.mrb[0].mxu0
        %v1138 = vpop.f32.mrb[0].mxu0
        %v1139 = vadd.f32 %v984, %v1138
        %v1140 = vpop.f32.mrb[0].mxu0
        %1141 = vmatprep.mubr.bf16.mxu0 0
        %1142 = vmatmul.mubr.bf16.gmra.mrb[0].mxu0 %v1022
        %v1143 = vpop.f32.mrb[0].mxu0
        %v1144 = vadd.f32 %v984, %v1143
        %v1145 = vpop.f32.mrb[0].mxu0
        %v1146 = vpop.f32.mrb[0].mxu0
        %v1147 = vadd.f32 %v984, %v1146
        %v1148 = vpop.f32.mrb[0].mxu0
        %1149 = vmatprep.mubr.bf16.mxu0 0
        %1150 = vmatmul.mubr.bf16.gmra.mrb[0].mxu0 %v1025
        %v1151 = vpop.f32.mrb[0].mxu0
        %v1152 = vadd.f32 %v984, %v1151
        %v1153 = vpop.f32.mrb[0].mxu0
        %v1154 = vpop.f32.mrb[0].mxu0
        %v1155 = vadd.f32 %v984, %v1154
        %v1156 = vpop.f32.mrb[0].mxu0
        %1157 = vmatprep.mubr.bf16.mxu0 0
        %1158 = vmatmul.mubr.bf16.gmra.mrb[0].mxu0 %v1028
        %v1159 = vpop.f32.mrb[0].mxu0
        %v1160 = vadd.f32 %v984, %v1159
        %v1161 = vpop.f32.mrb[0].mxu0
        %v1162 = vpop.f32.mrb[0].mxu0
        %v1163 = vadd.f32 %v984, %v1162
        %v1164 = vpop.f32.mrb[0].mxu0
        %1165 = vmatprep.mubr.bf16.mxu0 0
        %1166 = vmatmul.mubr.bf16.gmra.mrb[0].mxu0 %v1031
        %v1167 = vpop.f32.mrb[0].mxu0
        %v1168 = vadd.f32 %v984, %v1167
        %v1169 = vpop.f32.mrb[0].mxu0
        %v1170 = vpop.f32.mrb[0].mxu0
        %v1171 = vadd.f32 %v984, %v1170
        %v1172 = vpop.f32.mrb[0].mxu0
        %1173 = vmatprep.mubr.bf16.mxu0 0
        %1174 = vmatmul.mubr.bf16.gmra.mrb[0].mxu0 %v1034
        %v1175 = vpop.f32.mrb[0].mxu0
        %v1176 = vadd.f32 %v984, %v1175
        %v1177 = vpop.f32.mrb[0].mxu0
        %v1178 = vpop.f32.mrb[0].mxu0
        %v1179 = vadd.f32 %v984, %v1178
        %v1180 = vpop.f32.mrb[0].mxu0
        %1181 = vmatprep.mubr.bf16.mxu0 0
        %1182 = vmatmul.mubr.bf16.gmra.mrb[0].mxu0 %v1037
        %v1183 = vpop.f32.mrb[0].mxu0
        %v1184 = vadd.f32 %v984, %v1183
        %v1185 = vpop.f32.mrb[0].mxu0
        %v1186 = vpop.f32.mrb[0].mxu0
        %v1187 = vadd.f32 %v984, %v1186
        %v1188 = vpop.f32.mrb[0].mxu0
        %1189 = vmatprep.mubr.bf16.mxu0 0
        %1190 = vmatmul.mubr.bf16.gmra.mrb[0].mxu0 %v1040
        %v1191 = vpop.f32.mrb[0].mxu0
        %v1192 = vadd.f32 %v984, %v1191
        %v1193 = vpop.f32.mrb[0].mxu0
        %v1194 = vpop.f32.mrb[0].mxu0
        %v1195 = vadd.f32 %v984, %v1194
        %v1196 = vpop.f32.mrb[0].mxu0
        %1197 = vmatprep.mubr.bf16.mxu0 0
        %1198 = vmatmul.mubr.bf16.gmra.mrb[0].mxu0 %v1043
        %v1199 = vpop.f32.mrb[0].mxu0
        %v1200 = vadd.f32 %v984, %v1199
        %v1201 = vpop.f32.mrb[0].mxu0
        %v1202 = vpop.f32.mrb[0].mxu0
        %v1203 = vadd.f32 %v984, %v1202
        %v1204 = vpop.f32.mrb[0].mxu0
        %1205 = vdwg.mxu0
        %v1206 = vmax.f32 %v1080, 0.0
        %v1207 = vmax.f32 %v1083, 0.0
        %v1208 = vmax.f32 %v1088, 0.0
        %v1209 = vmax.f32 %v1091, 0.0
        %v1210 = vmax.f32 %v1096, 0.0
        %v1211 = vmax.f32 %v1099, 0.0
        %v1212 = vmax.f32 %v1104, 0.0
        %v1213 = vmax.f32 %v1107, 0.0
        %v1214 = vmax.f32 %v1112, 0.0
        %v1215 = vmax.f32 %v1115, 0.0
        %v1216 = vmax.f32 %v1120, 0.0
        %v1217 = vmax.f32 %v1123, 0.0
        %v1218 = vmax.f32 %v1128, 0.0
        %v1219 = vmax.f32 %v1131, 0.0
        %v1220 = vmax.f32 %v1136, 0.0
        %v1221 = vmax.f32 %v1139, 0.0
        %v1222 = vmax.f32 %v1144, 0.0
        %v1223 = vmax.f32 %v1147, 0.0
        %v1224 = vmax.f32 %v1152, 0.0
        %v1225 = vmax.f32 %v1155, 0.0
        %v1226 = vmax.f32 %v1160, 0.0
        %v1227 = vmax.f32 %v1163, 0.0
        %v1228 = vmax.f32 %v1168, 0.0
        %v1229 = vmax.f32 %v1171, 0.0
        %v1230 = vmax.f32 %v1176, 0.0
        %v1231 = vmax.f32 %v1179, 0.0
        %v1232 = vmax.f32 %v1184, 0.0
        %v1233 = vmax.f32 %v1187, 0.0
        %v1234 = vmax.f32 %v1192, 0.0
        %v1235 = vmax.f32 %v1195, 0.0
        %v1236 = vmax.f32 %v1200, 0.0
        %v1237 = vmax.f32 %v1203, 0.0
        %v1238 = vrot.slane %v1206, 4
        %v1239 = vadd.f32 %v1206, %v1238
        %v1240 = vrot.slane %v1239, 2
        %v1241 = vadd.f32 %v1239, %v1240
        %v1242 = vrot.slane %v1241, 1
        %v1243 = vadd.f32 %v1241, %v1242
        %v1244 = vrot.slane %v1207, 4
        %v1245 = vadd.f32 %v1207, %v1244
        %v1246 = vrot.slane %v1245, 2
        %v1247 = vadd.f32 %v1245, %v1246
        %v1248 = vrot.slane %v1247, 1
        %v1249 = vadd.f32 %v1247, %v1248
        %v1250 = vrot.slane %v1208, 4
        %v1251 = vadd.f32 %v1208, %v1250
        %v1252 = vrot.slane %v1251, 2
        %v1253 = vadd.f32 %v1251, %v1252
        %v1254 = vrot.slane %v1253, 1
        %v1255 = vadd.f32 %v1253, %v1254
        %v1256 = vrot.slane %v1209, 4
        %v1257 = vadd.f32 %v1209, %v1256
        %v1258 = vrot.slane %v1257, 2
        %v1259 = vadd.f32 %v1257, %v1258
        %v1260 = vrot.slane %v1259, 1
        %v1261 = vadd.f32 %v1259, %v1260
        %v1262 = vrot.slane %v1210, 4
        %v1263 = vadd.f32 %v1210, %v1262
        %v1264 = vrot.slane %v1263, 2
        %v1265 = vadd.f32 %v1263, %v1264
        %v1266 = vrot.slane %v1265, 1
        %v1267 = vadd.f32 %v1265, %v1266
        %v1268 = vrot.slane %v1211, 4
        %v1269 = vadd.f32 %v1211, %v1268
        %v1270 = vrot.slane %v1269, 2
        %v1271 = vadd.f32 %v1269, %v1270
        %v1272 = vrot.slane %v1271, 1
        %v1273 = vadd.f32 %v1271, %v1272
        %v1274 = vrot.slane %v1212, 4
        %v1275 = vadd.f32 %v1212, %v1274
        %v1276 = vrot.slane %v1275, 2
        %v1277 = vadd.f32 %v1275, %v1276
        %v1278 = vrot.slane %v1277, 1
        %v1279 = vadd.f32 %v1277, %v1278
        %v1280 = vrot.slane %v1213, 4
        %v1281 = vadd.f32 %v1213, %v1280
        %v1282 = vrot.slane %v1281, 2
        %v1283 = vadd.f32 %v1281, %v1282
        %v1284 = vrot.slane %v1283, 1
        %v1285 = vadd.f32 %v1283, %v1284
        %v1286 = vrot.slane %v1214, 4
        %v1287 = vadd.f32 %v1214, %v1286
        %v1288 = vrot.slane %v1287, 2
        %v1289 = vadd.f32 %v1287, %v1288
        %v1290 = vrot.slane %v1289, 1
        %v1291 = vadd.f32 %v1289, %v1290
        %v1292 = vrot.slane %v1215, 4
        %v1293 = vadd.f32 %v1215, %v1292
        %v1294 = vrot.slane %v1293, 2
        %v1295 = vadd.f32 %v1293, %v1294
        %v1296 = vrot.slane %v1295, 1
        %v1297 = vadd.f32 %v1295, %v1296
        %v1298 = vrot.slane %v1216, 4
        %v1299 = vadd.f32 %v1216, %v1298
        %v1300 = vrot.slane %v1299, 2
        %v1301 = vadd.f32 %v1299, %v1300
        %v1302 = vrot.slane %v1301, 1
        %v1303 = vadd.f32 %v1301, %v1302
        %v1304 = vrot.slane %v1217, 4
        %v1305 = vadd.f32 %v1217, %v1304
        %v1306 = vrot.slane %v1305, 2
        %v1307 = vadd.f32 %v1305, %v1306
        %v1308 = vrot.slane %v1307, 1
        %v1309 = vadd.f32 %v1307, %v1308
        %v1310 = vrot.slane %v1218, 4
        %v1311 = vadd.f32 %v1218, %v1310
        %v1312 = vrot.slane %v1311, 2
        %v1313 = vadd.f32 %v1311, %v1312
        %v1314 = vrot.slane %v1313, 1
        %v1315 = vadd.f32 %v1313, %v1314
        %v1316 = vrot.slane %v1219, 4
        %v1317 = vadd.f32 %v1219, %v1316
        %v1318 = vrot.slane %v1317, 2
        %v1319 = vadd.f32 %v1317, %v1318
        %v1320 = vrot.slane %v1319, 1
        %v1321 = vadd.f32 %v1319, %v1320
        %v1322 = vrot.slane %v1220, 4
        %v1323 = vadd.f32 %v1220, %v1322
        %v1324 = vrot.slane %v1323, 2
        %v1325 = vadd.f32 %v1323, %v1324
        %v1326 = vrot.slane %v1325, 1
        %v1327 = vadd.f32 %v1325, %v1326
        %v1328 = vrot.slane %v1221, 4
        %v1329 = vadd.f32 %v1221, %v1328
        %v1330 = vrot.slane %v1329, 2
        %v1331 = vadd.f32 %v1329, %v1330
        %v1332 = vrot.slane %v1331, 1
        %v1333 = vadd.f32 %v1331, %v1332
        %v1334 = vrot.slane %v1222, 4
        %v1335 = vadd.f32 %v1222, %v1334
        %v1336 = vrot.slane %v1335, 2
        %v1337 = vadd.f32 %v1335, %v1336
        %v1338 = vrot.slane %v1337, 1
        %v1339 = vadd.f32 %v1337, %v1338
        %v1340 = vrot.slane %v1223, 4
        %v1341 = vadd.f32 %v1223, %v1340
        %v1342 = vrot.slane %v1341, 2
        %v1343 = vadd.f32 %v1341, %v1342
        %v1344 = vrot.slane %v1343, 1
        %v1345 = vadd.f32 %v1343, %v1344
        %v1346 = vrot.slane %v1224, 4
        %v1347 = vadd.f32 %v1224, %v1346
        %v1348 = vrot.slane %v1347, 2
        %v1349 = vadd.f32 %v1347, %v1348
        %v1350 = vrot.slane %v1349, 1
        %v1351 = vadd.f32 %v1349, %v1350
        %v1352 = vrot.slane %v1225, 4
        %v1353 = vadd.f32 %v1225, %v1352
        %v1354 = vrot.slane %v1353, 2
        %v1355 = vadd.f32 %v1353, %v1354
        %v1356 = vrot.slane %v1355, 1
        %v1357 = vadd.f32 %v1355, %v1356
        %v1358 = vrot.slane %v1226, 4
        %v1359 = vadd.f32 %v1226, %v1358
        %v1360 = vrot.slane %v1359, 2
        %v1361 = vadd.f32 %v1359, %v1360
        %v1362 = vrot.slane %v1361, 1
        %v1363 = vadd.f32 %v1361, %v1362
        %v1364 = vrot.slane %v1227, 4
        %v1365 = vadd.f32 %v1227, %v1364
        %v1366 = vrot.slane %v1365, 2
        %v1367 = vadd.f32 %v1365, %v1366
        %v1368 = vrot.slane %v1367, 1
        %v1369 = vadd.f32 %v1367, %v1368
        %v1370 = vrot.slane %v1228, 4
        %v1371 = vadd.f32 %v1228, %v1370
        %v1372 = vrot.slane %v1371, 2
        %v1373 = vadd.f32 %v1371, %v1372
        %v1374 = vrot.slane %v1373, 1
        %v1375 = vadd.f32 %v1373, %v1374
        %v1376 = vrot.slane %v1229, 4
        %v1377 = vadd.f32 %v1229, %v1376
        %v1378 = vrot.slane %v1377, 2
        %v1379 = vadd.f32 %v1377, %v1378
        %v1380 = vrot.slane %v1379, 1
        %v1381 = vadd.f32 %v1379, %v1380
        %v1382 = vrot.slane %v1230, 4
        %v1383 = vadd.f32 %v1230, %v1382
        %v1384 = vrot.slane %v1383, 2
        %v1385 = vadd.f32 %v1383, %v1384
        %v1386 = vrot.slane %v1385, 1
        %v1387 = vadd.f32 %v1385, %v1386
        %v1388 = vrot.slane %v1231, 4
        %v1389 = vadd.f32 %v1231, %v1388
        %v1390 = vrot.slane %v1389, 2
        %v1391 = vadd.f32 %v1389, %v1390
        %v1392 = vrot.slane %v1391, 1
        %v1393 = vadd.f32 %v1391, %v1392
        %v1394 = vrot.slane %v1232, 4
        %v1395 = vadd.f32 %v1232, %v1394
        %v1396 = vrot.slane %v1395, 2
        %v1397 = vadd.f32 %v1395, %v1396
        %v1398 = vrot.slane %v1397, 1
        %v1399 = vadd.f32 %v1397, %v1398
        %v1400 = vrot.slane %v1233, 4
        %v1401 = vadd.f32 %v1233, %v1400
        %v1402 = vrot.slane %v1401, 2
        %v1403 = vadd.f32 %v1401, %v1402
        %v1404 = vrot.slane %v1403, 1
        %v1405 = vadd.f32 %v1403, %v1404
        %v1406 = vrot.slane %v1234, 4
        %v1407 = vadd.f32 %v1234, %v1406
        %v1408 = vrot.slane %v1407, 2
        %v1409 = vadd.f32 %v1407, %v1408
        %v1410 = vrot.slane %v1409, 1
        %v1411 = vadd.f32 %v1409, %v1410
        %v1412 = vrot.slane %v1235, 4
        %v1413 = vadd.f32 %v1235, %v1412
        %v1414 = vrot.slane %v1413, 2
        %v1415 = vadd.f32 %v1413, %v1414
        %v1416 = vrot.slane %v1415, 1
        %v1417 = vadd.f32 %v1415, %v1416
        %v1418 = vrot.slane %v1236, 4
        %v1419 = vadd.f32 %v1236, %v1418
        %v1420 = vrot.slane %v1419, 2
        %v1421 = vadd.f32 %v1419, %v1420
        %v1422 = vrot.slane %v1421, 1
        %v1423 = vadd.f32 %v1421, %v1422
        %v1424 = vrot.slane %v1237, 4
        %v1425 = vadd.f32 %v1237, %v1424
        %v1426 = vrot.slane %v1425, 2
        %v1427 = vadd.f32 %v1425, %v1426
        %v1428 = vrot.slane %v1427, 1
        %v1429 = vadd.f32 %v1427, %v1428
        %v1430 = vmul.f32 %v1243, %v512
        %v1431 = vmul.f32 %v1249, %v512
        %v1432 = vmul.f32 %v1255, %v512
        %v1433 = vmul.f32 %v1261, %v512
        %v1434 = vmul.f32 %v1267, %v512
        %v1435 = vmul.f32 %v1273, %v512
        %v1436 = vmul.f32 %v1279, %v512
        %v1437 = vmul.f32 %v1285, %v512
        %v1438 = vmul.f32 %v1291, %v512
        %v1439 = vmul.f32 %v1297, %v512
        %v1440 = vmul.f32 %v1303, %v512
        %v1441 = vmul.f32 %v1309, %v512
        %v1442 = vmul.f32 %v1315, %v512
        %v1443 = vmul.f32 %v1321, %v512
        %v1444 = vmul.f32 %v1327, %v512
        %v1445 = vmul.f32 %v1333, %v512
        %v1446 = vmul.f32 %v1339, %v512
        %v1447 = vmul.f32 %v1345, %v512
        %v1448 = vmul.f32 %v1351, %v512
        %v1449 = vmul.f32 %v1357, %v512
        %v1450 = vmul.f32 %v1363, %v512
        %v1451 = vmul.f32 %v1369, %v512
        %v1452 = vmul.f32 %v1375, %v512
        %v1453 = vmul.f32 %v1381, %v512
        %v1454 = vmul.f32 %v1387, %v512
        %v1455 = vmul.f32 %v1393, %v512
        %v1456 = vmul.f32 %v1399, %v512
        %v1457 = vmul.f32 %v1405, %v512
        %v1458 = vmul.f32 %v1411, %v512
        %v1459 = vmul.f32 %v1417, %v512
        %v1460 = vmul.f32 %v1423, %v512
        %v1461 = vmul.f32 %v1429, %v512
        %v1462 = vsub.f32 %v1206, %v1430
        %v1463 = vsub.f32 %v1207, %v1431
        %v1464 = vsub.f32 %v1208, %v1432
        %v1465 = vsub.f32 %v1209, %v1433
        %v1466 = vsub.f32 %v1210, %v1434
        %v1467 = vsub.f32 %v1211, %v1435
        %v1468 = vsub.f32 %v1212, %v1436
        %v1469 = vsub.f32 %v1213, %v1437
        %v1470 = vsub.f32 %v1214, %v1438
        %v1471 = vsub.f32 %v1215, %v1439
        %v1472 = vsub.f32 %v1216, %v1440
        %v1473 = vsub.f32 %v1217, %v1441
        %v1474 = vsub.f32 %v1218, %v1442
        %v1475 = vsub.f32 %v1219, %v1443
        %v1476 = vsub.f32 %v1220, %v1444
        %v1477 = vsub.f32 %v1221, %v1445
        %v1478 = vsub.f32 %v1222, %v1446
        %v1479 = vsub.f32 %v1223, %v1447
        %v1480 = vsub.f32 %v1224, %v1448
        %v1481 = vsub.f32 %v1225, %v1449
        %v1482 = vsub.f32 %v1226, %v1450
        %v1483 = vsub.f32 %v1227, %v1451
        %v1484 = vsub.f32 %v1228, %v1452
        %v1485 = vsub.f32 %v1229, %v1453
        %v1486 = vsub.f32 %v1230, %v1454
        %v1487 = vsub.f32 %v1231, %v1455
        %v1488 = vsub.f32 %v1232, %v1456
        %v1489 = vsub.f32 %v1233, %v1457
        %v1490 = vsub.f32 %v1234, %v1458
        %v1491 = vsub.f32 %v1235, %v1459
        %v1492 = vsub.f32 %v1236, %v1460
        %v1493 = vsub.f32 %v1237, %v1461
        %v1494 = vmul.f32 %v1462, %v1462
        %v1495 = vmul.f32 %v1463, %v1463
        %v1496 = vmul.f32 %v1464, %v1464
        %v1497 = vmul.f32 %v1465, %v1465
        %v1498 = vmul.f32 %v1466, %v1466
        %v1499 = vmul.f32 %v1467, %v1467
        %v1500 = vmul.f32 %v1468, %v1468
        %v1501 = vmul.f32 %v1469, %v1469
        %v1502 = vmul.f32 %v1470, %v1470
        %v1503 = vmul.f32 %v1471, %v1471
        %v1504 = vmul.f32 %v1472, %v1472
        %v1505 = vmul.f32 %v1473, %v1473
        %v1506 = vmul.f32 %v1474, %v1474
        %v1507 = vmul.f32 %v1475, %v1475
        %v1508 = vmul.f32 %v1476, %v1476
        %v1509 = vmul.f32 %v1477, %v1477
        %v1510 = vmul.f32 %v1478, %v1478
        %v1511 = vmul.f32 %v1479, %v1479
        %v1512 = vmul.f32 %v1480, %v1480
        %v1513 = vmul.f32 %v1481, %v1481
        %v1514 = vmul.f32 %v1482, %v1482
        %v1515 = vmul.f32 %v1483, %v1483
        %v1516 = vmul.f32 %v1484, %v1484
        %v1517 = vmul.f32 %v1485, %v1485
        %v1518 = vmul.f32 %v1486, %v1486
        %v1519 = vmul.f32 %v1487, %v1487
        %v1520 = vmul.f32 %v1488, %v1488
        %v1521 = vmul.f32 %v1489, %v1489
        %v1522 = vmul.f32 %v1490, %v1490
        %v1523 = vmul.f32 %v1491, %v1491
        %v1524 = vmul.f32 %v1492, %v1492
        %v1525 = vmul.f32 %v1493, %v1493
        %v1526 = vrot.slane %v1494, 4
        %v1527 = vadd.f32 %v1494, %v1526
        %v1528 = vrot.slane %v1527, 2
        %v1529 = vadd.f32 %v1527, %v1528
        %v1530 = vrot.slane %v1529, 1
        %v1531 = vadd.f32 %v1529, %v1530
        %v1532 = vrot.slane %v1495, 4
        %v1533 = vadd.f32 %v1495, %v1532
        %v1534 = vrot.slane %v1533, 2
        %v1535 = vadd.f32 %v1533, %v1534
        %v1536 = vrot.slane %v1535, 1
        %v1537 = vadd.f32 %v1535, %v1536
        %v1538 = vrot.slane %v1496, 4
        %v1539 = vadd.f32 %v1496, %v1538
        %v1540 = vrot.slane %v1539, 2
        %v1541 = vadd.f32 %v1539, %v1540
        %v1542 = vrot.slane %v1541, 1
        %v1543 = vadd.f32 %v1541, %v1542
        %v1544 = vrot.slane %v1497, 4
        %v1545 = vadd.f32 %v1497, %v1544
        %v1546 = vrot.slane %v1545, 2
        %v1547 = vadd.f32 %v1545, %v1546
        %v1548 = vrot.slane %v1547, 1
        %v1549 = vadd.f32 %v1547, %v1548
        %v1550 = vrot.slane %v1498, 4
        %v1551 = vadd.f32 %v1498, %v1550
        %v1552 = vrot.slane %v1551, 2
        %v1553 = vadd.f32 %v1551, %v1552
        %v1554 = vrot.slane %v1553, 1
        %v1555 = vadd.f32 %v1553, %v1554
        %v1556 = vrot.slane %v1499, 4
        %v1557 = vadd.f32 %v1499, %v1556
        %v1558 = vrot.slane %v1557, 2
        %v1559 = vadd.f32 %v1557, %v1558
        %v1560 = vrot.slane %v1559, 1
        %v1561 = vadd.f32 %v1559, %v1560
        %v1562 = vrot.slane %v1500, 4
        %v1563 = vadd.f32 %v1500, %v1562
        %v1564 = vrot.slane %v1563, 2
        %v1565 = vadd.f32 %v1563, %v1564
        %v1566 = vrot.slane %v1565, 1
        %v1567 = vadd.f32 %v1565, %v1566
        %v1568 = vrot.slane %v1501, 4
        %v1569 = vadd.f32 %v1501, %v1568
        %v1570 = vrot.slane %v1569, 2
        %v1571 = vadd.f32 %v1569, %v1570
        %v1572 = vrot.slane %v1571, 1
        %v1573 = vadd.f32 %v1571, %v1572
        %v1574 = vrot.slane %v1502, 4
        %v1575 = vadd.f32 %v1502, %v1574
        %v1576 = vrot.slane %v1575, 2
        %v1577 = vadd.f32 %v1575, %v1576
        %v1578 = vrot.slane %v1577, 1
        %v1579 = vadd.f32 %v1577, %v1578
        %v1580 = vrot.slane %v1503, 4
        %v1581 = vadd.f32 %v1503, %v1580
        %v1582 = vrot.slane %v1581, 2
        %v1583 = vadd.f32 %v1581, %v1582
        %v1584 = vrot.slane %v1583, 1
        %v1585 = vadd.f32 %v1583, %v1584
        %v1586 = vrot.slane %v1504, 4
        %v1587 = vadd.f32 %v1504, %v1586
        %v1588 = vrot.slane %v1587, 2
        %v1589 = vadd.f32 %v1587, %v1588
        %v1590 = vrot.slane %v1589, 1
        %v1591 = vadd.f32 %v1589, %v1590
        %v1592 = vrot.slane %v1505, 4
        %v1593 = vadd.f32 %v1505, %v1592
        %v1594 = vrot.slane %v1593, 2
        %v1595 = vadd.f32 %v1593, %v1594
        %v1596 = vrot.slane %v1595, 1
        %v1597 = vadd.f32 %v1595, %v1596
        %v1598 = vrot.slane %v1506, 4
        %v1599 = vadd.f32 %v1506, %v1598
        %v1600 = vrot.slane %v1599, 2
        %v1601 = vadd.f32 %v1599, %v1600
        %v1602 = vrot.slane %v1601, 1
        %v1603 = vadd.f32 %v1601, %v1602
        %v1604 = vrot.slane %v1507, 4
        %v1605 = vadd.f32 %v1507, %v1604
        %v1606 = vrot.slane %v1605, 2
        %v1607 = vadd.f32 %v1605, %v1606
        %v1608 = vrot.slane %v1607, 1
        %v1609 = vadd.f32 %v1607, %v1608
        %v1610 = vrot.slane %v1508, 4
        %v1611 = vadd.f32 %v1508, %v1610
        %v1612 = vrot.slane %v1611, 2
        %v1613 = vadd.f32 %v1611, %v1612
        %v1614 = vrot.slane %v1613, 1
        %v1615 = vadd.f32 %v1613, %v1614
        %v1616 = vrot.slane %v1509, 4
        %v1617 = vadd.f32 %v1509, %v1616
        %v1618 = vrot.slane %v1617, 2
        %v1619 = vadd.f32 %v1617, %v1618
        %v1620 = vrot.slane %v1619, 1
        %v1621 = vadd.f32 %v1619, %v1620
        %v1622 = vrot.slane %v1510, 4
        %v1623 = vadd.f32 %v1510, %v1622
        %v1624 = vrot.slane %v1623, 2
        %v1625 = vadd.f32 %v1623, %v1624
        %v1626 = vrot.slane %v1625, 1
        %v1627 = vadd.f32 %v1625, %v1626
        %v1628 = vrot.slane %v1511, 4
        %v1629 = vadd.f32 %v1511, %v1628
        %v1630 = vrot.slane %v1629, 2
        %v1631 = vadd.f32 %v1629, %v1630
        %v1632 = vrot.slane %v1631, 1
        %v1633 = vadd.f32 %v1631, %v1632
        %v1634 = vrot.slane %v1512, 4
        %v1635 = vadd.f32 %v1512, %v1634
        %v1636 = vrot.slane %v1635, 2
        %v1637 = vadd.f32 %v1635, %v1636
        %v1638 = vrot.slane %v1637, 1
        %v1639 = vadd.f32 %v1637, %v1638
        %v1640 = vrot.slane %v1513, 4
        %v1641 = vadd.f32 %v1513, %v1640
        %v1642 = vrot.slane %v1641, 2
        %v1643 = vadd.f32 %v1641, %v1642
        %v1644 = vrot.slane %v1643, 1
        %v1645 = vadd.f32 %v1643, %v1644
        %v1646 = vrot.slane %v1514, 4
        %v1647 = vadd.f32 %v1514, %v1646
        %v1648 = vrot.slane %v1647, 2
        %v1649 = vadd.f32 %v1647, %v1648
        %v1650 = vrot.slane %v1649, 1
        %v1651 = vadd.f32 %v1649, %v1650
        %v1652 = vrot.slane %v1515, 4
        %v1653 = vadd.f32 %v1515, %v1652
        %v1654 = vrot.slane %v1653, 2
        %v1655 = vadd.f32 %v1653, %v1654
        %v1656 = vrot.slane %v1655, 1
        %v1657 = vadd.f32 %v1655, %v1656
        %v1658 = vrot.slane %v1516, 4
        %v1659 = vadd.f32 %v1516, %v1658
        %v1660 = vrot.slane %v1659, 2
        %v1661 = vadd.f32 %v1659, %v1660
        %v1662 = vrot.slane %v1661, 1
        %v1663 = vadd.f32 %v1661, %v1662
        %v1664 = vrot.slane %v1517, 4
        %v1665 = vadd.f32 %v1517, %v1664
        %v1666 = vrot.slane %v1665, 2
        %v1667 = vadd.f32 %v1665, %v1666
        %v1668 = vrot.slane %v1667, 1
        %v1669 = vadd.f32 %v1667, %v1668
        %v1670 = vrot.slane %v1518, 4
        %v1671 = vadd.f32 %v1518, %v1670
        %v1672 = vrot.slane %v1671, 2
        %v1673 = vadd.f32 %v1671, %v1672
        %v1674 = vrot.slane %v1673, 1
        %v1675 = vadd.f32 %v1673, %v1674
        %v1676 = vrot.slane %v1519, 4
        %v1677 = vadd.f32 %v1519, %v1676
        %v1678 = vrot.slane %v1677, 2
        %v1679 = vadd.f32 %v1677, %v1678
        %v1680 = vrot.slane %v1679, 1
        %v1681 = vadd.f32 %v1679, %v1680
        %v1682 = vrot.slane %v1520, 4
        %v1683 = vadd.f32 %v1520, %v1682
        %v1684 = vrot.slane %v1683, 2
        %v1685 = vadd.f32 %v1683, %v1684
        %v1686 = vrot.slane %v1685, 1
        %v1687 = vadd.f32 %v1685, %v1686
        %v1688 = vrot.slane %v1521, 4
        %v1689 = vadd.f32 %v1521, %v1688
        %v1690 = vrot.slane %v1689, 2
        %v1691 = vadd.f32 %v1689, %v1690
        %v1692 = vrot.slane %v1691, 1
        %v1693 = vadd.f32 %v1691, %v1692
        %v1694 = vrot.slane %v1522, 4
        %v1695 = vadd.f32 %v1522, %v1694
        %v1696 = vrot.slane %v1695, 2
        %v1697 = vadd.f32 %v1695, %v1696
        %v1698 = vrot.slane %v1697, 1
        %v1699 = vadd.f32 %v1697, %v1698
        %v1700 = vrot.slane %v1523, 4
        %v1701 = vadd.f32 %v1523, %v1700
        %v1702 = vrot.slane %v1701, 2
        %v1703 = vadd.f32 %v1701, %v1702
        %v1704 = vrot.slane %v1703, 1
        %v1705 = vadd.f32 %v1703, %v1704
        %v1706 = vrot.slane %v1524, 4
        %v1707 = vadd.f32 %v1524, %v1706
        %v1708 = vrot.slane %v1707, 2
        %v1709 = vadd.f32 %v1707, %v1708
        %v1710 = vrot.slane %v1709, 1
        %v1711 = vadd.f32 %v1709, %v1710
        %v1712 = vrot.slane %v1525, 4
        %v1713 = vadd.f32 %v1525, %v1712
        %v1714 = vrot.slane %v1713, 2
        %v1715 = vadd.f32 %v1713, %v1714
        %v1716 = vrot.slane %v1715, 1
        %v1717 = vadd.f32 %v1715, %v1716
        %v1718 = vmul.f32 %v1531, %v512
        %v1719 = vmul.f32 %v1537, %v512
        %v1720 = vmul.f32 %v1543, %v512
        %v1721 = vmul.f32 %v1549, %v512
        %v1722 = vmul.f32 %v1555, %v512
        %v1723 = vmul.f32 %v1561, %v512
        %v1724 = vmul.f32 %v1567, %v512
        %v1725 = vmul.f32 %v1573, %v512
        %v1726 = vmul.f32 %v1579, %v512
        %v1727 = vmul.f32 %v1585, %v512
        %v1728 = vmul.f32 %v1591, %v512
        %v1729 = vmul.f32 %v1597, %v512
        %v1730 = vmul.f32 %v1603, %v512
        %v1731 = vmul.f32 %v1609, %v512
        %v1732 = vmul.f32 %v1615, %v512
        %v1733 = vmul.f32 %v1621, %v512
        %v1734 = vmul.f32 %v1627, %v512
        %v1735 = vmul.f32 %v1633, %v512
        %v1736 = vmul.f32 %v1639, %v512
        %v1737 = vmul.f32 %v1645, %v512
        %v1738 = vmul.f32 %v1651, %v512
        %v1739 = vmul.f32 %v1657, %v512
        %v1740 = vmul.f32 %v1663, %v512
        %v1741 = vmul.f32 %v1669, %v512
        %v1742 = vmul.f32 %v1675, %v512
        %v1743 = vmul.f32 %v1681, %v512
        %v1744 = vmul.f32 %v1687, %v512
        %v1745 = vmul.f32 %v1693, %v512
        %v1746 = vmul.f32 %v1699, %v512
        %v1747 = vmul.f32 %v1705, %v512
        %v1748 = vmul.f32 %v1711, %v512
        %v1749 = vmul.f32 %v1717, %v512
        %v1750 = vadd.f32 %v1718, 1e-05
        %v1751 = vadd.f32 %v1719, 1e-05
        %v1752 = vadd.f32 %v1720, 1e-05
        %v1753 = vadd.f32 %v1721, 1e-05
        %v1754 = vadd.f32 %v1722, 1e-05
        %v1755 = vadd.f32 %v1723, 1e-05
        %v1756 = vadd.f32 %v1724, 1e-05
        %v1757 = vadd.f32 %v1725, 1e-05
        %v1758 = vadd.f32 %v1726, 1e-05
        %v1759 = vadd.f32 %v1727, 1e-05
        %v1760 = vadd.f32 %v1728, 1e-05
        %v1761 = vadd.f32 %v1729, 1e-05
        %v1762 = vadd.f32 %v1730, 1e-05
        %v1763 = vadd.f32 %v1731, 1e-05
        %v1764 = vadd.f32 %v1732, 1e-05
        %v1765 = vadd.f32 %v1733, 1e-05
        %v1766 = vadd.f32 %v1734, 1e-05
        %v1767 = vadd.f32 %v1735, 1e-05
        %v1768 = vadd.f32 %v1736, 1e-05
        %v1769 = vadd.f32 %v1737, 1e-05
        %v1770 = vadd.f32 %v1738, 1e-05
        %v1771 = vadd.f32 %v1739, 1e-05
        %v1772 = vadd.f32 %v1740, 1e-05
        %v1773 = vadd.f32 %v1741, 1e-05
        %v1774 = vadd.f32 %v1742, 1e-05
        %v1775 = vadd.f32 %v1743, 1e-05
        %v1776 = vadd.f32 %v1744, 1e-05
        %v1777 = vadd.f32 %v1745, 1e-05
        %v1778 = vadd.f32 %v1746, 1e-05
        %v1779 = vadd.f32 %v1747, 1e-05
        %v1780 = vadd.f32 %v1748, 1e-05
        %v1781 = vadd.f32 %v1749, 1e-05
        %v1782 = vrsqrt.pop %v1750
        %v1783 = vrsqrt.pop %v1751
        %v1784 = vrsqrt.pop %v1752
        %v1785 = vrsqrt.pop %v1753
        %v1786 = vrsqrt.pop %v1754
        %v1787 = vrsqrt.pop %v1755
        %v1788 = vrsqrt.pop %v1756
        %v1789 = vrsqrt.pop %v1757
        %v1790 = vrsqrt.pop %v1758
        %v1791 = vrsqrt.pop %v1759
        %v1792 = vrsqrt.pop %v1760
        %v1793 = vrsqrt.pop %v1761
        %v1794 = vrsqrt.pop %v1762
        %v1795 = vrsqrt.pop %v1763
        %v1796 = vrsqrt.pop %v1764
        %v1797 = vrsqrt.pop %v1765
        %v1798 = vrsqrt.pop %v1766
        %v1799 = vrsqrt.pop %v1767
        %v1800 = vrsqrt.pop %v1768
        %v1801 = vrsqrt.pop %v1769
        %v1802 = vrsqrt.pop %v1770
        %v1803 = vrsqrt.pop %v1771
        %v1804 = vrsqrt.pop %v1772
        %v1805 = vrsqrt.pop %v1773
        %v1806 = vrsqrt.pop %v1774
        %v1807 = vrsqrt.pop %v1775
        %v1808 = vrsqrt.pop %v1776
        %v1809 = vrsqrt.pop %v1777
        %v1810 = vrsqrt.pop %v1778
        %v1811 = vrsqrt.pop %v1779
        %v1812 = vrsqrt.pop %v1780
        %v1813 = vrsqrt.pop %v1781
        %v1814 = vmul.f32 %v1462, %v1782
        %v1815 = vmul.f32 %v1463, %v1783
        %v1816 = vmul.f32 %v1464, %v1784
        %v1817 = vmul.f32 %v1465, %v1785
        %v1818 = vmul.f32 %v1466, %v1786
        %v1819 = vmul.f32 %v1467, %v1787
        %v1820 = vmul.f32 %v1468, %v1788
        %v1821 = vmul.f32 %v1469, %v1789
        %v1822 = vmul.f32 %v1470, %v1790
        %v1823 = vmul.f32 %v1471, %v1791
        %v1824 = vmul.f32 %v1472, %v1792
        %v1825 = vmul.f32 %v1473, %v1793
        %v1826 = vmul.f32 %v1474, %v1794
        %v1827 = vmul.f32 %v1475, %v1795
        %v1828 = vmul.f32 %v1476, %v1796
        %v1829 = vmul.f32 %v1477, %v1797
        %v1830 = vmul.f32 %v1478, %v1798
        %v1831 = vmul.f32 %v1479, %v1799
        %v1832 = vmul.f32 %v1480, %v1800
        %v1833 = vmul.f32 %v1481, %v1801
        %v1834 = vmul.f32 %v1482, %v1802
        %v1835 = vmul.f32 %v1483, %v1803
        %v1836 = vmul.f32 %v1484, %v1804
        %v1837 = vmul.f32 %v1485, %v1805
        %v1838 = vmul.f32 %v1486, %v1806
        %v1839 = vmul.f32 %v1487, %v1807
        %v1840 = vmul.f32 %v1488, %v1808
        %v1841 = vmul.f32 %v1489, %v1809
        %v1842 = vmul.f32 %v1490, %v1810
        %v1843 = vmul.f32 %v1491, %v1811
        %v1844 = vmul.f32 %v1492, %v1812
        %v1845 = vmul.f32 %v1493, %v1813
        %v1846 = vpack.c.bf16 %v1815, %v1814
        %v1847 = vpack.c.bf16 %v1817, %v1816
        %v1848 = vpack.c.bf16 %v1819, %v1818
        %v1849 = vpack.c.bf16 %v1821, %v1820
        %v1850 = vpack.c.bf16 %v1823, %v1822
        %v1851 = vpack.c.bf16 %v1825, %v1824
        %v1852 = vpack.c.bf16 %v1827, %v1826
        %v1853 = vpack.c.bf16 %v1829, %v1828
        %v1854 = vpack.c.bf16 %v1831, %v1830
        %v1855 = vpack.c.bf16 %v1833, %v1832
        %v1856 = vpack.c.bf16 %v1835, %v1834
        %v1857 = vpack.c.bf16 %v1837, %v1836
        %v1858 = vpack.c.bf16 %v1839, %v1838
        %v1859 = vpack.c.bf16 %v1841, %v1840
        %v1860 = vpack.c.bf16 %v1843, %v1842
        %v1861 = vpack.c.bf16 %v1845, %v1844
        %v1862 = vld [vmem:[%s2] sm:$0xf]
        %v1863 = vld [vmem:[%s2 + $0x4] sm:$0xf]
        %v1864 = vld [vmem:[%s2 + $0x8] sm:$0xf]
        %v1865 = vld [vmem:[%s2 + $0xc] sm:$0xf]
        %v1866 = vld [vmem:[%s2 + $0x10] sm:$0xf]
        %v1867 = vld [vmem:[%s2 + $0x14] sm:$0xf]
        %v1868 = vld [vmem:[%s2 + $0x18] sm:$0xf]
        %v1869 = vld [vmem:[%s2 + $0x1c] sm:$0xf]
        %v1870 = vld [vmem:[%s2 + $0x20] sm:$0xf]
        %v1871 = vld [vmem:[%s2 + $0x24] sm:$0xf]
        %v1872 = vld [vmem:[%s2 + $0x28] sm:$0xf]
        %v1873 = vld [vmem:[%s2 + $0x2c] sm:$0xf]
        %v1874 = vld [vmem:[%s2 + $0x30] sm:$0xf]
        %v1875 = vld [vmem:[%s2 + $0x34] sm:$0xf]
        %v1876 = vld [vmem:[%s2 + $0x38] sm:$0xf]
        %v1877 = vld [vmem:[%s2 + $0x3c] sm:$0xf]
        %v1878 = vlaneseq
        %v1879 = vshrl.u32 %v1878, 7
        %v1880 = vsub.s32 1, %v1879
        %v1881 = vrot.slane %v254, %v1880
        %v1898 = vunpack.c.l.b16 %v1862
        %v1899 = vunpack.c.l.b16 %v1863
        %v1900 = vunpack.c.l.b16 %v1864
        %v1901 = vunpack.c.l.b16 %v1865
        %v1902 = vunpack.c.l.b16 %v1866
        %v1903 = vunpack.c.l.b16 %v1867
        %v1904 = vunpack.c.l.b16 %v1868
        %v1905 = vunpack.c.l.b16 %v1869
        %v1906 = vunpack.c.l.b16 %v1870
        %v1907 = vunpack.c.l.b16 %v1871
        %v1908 = vunpack.c.l.b16 %v1872
        %v1909 = vunpack.c.l.b16 %v1873
        %v1910 = vunpack.c.l.b16 %v1874
        %v1911 = vunpack.c.l.b16 %v1875
        %v1912 = vunpack.c.l.b16 %v1876
        %v1913 = vunpack.c.l.b16 %v1877
        %v1914 = vpack.c.b16 %v1899, %v1898
        %v1915 = vpack.c.b16 %v1901, %v1900
        %v1916 = vpack.c.b16 %v1903, %v1902
        %v1917 = vpack.c.b16 %v1905, %v1904
        %v1918 = vpack.c.b16 %v1907, %v1906
        %v1919 = vpack.c.b16 %v1909, %v1908
        %v1920 = vpack.c.b16 %v1911, %v1910
        %v1921 = vpack.c.b16 %v1913, %v1912
        %1930 = vmatprep.subr.bf16.mxu0 0
        %1931 = vmatpush1.bf16.msra.mxu0 %v1914
        %1932 = vmatprep.subr.bf16.mxu0 0
        %1933 = vmatpush1.bf16.msra.mxu0 %v1915
        %1934 = vmatprep.subr.bf16.mxu0 0
        %1935 = vmatpush1.bf16.msra.mxu0 %v1916
        %1936 = vmatprep.subr.bf16.mxu0 0
        %1937 = vmatpush1.bf16.msra.mxu0 %v1917
        %1938 = vmatprep.subr.bf16.mxu0 0
        %1939 = vmatpush1.bf16.msra.mxu0 %v1918
        %1940 = vmatprep.subr.bf16.mxu0 0
        %1941 = vmatpush1.bf16.msra.mxu0 %v1919
        %1942 = vmatprep.subr.bf16.mxu0 0
        %1943 = vmatpush1.bf16.msra.mxu0 %v1920
        %1944 = vmatprep.subr.bf16.mxu0 0
        %1945 = vmatpush1.bf16.msra.mxu0 %v1921
        %1946 = vmatprep.subr.bf16.mxu0 0
        %1947 = vmatpush1.bf16.msra.mxu0 0
        %1948 = vmatprep.subr.bf16.mxu0 0
        %1949 = vmatpush1.bf16.msra.mxu0 0
        %1950 = vmatprep.subr.bf16.mxu0 0
        %1951 = vmatpush1.bf16.msra.mxu0 0
        %1952 = vmatprep.subr.bf16.mxu0 0
        %1953 = vmatpush1.bf16.msra.mxu0 0
        %1954 = vmatprep.subr.bf16.mxu0 0
        %1955 = vmatpush1.bf16.msra.mxu0 0
        %1956 = vmatprep.subr.bf16.mxu0 0
        %1957 = vmatpush1.bf16.msra.mxu0 0
        %1958 = vmatprep.subr.bf16.mxu0 0
        %1959 = vmatpush1.bf16.msra.mxu0 0
        %1960 = vmatprep.subr.bf16.mxu0 0
        %1961 = vmatpush1.bf16.msra.mxu0 0
        %1962 = vmatprep.mubr.bf16.mxu0 0
        %1963 = vmatmul.mubr.bf16.gmra.mrb[0].mxu0 %v1846
        %v1964 = vpop.f32.mrb[0].mxu0
        %v1965 = vadd.f32 %v1881, %v1964
        %v1966 = vpop.f32.mrb[0].mxu0
        %v1967 = vpop.f32.mrb[0].mxu0
        %v1968 = vadd.f32 %v1881, %v1967
        %v1969 = vpop.f32.mrb[0].mxu0
        %1970 = vmatprep.mubr.bf16.mxu0 0
        %1971 = vmatmul.mubr.bf16.gmra.mrb[0].mxu0 %v1847
        %v1972 = vpop.f32.mrb[0].mxu0
        %v1973 = vadd.f32 %v1881, %v1972
        %v1974 = vpop.f32.mrb[0].mxu0
        %v1975 = vpop.f32.mrb[0].mxu0
        %v1976 = vadd.f32 %v1881, %v1975
        %v1977 = vpop.f32.mrb[0].mxu0
        %1978 = vmatprep.mubr.bf16.mxu0 0
        %1979 = vmatmul.mubr.bf16.gmra.mrb[0].mxu0 %v1848
        %v1980 = vpop.f32.mrb[0].mxu0
        %v1981 = vadd.f32 %v1881, %v1980
        %v1982 = vpop.f32.mrb[0].mxu0
        %v1983 = vpop.f32.mrb[0].mxu0
        %v1984 = vadd.f32 %v1881, %v1983
        %v1985 = vpop.f32.mrb[0].mxu0
        %1986 = vmatprep.mubr.bf16.mxu0 0
        %1987 = vmatmul.mubr.bf16.gmra.mrb[0].mxu0 %v1849
        %v1988 = vpop.f32.mrb[0].mxu0
        %v1989 = vadd.f32 %v1881, %v1988
        %v1990 = vpop.f32.mrb[0].mxu0
        %v1991 = vpop.f32.mrb[0].mxu0
        %v1992 = vadd.f32 %v1881, %v1991
        %v1993 = vpop.f32.mrb[0].mxu0
        %1994 = vmatprep.mubr.bf16.mxu0 0
        %1995 = vmatmul.mubr.bf16.gmra.mrb[0].mxu0 %v1850
        %v1996 = vpop.f32.mrb[0].mxu0
        %v1997 = vadd.f32 %v1881, %v1996
        %v1998 = vpop.f32.mrb[0].mxu0
        %v1999 = vpop.f32.mrb[0].mxu0
        %v2000 = vadd.f32 %v1881, %v1999
        %v2001 = vpop.f32.mrb[0].mxu0
        %2002 = vmatprep.mubr.bf16.mxu0 0
        %2003 = vmatmul.mubr.bf16.gmra.mrb[0].mxu0 %v1851
        %v2004 = vpop.f32.mrb[0].mxu0
        %v2005 = vadd.f32 %v1881, %v2004
        %v2006 = vpop.f32.mrb[0].mxu0
        %v2007 = vpop.f32.mrb[0].mxu0
        %v2008 = vadd.f32 %v1881, %v2007
        %v2009 = vpop.f32.mrb[0].mxu0
        %2010 = vmatprep.mubr.bf16.mxu0 0
        %2011 = vmatmul.mubr.bf16.gmra.mrb[0].mxu0 %v1852
        %v2012 = vpop.f32.mrb[0].mxu0
        %v2013 = vadd.f32 %v1881, %v2012
        %v2014 = vpop.f32.mrb[0].mxu0
        %v2015 = vpop.f32.mrb[0].mxu0
        %v2016 = vadd.f32 %v1881, %v2015
        %v2017 = vpop.f32.mrb[0].mxu0
        %2018 = vmatprep.mubr.bf16.mxu0 0
        %2019 = vmatmul.mubr.bf16.gmra.mrb[0].mxu0 %v1853
        %v2020 = vpop.f32.mrb[0].mxu0
        %v2021 = vadd.f32 %v1881, %v2020
        %v2022 = vpop.f32.mrb[0].mxu0
        %v2023 = vpop.f32.mrb[0].mxu0
        %v2024 = vadd.f32 %v1881, %v2023
        %v2025 = vpop.f32.mrb[0].mxu0
        %2026 = vmatprep.mubr.bf16.mxu0 0
        %2027 = vmatmul.mubr.bf16.gmra.mrb[0].mxu0 %v1854
        %v2028 = vpop.f32.mrb[0].mxu0
        %v2029 = vadd.f32 %v1881, %v2028
        %v2030 = vpop.f32.mrb[0].mxu0
        %v2031 = vpop.f32.mrb[0].mxu0
        %v2032 = vadd.f32 %v1881, %v2031
        %v2033 = vpop.f32.mrb[0].mxu0
        %2034 = vmatprep.mubr.bf16.mxu0 0
        %2035 = vmatmul.mubr.bf16.gmra.mrb[0].mxu0 %v1855
        %v2036 = vpop.f32.mrb[0].mxu0
        %v2037 = vadd.f32 %v1881, %v2036
        %v2038 = vpop.f32.mrb[0].mxu0
        %v2039 = vpop.f32.mrb[0].mxu0
        %v2040 = vadd.f32 %v1881, %v2039
        %v2041 = vpop.f32.mrb[0].mxu0
        %2042 = vmatprep.mubr.bf16.mxu0 0
        %2043 = vmatmul.mubr.bf16.gmra.mrb[0].mxu0 %v1856
        %v2044 = vpop.f32.mrb[0].mxu0
        %v2045 = vadd.f32 %v1881, %v2044
        %v2046 = vpop.f32.mrb[0].mxu0
        %v2047 = vpop.f32.mrb[0].mxu0
        %v2048 = vadd.f32 %v1881, %v2047
        %v2049 = vpop.f32.mrb[0].mxu0
        %2050 = vmatprep.mubr.bf16.mxu0 0
        %2051 = vmatmul.mubr.bf16.gmra.mrb[0].mxu0 %v1857
        %v2052 = vpop.f32.mrb[0].mxu0
        %v2053 = vadd.f32 %v1881, %v2052
        %v2054 = vpop.f32.mrb[0].mxu0
        %v2055 = vpop.f32.mrb[0].mxu0
        %v2056 = vadd.f32 %v1881, %v2055
        %v2057 = vpop.f32.mrb[0].mxu0
        %2058 = vmatprep.mubr.bf16.mxu0 0
        %2059 = vmatmul.mubr.bf16.gmra.mrb[0].mxu0 %v1858
        %v2060 = vpop.f32.mrb[0].mxu0
        %v2061 = vadd.f32 %v1881, %v2060
        %v2062 = vpop.f32.mrb[0].mxu0
        %v2063 = vpop.f32.mrb[0].mxu0
        %v2064 = vadd.f32 %v1881, %v2063
        %v2065 = vpop.f32.mrb[0].mxu0
        %2066 = vmatprep.mubr.bf16.mxu0 0
        %2067 = vmatmul.mubr.bf16.gmra.mrb[0].mxu0 %v1859
        %v2068 = vpop.f32.mrb[0].mxu0
        %v2069 = vadd.f32 %v1881, %v2068
        %v2070 = vpop.f32.mrb[0].mxu0
        %v2071 = vpop.f32.mrb[0].mxu0
        %v2072 = vadd.f32 %v1881, %v2071
        %v2073 = vpop.f32.mrb[0].mxu0
        %2074 = vmatprep.mubr.bf16.mxu0 0
        %2075 = vmatmul.mubr.bf16.gmra.mrb[0].mxu0 %v1860
        %v2076 = vpop.f32.mrb[0].mxu0
        %v2077 = vadd.f32 %v1881, %v2076
        %v2078 = vpop.f32.mrb[0].mxu0
        %v2079 = vpop.f32.mrb[0].mxu0
        %v2080 = vadd.f32 %v1881, %v2079
        %v2081 = vpop.f32.mrb[0].mxu0
        %2082 = vmatprep.mubr.bf16.mxu0 0
        %2083 = vmatmul.mubr.bf16.gmra.mrb[0].mxu0 %v1861
        %v2084 = vpop.f32.mrb[0].mxu0
        %v2085 = vadd.f32 %v1881, %v2084
        %v2086 = vpop.f32.mrb[0].mxu0
        %v2087 = vpop.f32.mrb[0].mxu0
        %v2088 = vadd.f32 %v1881, %v2087
        %v2089 = vpop.f32.mrb[0].mxu0
        %2090 = vdwg.mxu0
        %v2091 = vmax.f32 %v1965, 0.0
        %v2092 = vmax.f32 %v1968, 0.0
        %v2093 = vmax.f32 %v1973, 0.0
        %v2094 = vmax.f32 %v1976, 0.0
        %v2095 = vmax.f32 %v1981, 0.0
        %v2096 = vmax.f32 %v1984, 0.0
        %v2097 = vmax.f32 %v1989, 0.0
        %v2098 = vmax.f32 %v1992, 0.0
        %v2099 = vmax.f32 %v1997, 0.0
        %v2100 = vmax.f32 %v2000, 0.0
        %v2101 = vmax.f32 %v2005, 0.0
        %v2102 = vmax.f32 %v2008, 0.0
        %v2103 = vmax.f32 %v2013, 0.0
        %v2104 = vmax.f32 %v2016, 0.0
        %v2105 = vmax.f32 %v2021, 0.0
        %v2106 = vmax.f32 %v2024, 0.0
        %v2107 = vmax.f32 %v2029, 0.0
        %v2108 = vmax.f32 %v2032, 0.0
        %v2109 = vmax.f32 %v2037, 0.0
        %v2110 = vmax.f32 %v2040, 0.0
        %v2111 = vmax.f32 %v2045, 0.0
        %v2112 = vmax.f32 %v2048, 0.0
        %v2113 = vmax.f32 %v2053, 0.0
        %v2114 = vmax.f32 %v2056, 0.0
        %v2115 = vmax.f32 %v2061, 0.0
        %v2116 = vmax.f32 %v2064, 0.0
        %v2117 = vmax.f32 %v2069, 0.0
        %v2118 = vmax.f32 %v2072, 0.0
        %v2119 = vmax.f32 %v2077, 0.0
        %v2120 = vmax.f32 %v2080, 0.0
        %v2121 = vmax.f32 %v2085, 0.0
        %v2122 = vmax.f32 %v2088, 0.0
        %v2123 = vrot.slane %v2091, 4
        %v2124 = vadd.f32 %v2091, %v2123
        %v2125 = vrot.slane %v2124, 2
        %v2126 = vadd.f32 %v2124, %v2125
        %v2127 = vrot.slane %v2126, 1
        %v2128 = vadd.f32 %v2126, %v2127
        %v2129 = vrot.slane %v2092, 4
        %v2130 = vadd.f32 %v2092, %v2129
        %v2131 = vrot.slane %v2130, 2
        %v2132 = vadd.f32 %v2130, %v2131
        %v2133 = vrot.slane %v2132, 1
        %v2134 = vadd.f32 %v2132, %v2133
        %v2135 = vrot.slane %v2093, 4
        %v2136 = vadd.f32 %v2093, %v2135
        %v2137 = vrot.slane %v2136, 2
        %v2138 = vadd.f32 %v2136, %v2137
        %v2139 = vrot.slane %v2138, 1
        %v2140 = vadd.f32 %v2138, %v2139
        %v2141 = vrot.slane %v2094, 4
        %v2142 = vadd.f32 %v2094, %v2141
        %v2143 = vrot.slane %v2142, 2
        %v2144 = vadd.f32 %v2142, %v2143
        %v2145 = vrot.slane %v2144, 1
        %v2146 = vadd.f32 %v2144, %v2145
        %v2147 = vrot.slane %v2095, 4
        %v2148 = vadd.f32 %v2095, %v2147
        %v2149 = vrot.slane %v2148, 2
        %v2150 = vadd.f32 %v2148, %v2149
        %v2151 = vrot.slane %v2150, 1
        %v2152 = vadd.f32 %v2150, %v2151
        %v2153 = vrot.slane %v2096, 4
        %v2154 = vadd.f32 %v2096, %v2153
        %v2155 = vrot.slane %v2154, 2
        %v2156 = vadd.f32 %v2154, %v2155
        %v2157 = vrot.slane %v2156, 1
        %v2158 = vadd.f32 %v2156, %v2157
        %v2159 = vrot.slane %v2097, 4
        %v2160 = vadd.f32 %v2097, %v2159
        %v2161 = vrot.slane %v2160, 2
        %v2162 = vadd.f32 %v2160, %v2161
        %v2163 = vrot.slane %v2162, 1
        %v2164 = vadd.f32 %v2162, %v2163
        %v2165 = vrot.slane %v2098, 4
        %v2166 = vadd.f32 %v2098, %v2165
        %v2167 = vrot.slane %v2166, 2
        %v2168 = vadd.f32 %v2166, %v2167
        %v2169 = vrot.slane %v2168, 1
        %v2170 = vadd.f32 %v2168, %v2169
        %v2171 = vrot.slane %v2099, 4
        %v2172 = vadd.f32 %v2099, %v2171
        %v2173 = vrot.slane %v2172, 2
        %v2174 = vadd.f32 %v2172, %v2173
        %v2175 = vrot.slane %v2174, 1
        %v2176 = vadd.f32 %v2174, %v2175
        %v2177 = vrot.slane %v2100, 4
        %v2178 = vadd.f32 %v2100, %v2177
        %v2179 = vrot.slane %v2178, 2
        %v2180 = vadd.f32 %v2178, %v2179
        %v2181 = vrot.slane %v2180, 1
        %v2182 = vadd.f32 %v2180, %v2181
        %v2183 = vrot.slane %v2101, 4
        %v2184 = vadd.f32 %v2101, %v2183
        %v2185 = vrot.slane %v2184, 2
        %v2186 = vadd.f32 %v2184, %v2185
        %v2187 = vrot.slane %v2186, 1
        %v2188 = vadd.f32 %v2186, %v2187
        %v2189 = vrot.slane %v2102, 4
        %v2190 = vadd.f32 %v2102, %v2189
        %v2191 = vrot.slane %v2190, 2
        %v2192 = vadd.f32 %v2190, %v2191
        %v2193 = vrot.slane %v2192, 1
        %v2194 = vadd.f32 %v2192, %v2193
        %v2195 = vrot.slane %v2103, 4
        %v2196 = vadd.f32 %v2103, %v2195
        %v2197 = vrot.slane %v2196, 2
        %v2198 = vadd.f32 %v2196, %v2197
        %v2199 = vrot.slane %v2198, 1
        %v2200 = vadd.f32 %v2198, %v2199
        %v2201 = vrot.slane %v2104, 4
        %v2202 = vadd.f32 %v2104, %v2201
        %v2203 = vrot.slane %v2202, 2
        %v2204 = vadd.f32 %v2202, %v2203
        %v2205 = vrot.slane %v2204, 1
        %v2206 = vadd.f32 %v2204, %v2205
        %v2207 = vrot.slane %v2105, 4
        %v2208 = vadd.f32 %v2105, %v2207
        %v2209 = vrot.slane %v2208, 2
        %v2210 = vadd.f32 %v2208, %v2209
        %v2211 = vrot.slane %v2210, 1
        %v2212 = vadd.f32 %v2210, %v2211
        %v2213 = vrot.slane %v2106, 4
        %v2214 = vadd.f32 %v2106, %v2213
        %v2215 = vrot.slane %v2214, 2
        %v2216 = vadd.f32 %v2214, %v2215
        %v2217 = vrot.slane %v2216, 1
        %v2218 = vadd.f32 %v2216, %v2217
        %v2219 = vrot.slane %v2107, 4
        %v2220 = vadd.f32 %v2107, %v2219
        %v2221 = vrot.slane %v2220, 2
        %v2222 = vadd.f32 %v2220, %v2221
        %v2223 = vrot.slane %v2222, 1
        %v2224 = vadd.f32 %v2222, %v2223
        %v2225 = vrot.slane %v2108, 4
        %v2226 = vadd.f32 %v2108, %v2225
        %v2227 = vrot.slane %v2226, 2
        %v2228 = vadd.f32 %v2226, %v2227
        %v2229 = vrot.slane %v2228, 1
        %v2230 = vadd.f32 %v2228, %v2229
        %v2231 = vrot.slane %v2109, 4
        %v2232 = vadd.f32 %v2109, %v2231
        %v2233 = vrot.slane %v2232, 2
        %v2234 = vadd.f32 %v2232, %v2233
        %v2235 = vrot.slane %v2234, 1
        %v2236 = vadd.f32 %v2234, %v2235
        %v2237 = vrot.slane %v2110, 4
        %v2238 = vadd.f32 %v2110, %v2237
        %v2239 = vrot.slane %v2238, 2
        %v2240 = vadd.f32 %v2238, %v2239
        %v2241 = vrot.slane %v2240, 1
        %v2242 = vadd.f32 %v2240, %v2241
        %v2243 = vrot.slane %v2111, 4
        %v2244 = vadd.f32 %v2111, %v2243
        %v2245 = vrot.slane %v2244, 2
        %v2246 = vadd.f32 %v2244, %v2245
        %v2247 = vrot.slane %v2246, 1
        %v2248 = vadd.f32 %v2246, %v2247
        %v2249 = vrot.slane %v2112, 4
        %v2250 = vadd.f32 %v2112, %v2249
        %v2251 = vrot.slane %v2250, 2
        %v2252 = vadd.f32 %v2250, %v2251
        %v2253 = vrot.slane %v2252, 1
        %v2254 = vadd.f32 %v2252, %v2253
        %v2255 = vrot.slane %v2113, 4
        %v2256 = vadd.f32 %v2113, %v2255
        %v2257 = vrot.slane %v2256, 2
        %v2258 = vadd.f32 %v2256, %v2257
        %v2259 = vrot.slane %v2258, 1
        %v2260 = vadd.f32 %v2258, %v2259
        %v2261 = vrot.slane %v2114, 4
        %v2262 = vadd.f32 %v2114, %v2261
        %v2263 = vrot.slane %v2262, 2
        %v2264 = vadd.f32 %v2262, %v2263
        %v2265 = vrot.slane %v2264, 1
        %v2266 = vadd.f32 %v2264, %v2265
        %v2267 = vrot.slane %v2115, 4
        %v2268 = vadd.f32 %v2115, %v2267
        %v2269 = vrot.slane %v2268, 2
        %v2270 = vadd.f32 %v2268, %v2269
        %v2271 = vrot.slane %v2270, 1
        %v2272 = vadd.f32 %v2270, %v2271
        %v2273 = vrot.slane %v2116, 4
        %v2274 = vadd.f32 %v2116, %v2273
        %v2275 = vrot.slane %v2274, 2
        %v2276 = vadd.f32 %v2274, %v2275
        %v2277 = vrot.slane %v2276, 1
        %v2278 = vadd.f32 %v2276, %v2277
        %v2279 = vrot.slane %v2117, 4
        %v2280 = vadd.f32 %v2117, %v2279
        %v2281 = vrot.slane %v2280, 2
        %v2282 = vadd.f32 %v2280, %v2281
        %v2283 = vrot.slane %v2282, 1
        %v2284 = vadd.f32 %v2282, %v2283
        %v2285 = vrot.slane %v2118, 4
        %v2286 = vadd.f32 %v2118, %v2285
        %v2287 = vrot.slane %v2286, 2
        %v2288 = vadd.f32 %v2286, %v2287
        %v2289 = vrot.slane %v2288, 1
        %v2290 = vadd.f32 %v2288, %v2289
        %v2291 = vrot.slane %v2119, 4
        %v2292 = vadd.f32 %v2119, %v2291
        %v2293 = vrot.slane %v2292, 2
        %v2294 = vadd.f32 %v2292, %v2293
        %v2295 = vrot.slane %v2294, 1
        %v2296 = vadd.f32 %v2294, %v2295
        %v2297 = vrot.slane %v2120, 4
        %v2298 = vadd.f32 %v2120, %v2297
        %v2299 = vrot.slane %v2298, 2
        %v2300 = vadd.f32 %v2298, %v2299
        %v2301 = vrot.slane %v2300, 1
        %v2302 = vadd.f32 %v2300, %v2301
        %v2303 = vrot.slane %v2121, 4
        %v2304 = vadd.f32 %v2121, %v2303
        %v2305 = vrot.slane %v2304, 2
        %v2306 = vadd.f32 %v2304, %v2305
        %v2307 = vrot.slane %v2306, 1
        %v2308 = vadd.f32 %v2306, %v2307
        %v2309 = vrot.slane %v2122, 4
        %v2310 = vadd.f32 %v2122, %v2309
        %v2311 = vrot.slane %v2310, 2
        %v2312 = vadd.f32 %v2310, %v2311
        %v2313 = vrot.slane %v2312, 1
        %v2314 = vadd.f32 %v2312, %v2313
        %v2315 = vmul.f32 %v2128, %v512
        %v2316 = vmul.f32 %v2134, %v512
        %v2317 = vmul.f32 %v2140, %v512
        %v2318 = vmul.f32 %v2146, %v512
        %v2319 = vmul.f32 %v2152, %v512
        %v2320 = vmul.f32 %v2158, %v512
        %v2321 = vmul.f32 %v2164, %v512
        %v2322 = vmul.f32 %v2170, %v512
        %v2323 = vmul.f32 %v2176, %v512
        %v2324 = vmul.f32 %v2182, %v512
        %v2325 = vmul.f32 %v2188, %v512
        %v2326 = vmul.f32 %v2194, %v512
        %v2327 = vmul.f32 %v2200, %v512
        %v2328 = vmul.f32 %v2206, %v512
        %v2329 = vmul.f32 %v2212, %v512
        %v2330 = vmul.f32 %v2218, %v512
        %v2331 = vmul.f32 %v2224, %v512
        %v2332 = vmul.f32 %v2230, %v512
        %v2333 = vmul.f32 %v2236, %v512
        %v2334 = vmul.f32 %v2242, %v512
        %v2335 = vmul.f32 %v2248, %v512
        %v2336 = vmul.f32 %v2254, %v512
        %v2337 = vmul.f32 %v2260, %v512
        %v2338 = vmul.f32 %v2266, %v512
        %v2339 = vmul.f32 %v2272, %v512
        %v2340 = vmul.f32 %v2278, %v512
        %v2341 = vmul.f32 %v2284, %v512
        %v2342 = vmul.f32 %v2290, %v512
        %v2343 = vmul.f32 %v2296, %v512
        %v2344 = vmul.f32 %v2302, %v512
        %v2345 = vmul.f32 %v2308, %v512
        %v2346 = vmul.f32 %v2314, %v512
        %v2347 = vsub.f32 %v2091, %v2315
        %v2348 = vsub.f32 %v2092, %v2316
        %v2349 = vsub.f32 %v2093, %v2317
        %v2350 = vsub.f32 %v2094, %v2318
        %v2351 = vsub.f32 %v2095, %v2319
        %v2352 = vsub.f32 %v2096, %v2320
        %v2353 = vsub.f32 %v2097, %v2321
        %v2354 = vsub.f32 %v2098, %v2322
        %v2355 = vsub.f32 %v2099, %v2323
        %v2356 = vsub.f32 %v2100, %v2324
        %v2357 = vsub.f32 %v2101, %v2325
        %v2358 = vsub.f32 %v2102, %v2326
        %v2359 = vsub.f32 %v2103, %v2327
        %v2360 = vsub.f32 %v2104, %v2328
        %v2361 = vsub.f32 %v2105, %v2329
        %v2362 = vsub.f32 %v2106, %v2330
        %v2363 = vsub.f32 %v2107, %v2331
        %v2364 = vsub.f32 %v2108, %v2332
        %v2365 = vsub.f32 %v2109, %v2333
        %v2366 = vsub.f32 %v2110, %v2334
        %v2367 = vsub.f32 %v2111, %v2335
        %v2368 = vsub.f32 %v2112, %v2336
        %v2369 = vsub.f32 %v2113, %v2337
        %v2370 = vsub.f32 %v2114, %v2338
        %v2371 = vsub.f32 %v2115, %v2339
        %v2372 = vsub.f32 %v2116, %v2340
        %v2373 = vsub.f32 %v2117, %v2341
        %v2374 = vsub.f32 %v2118, %v2342
        %v2375 = vsub.f32 %v2119, %v2343
        %v2376 = vsub.f32 %v2120, %v2344
        %v2377 = vsub.f32 %v2121, %v2345
        %v2378 = vsub.f32 %v2122, %v2346
        %v2379 = vmul.f32 %v2347, %v2347
        %v2380 = vmul.f32 %v2348, %v2348
        %v2381 = vmul.f32 %v2349, %v2349
        %v2382 = vmul.f32 %v2350, %v2350
        %v2383 = vmul.f32 %v2351, %v2351
        %v2384 = vmul.f32 %v2352, %v2352
        %v2385 = vmul.f32 %v2353, %v2353
        %v2386 = vmul.f32 %v2354, %v2354
        %v2387 = vmul.f32 %v2355, %v2355
        %v2388 = vmul.f32 %v2356, %v2356
        %v2389 = vmul.f32 %v2357, %v2357
        %v2390 = vmul.f32 %v2358, %v2358
        %v2391 = vmul.f32 %v2359, %v2359
        %v2392 = vmul.f32 %v2360, %v2360
        %v2393 = vmul.f32 %v2361, %v2361
        %v2394 = vmul.f32 %v2362, %v2362
        %v2395 = vmul.f32 %v2363, %v2363
        %v2396 = vmul.f32 %v2364, %v2364
        %v2397 = vmul.f32 %v2365, %v2365
        %v2398 = vmul.f32 %v2366, %v2366
        %v2399 = vmul.f32 %v2367, %v2367
        %v2400 = vmul.f32 %v2368, %v2368
        %v2401 = vmul.f32 %v2369, %v2369
        %v2402 = vmul.f32 %v2370, %v2370
        %v2403 = vmul.f32 %v2371, %v2371
        %v2404 = vmul.f32 %v2372, %v2372
        %v2405 = vmul.f32 %v2373, %v2373
        %v2406 = vmul.f32 %v2374, %v2374
        %v2407 = vmul.f32 %v2375, %v2375
        %v2408 = vmul.f32 %v2376, %v2376
        %v2409 = vmul.f32 %v2377, %v2377
        %v2410 = vmul.f32 %v2378, %v2378
        %v2411 = vrot.slane %v2379, 4
        %v2412 = vadd.f32 %v2379, %v2411
        %v2413 = vrot.slane %v2412, 2
        %v2414 = vadd.f32 %v2412, %v2413
        %v2415 = vrot.slane %v2414, 1
        %v2416 = vadd.f32 %v2414, %v2415
        %v2417 = vrot.slane %v2380, 4
        %v2418 = vadd.f32 %v2380, %v2417
        %v2419 = vrot.slane %v2418, 2
        %v2420 = vadd.f32 %v2418, %v2419
        %v2421 = vrot.slane %v2420, 1
        %v2422 = vadd.f32 %v2420, %v2421
        %v2423 = vrot.slane %v2381, 4
        %v2424 = vadd.f32 %v2381, %v2423
        %v2425 = vrot.slane %v2424, 2
        %v2426 = vadd.f32 %v2424, %v2425
        %v2427 = vrot.slane %v2426, 1
        %v2428 = vadd.f32 %v2426, %v2427
        %v2429 = vrot.slane %v2382, 4
        %v2430 = vadd.f32 %v2382, %v2429
        %v2431 = vrot.slane %v2430, 2
        %v2432 = vadd.f32 %v2430, %v2431
        %v2433 = vrot.slane %v2432, 1
        %v2434 = vadd.f32 %v2432, %v2433
        %v2435 = vrot.slane %v2383, 4
        %v2436 = vadd.f32 %v2383, %v2435
        %v2437 = vrot.slane %v2436, 2
        %v2438 = vadd.f32 %v2436, %v2437
        %v2439 = vrot.slane %v2438, 1
        %v2440 = vadd.f32 %v2438, %v2439
        %v2441 = vrot.slane %v2384, 4
        %v2442 = vadd.f32 %v2384, %v2441
        %v2443 = vrot.slane %v2442, 2
        %v2444 = vadd.f32 %v2442, %v2443
        %v2445 = vrot.slane %v2444, 1
        %v2446 = vadd.f32 %v2444, %v2445
        %v2447 = vrot.slane %v2385, 4
        %v2448 = vadd.f32 %v2385, %v2447
        %v2449 = vrot.slane %v2448, 2
        %v2450 = vadd.f32 %v2448, %v2449
        %v2451 = vrot.slane %v2450, 1
        %v2452 = vadd.f32 %v2450, %v2451
        %v2453 = vrot.slane %v2386, 4
        %v2454 = vadd.f32 %v2386, %v2453
        %v2455 = vrot.slane %v2454, 2
        %v2456 = vadd.f32 %v2454, %v2455
        %v2457 = vrot.slane %v2456, 1
        %v2458 = vadd.f32 %v2456, %v2457
        %v2459 = vrot.slane %v2387, 4
        %v2460 = vadd.f32 %v2387, %v2459
        %v2461 = vrot.slane %v2460, 2
        %v2462 = vadd.f32 %v2460, %v2461
        %v2463 = vrot.slane %v2462, 1
        %v2464 = vadd.f32 %v2462, %v2463
        %v2465 = vrot.slane %v2388, 4
        %v2466 = vadd.f32 %v2388, %v2465
        %v2467 = vrot.slane %v2466, 2
        %v2468 = vadd.f32 %v2466, %v2467
        %v2469 = vrot.slane %v2468, 1
        %v2470 = vadd.f32 %v2468, %v2469
        %v2471 = vrot.slane %v2389, 4
        %v2472 = vadd.f32 %v2389, %v2471
        %v2473 = vrot.slane %v2472, 2
        %v2474 = vadd.f32 %v2472, %v2473
        %v2475 = vrot.slane %v2474, 1
        %v2476 = vadd.f32 %v2474, %v2475
        %v2477 = vrot.slane %v2390, 4
        %v2478 = vadd.f32 %v2390, %v2477
        %v2479 = vrot.slane %v2478, 2
        %v2480 = vadd.f32 %v2478, %v2479
        %v2481 = vrot.slane %v2480, 1
        %v2482 = vadd.f32 %v2480, %v2481
        %v2483 = vrot.slane %v2391, 4
        %v2484 = vadd.f32 %v2391, %v2483
        %v2485 = vrot.slane %v2484, 2
        %v2486 = vadd.f32 %v2484, %v2485
        %v2487 = vrot.slane %v2486, 1
        %v2488 = vadd.f32 %v2486, %v2487
        %v2489 = vrot.slane %v2392, 4
        %v2490 = vadd.f32 %v2392, %v2489
        %v2491 = vrot.slane %v2490, 2
        %v2492 = vadd.f32 %v2490, %v2491
        %v2493 = vrot.slane %v2492, 1
        %v2494 = vadd.f32 %v2492, %v2493
        %v2495 = vrot.slane %v2393, 4
        %v2496 = vadd.f32 %v2393, %v2495
        %v2497 = vrot.slane %v2496, 2
        %v2498 = vadd.f32 %v2496, %v2497
        %v2499 = vrot.slane %v2498, 1
        %v2500 = vadd.f32 %v2498, %v2499
        %v2501 = vrot.slane %v2394, 4
        %v2502 = vadd.f32 %v2394, %v2501
        %v2503 = vrot.slane %v2502, 2
        %v2504 = vadd.f32 %v2502, %v2503
        %v2505 = vrot.slane %v2504, 1
        %v2506 = vadd.f32 %v2504, %v2505
        %v2507 = vrot.slane %v2395, 4
        %v2508 = vadd.f32 %v2395, %v2507
        %v2509 = vrot.slane %v2508, 2
        %v2510 = vadd.f32 %v2508, %v2509
        %v2511 = vrot.slane %v2510, 1
        %v2512 = vadd.f32 %v2510, %v2511
        %v2513 = vrot.slane %v2396, 4
        %v2514 = vadd.f32 %v2396, %v2513
        %v2515 = vrot.slane %v2514, 2
        %v2516 = vadd.f32 %v2514, %v2515
        %v2517 = vrot.slane %v2516, 1
        %v2518 = vadd.f32 %v2516, %v2517
        %v2519 = vrot.slane %v2397, 4
        %v2520 = vadd.f32 %v2397, %v2519
        %v2521 = vrot.slane %v2520, 2
        %v2522 = vadd.f32 %v2520, %v2521
        %v2523 = vrot.slane %v2522, 1
        %v2524 = vadd.f32 %v2522, %v2523
        %v2525 = vrot.slane %v2398, 4
        %v2526 = vadd.f32 %v2398, %v2525
        %v2527 = vrot.slane %v2526, 2
        %v2528 = vadd.f32 %v2526, %v2527
        %v2529 = vrot.slane %v2528, 1
        %v2530 = vadd.f32 %v2528, %v2529
        %v2531 = vrot.slane %v2399, 4
        %v2532 = vadd.f32 %v2399, %v2531
        %v2533 = vrot.slane %v2532, 2
        %v2534 = vadd.f32 %v2532, %v2533
        %v2535 = vrot.slane %v2534, 1
        %v2536 = vadd.f32 %v2534, %v2535
        %v2537 = vrot.slane %v2400, 4
        %v2538 = vadd.f32 %v2400, %v2537
        %v2539 = vrot.slane %v2538, 2
        %v2540 = vadd.f32 %v2538, %v2539
        %v2541 = vrot.slane %v2540, 1
        %v2542 = vadd.f32 %v2540, %v2541
        %v2543 = vrot.slane %v2401, 4
        %v2544 = vadd.f32 %v2401, %v2543
        %v2545 = vrot.slane %v2544, 2
        %v2546 = vadd.f32 %v2544, %v2545
        %v2547 = vrot.slane %v2546, 1
        %v2548 = vadd.f32 %v2546, %v2547
        %v2549 = vrot.slane %v2402, 4
        %v2550 = vadd.f32 %v2402, %v2549
        %v2551 = vrot.slane %v2550, 2
        %v2552 = vadd.f32 %v2550, %v2551
        %v2553 = vrot.slane %v2552, 1
        %v2554 = vadd.f32 %v2552, %v2553
        %v2555 = vrot.slane %v2403, 4
        %v2556 = vadd.f32 %v2403, %v2555
        %v2557 = vrot.slane %v2556, 2
        %v2558 = vadd.f32 %v2556, %v2557
        %v2559 = vrot.slane %v2558, 1
        %v2560 = vadd.f32 %v2558, %v2559
        %v2561 = vrot.slane %v2404, 4
        %v2562 = vadd.f32 %v2404, %v2561
        %v2563 = vrot.slane %v2562, 2
        %v2564 = vadd.f32 %v2562, %v2563
        %v2565 = vrot.slane %v2564, 1
        %v2566 = vadd.f32 %v2564, %v2565
        %v2567 = vrot.slane %v2405, 4
        %v2568 = vadd.f32 %v2405, %v2567
        %v2569 = vrot.slane %v2568, 2
        %v2570 = vadd.f32 %v2568, %v2569
        %v2571 = vrot.slane %v2570, 1
        %v2572 = vadd.f32 %v2570, %v2571
        %v2573 = vrot.slane %v2406, 4
        %v2574 = vadd.f32 %v2406, %v2573
        %v2575 = vrot.slane %v2574, 2
        %v2576 = vadd.f32 %v2574, %v2575
        %v2577 = vrot.slane %v2576, 1
        %v2578 = vadd.f32 %v2576, %v2577
        %v2579 = vrot.slane %v2407, 4
        %v2580 = vadd.f32 %v2407, %v2579
        %v2581 = vrot.slane %v2580, 2
        %v2582 = vadd.f32 %v2580, %v2581
        %v2583 = vrot.slane %v2582, 1
        %v2584 = vadd.f32 %v2582, %v2583
        %v2585 = vrot.slane %v2408, 4
        %v2586 = vadd.f32 %v2408, %v2585
        %v2587 = vrot.slane %v2586, 2
        %v2588 = vadd.f32 %v2586, %v2587
        %v2589 = vrot.slane %v2588, 1
        %v2590 = vadd.f32 %v2588, %v2589
        %v2591 = vrot.slane %v2409, 4
        %v2592 = vadd.f32 %v2409, %v2591
        %v2593 = vrot.slane %v2592, 2
        %v2594 = vadd.f32 %v2592, %v2593
        %v2595 = vrot.slane %v2594, 1
        %v2596 = vadd.f32 %v2594, %v2595
        %v2597 = vrot.slane %v2410, 4
        %v2598 = vadd.f32 %v2410, %v2597
        %v2599 = vrot.slane %v2598, 2
        %v2600 = vadd.f32 %v2598, %v2599
        %v2601 = vrot.slane %v2600, 1
        %v2602 = vadd.f32 %v2600, %v2601
        %v2603 = vmul.f32 %v2416, %v512
        %v2604 = vmul.f32 %v2422, %v512
        %v2605 = vmul.f32 %v2428, %v512
        %v2606 = vmul.f32 %v2434, %v512
        %v2607 = vmul.f32 %v2440, %v512
        %v2608 = vmul.f32 %v2446, %v512
        %v2609 = vmul.f32 %v2452, %v512
        %v2610 = vmul.f32 %v2458, %v512
        %v2611 = vmul.f32 %v2464, %v512
        %v2612 = vmul.f32 %v2470, %v512
        %v2613 = vmul.f32 %v2476, %v512
        %v2614 = vmul.f32 %v2482, %v512
        %v2615 = vmul.f32 %v2488, %v512
        %v2616 = vmul.f32 %v2494, %v512
        %v2617 = vmul.f32 %v2500, %v512
        %v2618 = vmul.f32 %v2506, %v512
        %v2619 = vmul.f32 %v2512, %v512
        %v2620 = vmul.f32 %v2518, %v512
        %v2621 = vmul.f32 %v2524, %v512
        %v2622 = vmul.f32 %v2530, %v512
        %v2623 = vmul.f32 %v2536, %v512
        %v2624 = vmul.f32 %v2542, %v512
        %v2625 = vmul.f32 %v2548, %v512
        %v2626 = vmul.f32 %v2554, %v512
        %v2627 = vmul.f32 %v2560, %v512
        %v2628 = vmul.f32 %v2566, %v512
        %v2629 = vmul.f32 %v2572, %v512
        %v2630 = vmul.f32 %v2578, %v512
        %v2631 = vmul.f32 %v2584, %v512
        %v2632 = vmul.f32 %v2590, %v512
        %v2633 = vmul.f32 %v2596, %v512
        %v2634 = vmul.f32 %v2602, %v512
        %v2635 = vadd.f32 %v2603, 1e-05
        %v2636 = vadd.f32 %v2604, 1e-05
        %v2637 = vadd.f32 %v2605, 1e-05
        %v2638 = vadd.f32 %v2606, 1e-05
        %v2639 = vadd.f32 %v2607, 1e-05
        %v2640 = vadd.f32 %v2608, 1e-05
        %v2641 = vadd.f32 %v2609, 1e-05
        %v2642 = vadd.f32 %v2610, 1e-05
        %v2643 = vadd.f32 %v2611, 1e-05
        %v2644 = vadd.f32 %v2612, 1e-05
        %v2645 = vadd.f32 %v2613, 1e-05
        %v2646 = vadd.f32 %v2614, 1e-05
        %v2647 = vadd.f32 %v2615, 1e-05
        %v2648 = vadd.f32 %v2616, 1e-05
        %v2649 = vadd.f32 %v2617, 1e-05
        %v2650 = vadd.f32 %v2618, 1e-05
        %v2651 = vadd.f32 %v2619, 1e-05
        %v2652 = vadd.f32 %v2620, 1e-05
        %v2653 = vadd.f32 %v2621, 1e-05
        %v2654 = vadd.f32 %v2622, 1e-05
        %v2655 = vadd.f32 %v2623, 1e-05
        %v2656 = vadd.f32 %v2624, 1e-05
        %v2657 = vadd.f32 %v2625, 1e-05
        %v2658 = vadd.f32 %v2626, 1e-05
        %v2659 = vadd.f32 %v2627, 1e-05
        %v2660 = vadd.f32 %v2628, 1e-05
        %v2661 = vadd.f32 %v2629, 1e-05
        %v2662 = vadd.f32 %v2630, 1e-05
        %v2663 = vadd.f32 %v2631, 1e-05
        %v2664 = vadd.f32 %v2632, 1e-05
        %v2665 = vadd.f32 %v2633, 1e-05
        %v2666 = vadd.f32 %v2634, 1e-05
        %v2667 = vrsqrt.pop %v2635
        %v2668 = vrsqrt.pop %v2636
        %v2669 = vrsqrt.pop %v2637
        %v2670 = vrsqrt.pop %v2638
        %v2671 = vrsqrt.pop %v2639
        %v2672 = vrsqrt.pop %v2640
        %v2673 = vrsqrt.pop %v2641
        %v2674 = vrsqrt.pop %v2642
        %v2675 = vrsqrt.pop %v2643
        %v2676 = vrsqrt.pop %v2644
        %v2677 = vrsqrt.pop %v2645
        %v2678 = vrsqrt.pop %v2646
        %v2679 = vrsqrt.pop %v2647
        %v2680 = vrsqrt.pop %v2648
        %v2681 = vrsqrt.pop %v2649
        %v2682 = vrsqrt.pop %v2650
        %v2683 = vrsqrt.pop %v2651
        %v2684 = vrsqrt.pop %v2652
        %v2685 = vrsqrt.pop %v2653
        %v2686 = vrsqrt.pop %v2654
        %v2687 = vrsqrt.pop %v2655
        %v2688 = vrsqrt.pop %v2656
        %v2689 = vrsqrt.pop %v2657
        %v2690 = vrsqrt.pop %v2658
        %v2691 = vrsqrt.pop %v2659
        %v2692 = vrsqrt.pop %v2660
        %v2693 = vrsqrt.pop %v2661
        %v2694 = vrsqrt.pop %v2662
        %v2695 = vrsqrt.pop %v2663
        %v2696 = vrsqrt.pop %v2664
        %v2697 = vrsqrt.pop %v2665
        %v2698 = vrsqrt.pop %v2666
        %v2699 = vmul.f32 %v2347, %v2667
        %v2700 = vmul.f32 %v2348, %v2668
        %v2701 = vmul.f32 %v2349, %v2669
        %v2702 = vmul.f32 %v2350, %v2670
        %v2703 = vmul.f32 %v2351, %v2671
        %v2704 = vmul.f32 %v2352, %v2672
        %v2705 = vmul.f32 %v2353, %v2673
        %v2706 = vmul.f32 %v2354, %v2674
        %v2707 = vmul.f32 %v2355, %v2675
        %v2708 = vmul.f32 %v2356, %v2676
        %v2709 = vmul.f32 %v2357, %v2677
        %v2710 = vmul.f32 %v2358, %v2678
        %v2711 = vmul.f32 %v2359, %v2679
        %v2712 = vmul.f32 %v2360, %v2680
        %v2713 = vmul.f32 %v2361, %v2681
        %v2714 = vmul.f32 %v2362, %v2682
        %v2715 = vmul.f32 %v2363, %v2683
        %v2716 = vmul.f32 %v2364, %v2684
        %v2717 = vmul.f32 %v2365, %v2685
        %v2718 = vmul.f32 %v2366, %v2686
        %v2719 = vmul.f32 %v2367, %v2687
        %v2720 = vmul.f32 %v2368, %v2688
        %v2721 = vmul.f32 %v2369, %v2689
        %v2722 = vmul.f32 %v2370, %v2690
        %v2723 = vmul.f32 %v2371, %v2691
        %v2724 = vmul.f32 %v2372, %v2692
        %v2725 = vmul.f32 %v2373, %v2693
        %v2726 = vmul.f32 %v2374, %v2694
        %v2727 = vmul.f32 %v2375, %v2695
        %v2728 = vmul.f32 %v2376, %v2696
        %v2729 = vmul.f32 %v2377, %v2697
        %v2730 = vmul.f32 %v2378, %v2698
        %v2731 = vpack.c.bf16 %v2700, %v2699
        %v2732 = vpack.c.bf16 %v2702, %v2701
        %v2733 = vpack.c.bf16 %v2704, %v2703
        %v2734 = vpack.c.bf16 %v2706, %v2705
        %v2735 = vpack.c.bf16 %v2708, %v2707
        %v2736 = vpack.c.bf16 %v2710, %v2709
        %v2737 = vpack.c.bf16 %v2712, %v2711
        %v2738 = vpack.c.bf16 %v2714, %v2713
        %v2739 = vpack.c.bf16 %v2716, %v2715
        %v2740 = vpack.c.bf16 %v2718, %v2717
        %v2741 = vpack.c.bf16 %v2720, %v2719
        %v2742 = vpack.c.bf16 %v2722, %v2721
        %v2743 = vpack.c.bf16 %v2724, %v2723
        %v2744 = vpack.c.bf16 %v2726, %v2725
        %v2745 = vpack.c.bf16 %v2728, %v2727
        %v2746 = vpack.c.bf16 %v2730, %v2729
        %v2747 = vld [vmem:[%s3] sm:$0xf]
        %v2748 = vld [vmem:[%s3 + $0x4] sm:$0xf]
        %v2749 = vld [vmem:[%s3 + $0x8] sm:$0xf]
        %v2750 = vld [vmem:[%s3 + $0xc] sm:$0xf]
        %v2751 = vld [vmem:[%s3 + $0x10] sm:$0xf]
        %v2752 = vld [vmem:[%s3 + $0x14] sm:$0xf]
        %v2753 = vld [vmem:[%s3 + $0x18] sm:$0xf]
        %v2754 = vld [vmem:[%s3 + $0x1c] sm:$0xf]
        %v2755 = vld [vmem:[%s3 + $0x20] sm:$0xf]
        %v2756 = vld [vmem:[%s3 + $0x24] sm:$0xf]
        %v2757 = vld [vmem:[%s3 + $0x28] sm:$0xf]
        %v2758 = vld [vmem:[%s3 + $0x2c] sm:$0xf]
        %v2759 = vld [vmem:[%s3 + $0x30] sm:$0xf]
        %v2760 = vld [vmem:[%s3 + $0x34] sm:$0xf]
        %v2761 = vld [vmem:[%s3 + $0x38] sm:$0xf]
        %v2762 = vld [vmem:[%s3 + $0x3c] sm:$0xf]
        %v2763 = vlaneseq
        %v2764 = vshrl.u32 %v2763, 7
        %v2765 = vsub.s32 2, %v2764
        %v2766 = vrot.slane %v254, %v2765
        %v2783 = vunpack.c.l.b16 %v2747
        %v2784 = vunpack.c.l.b16 %v2748
        %v2785 = vunpack.c.l.b16 %v2749
        %v2786 = vunpack.c.l.b16 %v2750
        %v2787 = vunpack.c.l.b16 %v2751
        %v2788 = vunpack.c.l.b16 %v2752
        %v2789 = vunpack.c.l.b16 %v2753
        %v2790 = vunpack.c.l.b16 %v2754
        %v2791 = vunpack.c.l.b16 %v2755
        %v2792 = vunpack.c.l.b16 %v2756
        %v2793 = vunpack.c.l.b16 %v2757
        %v2794 = vunpack.c.l.b16 %v2758
        %v2795 = vunpack.c.l.b16 %v2759
        %v2796 = vunpack.c.l.b16 %v2760
        %v2797 = vunpack.c.l.b16 %v2761
        %v2798 = vunpack.c.l.b16 %v2762
        %v2799 = vpack.c.b16 %v2784, %v2783
        %v2800 = vpack.c.b16 %v2786, %v2785
        %v2801 = vpack.c.b16 %v2788, %v2787
        %v2802 = vpack.c.b16 %v2790, %v2789
        %v2803 = vpack.c.b16 %v2792, %v2791
        %v2804 = vpack.c.b16 %v2794, %v2793
        %v2805 = vpack.c.b16 %v2796, %v2795
        %v2806 = vpack.c.b16 %v2798, %v2797
        %2815 = vmatprep.subr.bf16.mxu0 0
        %2816 = vmatpush1.bf16.msra.mxu0 %v2799
        %2817 = vmatprep.subr.bf16.mxu0 0
        %2818 = vmatpush1.bf16.msra.mxu0 %v2800
        %2819 = vmatprep.subr.bf16.mxu0 0
        %2820 = vmatpush1.bf16.msra.mxu0 %v2801
        %2821 = vmatprep.subr.bf16.mxu0 0
        %2822 = vmatpush1.bf16.msra.mxu0 %v2802
        %2823 = vmatprep.subr.bf16.mxu0 0
        %2824 = vmatpush1.bf16.msra.mxu0 %v2803
        %2825 = vmatprep.subr.bf16.mxu0 0
        %2826 = vmatpush1.bf16.msra.mxu0 %v2804
        %2827 = vmatprep.subr.bf16.mxu0 0
        %2828 = vmatpush1.bf16.msra.mxu0 %v2805
        %2829 = vmatprep.subr.bf16.mxu0 0
        %2830 = vmatpush1.bf16.msra.mxu0 %v2806
        %2831 = vmatprep.subr.bf16.mxu0 0
        %2832 = vmatpush1.bf16.msra.mxu0 0
        %2833 = vmatprep.subr.bf16.mxu0 0
        %2834 = vmatpush1.bf16.msra.mxu0 0
        %2835 = vmatprep.subr.bf16.mxu0 0
        %2836 = vmatpush1.bf16.msra.mxu0 0
        %2837 = vmatprep.subr.bf16.mxu0 0
        %2838 = vmatpush1.bf16.msra.mxu0 0
        %2839 = vmatprep.subr.bf16.mxu0 0
        %2840 = vmatpush1.bf16.msra.mxu0 0
        %2841 = vmatprep.subr.bf16.mxu0 0
        %2842 = vmatpush1.bf16.msra.mxu0 0
        %2843 = vmatprep.subr.bf16.mxu0 0
        %2844 = vmatpush1.bf16.msra.mxu0 0
        %2845 = vmatprep.subr.bf16.mxu0 0
        %2846 = vmatpush1.bf16.msra.mxu0 0
        %2847 = vmatprep.mubr.bf16.mxu0 0
        %2848 = vmatmul.mubr.bf16.gmra.mrb[0].mxu0 %v2731
        %v2849 = vpop.f32.mrb[0].mxu0
        %v2850 = vadd.f32 %v2766, %v2849
        %v2851 = vpop.f32.mrb[0].mxu0
        %v2852 = vpop.f32.mrb[0].mxu0
        %v2853 = vadd.f32 %v2766, %v2852
        %v2854 = vpop.f32.mrb[0].mxu0
        %2855 = vmatprep.mubr.bf16.mxu0 0
        %2856 = vmatmul.mubr.bf16.gmra.mrb[0].mxu0 %v2732
        %v2857 = vpop.f32.mrb[0].mxu0
        %v2858 = vadd.f32 %v2766, %v2857
        %v2859 = vpop.f32.mrb[0].mxu0
        %v2860 = vpop.f32.mrb[0].mxu0
        %v2861 = vadd.f32 %v2766, %v2860
        %v2862 = vpop.f32.mrb[0].mxu0
        %2863 = vmatprep.mubr.bf16.mxu0 0
        %2864 = vmatmul.mubr.bf16.gmra.mrb[0].mxu0 %v2733
        %v2865 = vpop.f32.mrb[0].mxu0
        %v2866 = vadd.f32 %v2766, %v2865
        %v2867 = vpop.f32.mrb[0].mxu0
        %v2868 = vpop.f32.mrb[0].mxu0
        %v2869 = vadd.f32 %v2766, %v2868
        %v2870 = vpop.f32.mrb[0].mxu0
        %2871 = vmatprep.mubr.bf16.mxu0 0
        %2872 = vmatmul.mubr.bf16.gmra.mrb[0].mxu0 %v2734
        %v2873 = vpop.f32.mrb[0].mxu0
        %v2874 = vadd.f32 %v2766, %v2873
        %v2875 = vpop.f32.mrb[0].mxu0
        %v2876 = vpop.f32.mrb[0].mxu0
        %v2877 = vadd.f32 %v2766, %v2876
        %v2878 = vpop.f32.mrb[0].mxu0
        %2879 = vmatprep.mubr.bf16.mxu0 0
        %2880 = vmatmul.mubr.bf16.gmra.mrb[0].mxu0 %v2735
        %v2881 = vpop.f32.mrb[0].mxu0
        %v2882 = vadd.f32 %v2766, %v2881
        %v2883 = vpop.f32.mrb[0].mxu0
        %v2884 = vpop.f32.mrb[0].mxu0
        %v2885 = vadd.f32 %v2766, %v2884
        %v2886 = vpop.f32.mrb[0].mxu0
        %2887 = vmatprep.mubr.bf16.mxu0 0
        %2888 = vmatmul.mubr.bf16.gmra.mrb[0].mxu0 %v2736
        %v2889 = vpop.f32.mrb[0].mxu0
        %v2890 = vadd.f32 %v2766, %v2889
        %v2891 = vpop.f32.mrb[0].mxu0
        %v2892 = vpop.f32.mrb[0].mxu0
        %v2893 = vadd.f32 %v2766, %v2892
        %v2894 = vpop.f32.mrb[0].mxu0
        %2895 = vmatprep.mubr.bf16.mxu0 0
        %2896 = vmatmul.mubr.bf16.gmra.mrb[0].mxu0 %v2737
        %v2897 = vpop.f32.mrb[0].mxu0
        %v2898 = vadd.f32 %v2766, %v2897
        %v2899 = vpop.f32.mrb[0].mxu0
        %v2900 = vpop.f32.mrb[0].mxu0
        %v2901 = vadd.f32 %v2766, %v2900
        %v2902 = vpop.f32.mrb[0].mxu0
        %2903 = vmatprep.mubr.bf16.mxu0 0
        %2904 = vmatmul.mubr.bf16.gmra.mrb[0].mxu0 %v2738
        %v2905 = vpop.f32.mrb[0].mxu0
        %v2906 = vadd.f32 %v2766, %v2905
        %v2907 = vpop.f32.mrb[0].mxu0
        %v2908 = vpop.f32.mrb[0].mxu0
        %v2909 = vadd.f32 %v2766, %v2908
        %v2910 = vpop.f32.mrb[0].mxu0
        %2911 = vmatprep.mubr.bf16.mxu0 0
        %2912 = vmatmul.mubr.bf16.gmra.mrb[0].mxu0 %v2739
        %v2913 = vpop.f32.mrb[0].mxu0
        %v2914 = vadd.f32 %v2766, %v2913
        %v2915 = vpop.f32.mrb[0].mxu0
        %v2916 = vpop.f32.mrb[0].mxu0
        %v2917 = vadd.f32 %v2766, %v2916
        %v2918 = vpop.f32.mrb[0].mxu0
        %2919 = vmatprep.mubr.bf16.mxu0 0
        %2920 = vmatmul.mubr.bf16.gmra.mrb[0].mxu0 %v2740
        %v2921 = vpop.f32.mrb[0].mxu0
        %v2922 = vadd.f32 %v2766, %v2921
        %v2923 = vpop.f32.mrb[0].mxu0
        %v2924 = vpop.f32.mrb[0].mxu0
        %v2925 = vadd.f32 %v2766, %v2924
        %v2926 = vpop.f32.mrb[0].mxu0
        %2927 = vmatprep.mubr.bf16.mxu0 0
        %2928 = vmatmul.mubr.bf16.gmra.mrb[0].mxu0 %v2741
        %v2929 = vpop.f32.mrb[0].mxu0
        %v2930 = vadd.f32 %v2766, %v2929
        %v2931 = vpop.f32.mrb[0].mxu0
        %v2932 = vpop.f32.mrb[0].mxu0
        %v2933 = vadd.f32 %v2766, %v2932
        %v2934 = vpop.f32.mrb[0].mxu0
        %2935 = vmatprep.mubr.bf16.mxu0 0
        %2936 = vmatmul.mubr.bf16.gmra.mrb[0].mxu0 %v2742
        %v2937 = vpop.f32.mrb[0].mxu0
        %v2938 = vadd.f32 %v2766, %v2937
        %v2939 = vpop.f32.mrb[0].mxu0
        %v2940 = vpop.f32.mrb[0].mxu0
        %v2941 = vadd.f32 %v2766, %v2940
        %v2942 = vpop.f32.mrb[0].mxu0
        %2943 = vmatprep.mubr.bf16.mxu0 0
        %2944 = vmatmul.mubr.bf16.gmra.mrb[0].mxu0 %v2743
        %v2945 = vpop.f32.mrb[0].mxu0
        %v2946 = vadd.f32 %v2766, %v2945
        %v2947 = vpop.f32.mrb[0].mxu0
        %v2948 = vpop.f32.mrb[0].mxu0
        %v2949 = vadd.f32 %v2766, %v2948
        %v2950 = vpop.f32.mrb[0].mxu0
        %2951 = vmatprep.mubr.bf16.mxu0 0
        %2952 = vmatmul.mubr.bf16.gmra.mrb[0].mxu0 %v2744
        %v2953 = vpop.f32.mrb[0].mxu0
        %v2954 = vadd.f32 %v2766, %v2953
        %v2955 = vpop.f32.mrb[0].mxu0
        %v2956 = vpop.f32.mrb[0].mxu0
        %v2957 = vadd.f32 %v2766, %v2956
        %v2958 = vpop.f32.mrb[0].mxu0
        %2959 = vmatprep.mubr.bf16.mxu0 0
        %2960 = vmatmul.mubr.bf16.gmra.mrb[0].mxu0 %v2745
        %v2961 = vpop.f32.mrb[0].mxu0
        %v2962 = vadd.f32 %v2766, %v2961
        %v2963 = vpop.f32.mrb[0].mxu0
        %v2964 = vpop.f32.mrb[0].mxu0
        %v2965 = vadd.f32 %v2766, %v2964
        %v2966 = vpop.f32.mrb[0].mxu0
        %2967 = vmatprep.mubr.bf16.mxu0 0
        %2968 = vmatmul.mubr.bf16.gmra.mrb[0].mxu0 %v2746
        %v2969 = vpop.f32.mrb[0].mxu0
        %v2970 = vadd.f32 %v2766, %v2969
        %v2971 = vpop.f32.mrb[0].mxu0
        %v2972 = vpop.f32.mrb[0].mxu0
        %v2973 = vadd.f32 %v2766, %v2972
        %v2974 = vpop.f32.mrb[0].mxu0
        %2975 = vdwg.mxu0
        %v2976 = vmax.f32 %v2850, 0.0
        %v2977 = vmax.f32 %v2853, 0.0
        %v2978 = vmax.f32 %v2858, 0.0
        %v2979 = vmax.f32 %v2861, 0.0
        %v2980 = vmax.f32 %v2866, 0.0
        %v2981 = vmax.f32 %v2869, 0.0
        %v2982 = vmax.f32 %v2874, 0.0
        %v2983 = vmax.f32 %v2877, 0.0
        %v2984 = vmax.f32 %v2882, 0.0
        %v2985 = vmax.f32 %v2885, 0.0
        %v2986 = vmax.f32 %v2890, 0.0
        %v2987 = vmax.f32 %v2893, 0.0
        %v2988 = vmax.f32 %v2898, 0.0
        %v2989 = vmax.f32 %v2901, 0.0
        %v2990 = vmax.f32 %v2906, 0.0
        %v2991 = vmax.f32 %v2909, 0.0
        %v2992 = vmax.f32 %v2914, 0.0
        %v2993 = vmax.f32 %v2917, 0.0
        %v2994 = vmax.f32 %v2922, 0.0
        %v2995 = vmax.f32 %v2925, 0.0
        %v2996 = vmax.f32 %v2930, 0.0
        %v2997 = vmax.f32 %v2933, 0.0
        %v2998 = vmax.f32 %v2938, 0.0
        %v2999 = vmax.f32 %v2941, 0.0
        %v3000 = vmax.f32 %v2946, 0.0
        %v3001 = vmax.f32 %v2949, 0.0
        %v3002 = vmax.f32 %v2954, 0.0
        %v3003 = vmax.f32 %v2957, 0.0
        %v3004 = vmax.f32 %v2962, 0.0
        %v3005 = vmax.f32 %v2965, 0.0
        %v3006 = vmax.f32 %v2970, 0.0
        %v3007 = vmax.f32 %v2973, 0.0
        %v3008 = vrot.slane %v2976, 4
        %v3009 = vadd.f32 %v2976, %v3008
        %v3010 = vrot.slane %v3009, 2
        %v3011 = vadd.f32 %v3009, %v3010
        %v3012 = vrot.slane %v3011, 1
        %v3013 = vadd.f32 %v3011, %v3012
        %v3014 = vrot.slane %v2977, 4
        %v3015 = vadd.f32 %v2977, %v3014
        %v3016 = vrot.slane %v3015, 2
        %v3017 = vadd.f32 %v3015, %v3016
        %v3018 = vrot.slane %v3017, 1
        %v3019 = vadd.f32 %v3017, %v3018
        %v3020 = vrot.slane %v2978, 4
        %v3021 = vadd.f32 %v2978, %v3020
        %v3022 = vrot.slane %v3021, 2
        %v3023 = vadd.f32 %v3021, %v3022
        %v3024 = vrot.slane %v3023, 1
        %v3025 = vadd.f32 %v3023, %v3024
        %v3026 = vrot.slane %v2979, 4
        %v3027 = vadd.f32 %v2979, %v3026
        %v3028 = vrot.slane %v3027, 2
        %v3029 = vadd.f32 %v3027, %v3028
        %v3030 = vrot.slane %v3029, 1
        %v3031 = vadd.f32 %v3029, %v3030
        %v3032 = vrot.slane %v2980, 4
        %v3033 = vadd.f32 %v2980, %v3032
        %v3034 = vrot.slane %v3033, 2
        %v3035 = vadd.f32 %v3033, %v3034
        %v3036 = vrot.slane %v3035, 1
        %v3037 = vadd.f32 %v3035, %v3036
        %v3038 = vrot.slane %v2981, 4
        %v3039 = vadd.f32 %v2981, %v3038
        %v3040 = vrot.slane %v3039, 2
        %v3041 = vadd.f32 %v3039, %v3040
        %v3042 = vrot.slane %v3041, 1
        %v3043 = vadd.f32 %v3041, %v3042
        %v3044 = vrot.slane %v2982, 4
        %v3045 = vadd.f32 %v2982, %v3044
        %v3046 = vrot.slane %v3045, 2
        %v3047 = vadd.f32 %v3045, %v3046
        %v3048 = vrot.slane %v3047, 1
        %v3049 = vadd.f32 %v3047, %v3048
        %v3050 = vrot.slane %v2983, 4
        %v3051 = vadd.f32 %v2983, %v3050
        %v3052 = vrot.slane %v3051, 2
        %v3053 = vadd.f32 %v3051, %v3052
        %v3054 = vrot.slane %v3053, 1
        %v3055 = vadd.f32 %v3053, %v3054
        %v3056 = vrot.slane %v2984, 4
        %v3057 = vadd.f32 %v2984, %v3056
        %v3058 = vrot.slane %v3057, 2
        %v3059 = vadd.f32 %v3057, %v3058
        %v3060 = vrot.slane %v3059, 1
        %v3061 = vadd.f32 %v3059, %v3060
        %v3062 = vrot.slane %v2985, 4
        %v3063 = vadd.f32 %v2985, %v3062
        %v3064 = vrot.slane %v3063, 2
        %v3065 = vadd.f32 %v3063, %v3064
        %v3066 = vrot.slane %v3065, 1
        %v3067 = vadd.f32 %v3065, %v3066
        %v3068 = vrot.slane %v2986, 4
        %v3069 = vadd.f32 %v2986, %v3068
        %v3070 = vrot.slane %v3069, 2
        %v3071 = vadd.f32 %v3069, %v3070
        %v3072 = vrot.slane %v3071, 1
        %v3073 = vadd.f32 %v3071, %v3072
        %v3074 = vrot.slane %v2987, 4
        %v3075 = vadd.f32 %v2987, %v3074
        %v3076 = vrot.slane %v3075, 2
        %v3077 = vadd.f32 %v3075, %v3076
        %v3078 = vrot.slane %v3077, 1
        %v3079 = vadd.f32 %v3077, %v3078
        %v3080 = vrot.slane %v2988, 4
        %v3081 = vadd.f32 %v2988, %v3080
        %v3082 = vrot.slane %v3081, 2
        %v3083 = vadd.f32 %v3081, %v3082
        %v3084 = vrot.slane %v3083, 1
        %v3085 = vadd.f32 %v3083, %v3084
        %v3086 = vrot.slane %v2989, 4
        %v3087 = vadd.f32 %v2989, %v3086
        %v3088 = vrot.slane %v3087, 2
        %v3089 = vadd.f32 %v3087, %v3088
        %v3090 = vrot.slane %v3089, 1
        %v3091 = vadd.f32 %v3089, %v3090
        %v3092 = vrot.slane %v2990, 4
        %v3093 = vadd.f32 %v2990, %v3092
        %v3094 = vrot.slane %v3093, 2
        %v3095 = vadd.f32 %v3093, %v3094
        %v3096 = vrot.slane %v3095, 1
        %v3097 = vadd.f32 %v3095, %v3096
        %v3098 = vrot.slane %v2991, 4
        %v3099 = vadd.f32 %v2991, %v3098
        %v3100 = vrot.slane %v3099, 2
        %v3101 = vadd.f32 %v3099, %v3100
        %v3102 = vrot.slane %v3101, 1
        %v3103 = vadd.f32 %v3101, %v3102
        %v3104 = vrot.slane %v2992, 4
        %v3105 = vadd.f32 %v2992, %v3104
        %v3106 = vrot.slane %v3105, 2
        %v3107 = vadd.f32 %v3105, %v3106
        %v3108 = vrot.slane %v3107, 1
        %v3109 = vadd.f32 %v3107, %v3108
        %v3110 = vrot.slane %v2993, 4
        %v3111 = vadd.f32 %v2993, %v3110
        %v3112 = vrot.slane %v3111, 2
        %v3113 = vadd.f32 %v3111, %v3112
        %v3114 = vrot.slane %v3113, 1
        %v3115 = vadd.f32 %v3113, %v3114
        %v3116 = vrot.slane %v2994, 4
        %v3117 = vadd.f32 %v2994, %v3116
        %v3118 = vrot.slane %v3117, 2
        %v3119 = vadd.f32 %v3117, %v3118
        %v3120 = vrot.slane %v3119, 1
        %v3121 = vadd.f32 %v3119, %v3120
        %v3122 = vrot.slane %v2995, 4
        %v3123 = vadd.f32 %v2995, %v3122
        %v3124 = vrot.slane %v3123, 2
        %v3125 = vadd.f32 %v3123, %v3124
        %v3126 = vrot.slane %v3125, 1
        %v3127 = vadd.f32 %v3125, %v3126
        %v3128 = vrot.slane %v2996, 4
        %v3129 = vadd.f32 %v2996, %v3128
        %v3130 = vrot.slane %v3129, 2
        %v3131 = vadd.f32 %v3129, %v3130
        %v3132 = vrot.slane %v3131, 1
        %v3133 = vadd.f32 %v3131, %v3132
        %v3134 = vrot.slane %v2997, 4
        %v3135 = vadd.f32 %v2997, %v3134
        %v3136 = vrot.slane %v3135, 2
        %v3137 = vadd.f32 %v3135, %v3136
        %v3138 = vrot.slane %v3137, 1
        %v3139 = vadd.f32 %v3137, %v3138
        %v3140 = vrot.slane %v2998, 4
        %v3141 = vadd.f32 %v2998, %v3140
        %v3142 = vrot.slane %v3141, 2
        %v3143 = vadd.f32 %v3141, %v3142
        %v3144 = vrot.slane %v3143, 1
        %v3145 = vadd.f32 %v3143, %v3144
        %v3146 = vrot.slane %v2999, 4
        %v3147 = vadd.f32 %v2999, %v3146
        %v3148 = vrot.slane %v3147, 2
        %v3149 = vadd.f32 %v3147, %v3148
        %v3150 = vrot.slane %v3149, 1
        %v3151 = vadd.f32 %v3149, %v3150
        %v3152 = vrot.slane %v3000, 4
        %v3153 = vadd.f32 %v3000, %v3152
        %v3154 = vrot.slane %v3153, 2
        %v3155 = vadd.f32 %v3153, %v3154
        %v3156 = vrot.slane %v3155, 1
        %v3157 = vadd.f32 %v3155, %v3156
        %v3158 = vrot.slane %v3001, 4
        %v3159 = vadd.f32 %v3001, %v3158
        %v3160 = vrot.slane %v3159, 2
        %v3161 = vadd.f32 %v3159, %v3160
        %v3162 = vrot.slane %v3161, 1
        %v3163 = vadd.f32 %v3161, %v3162
        %v3164 = vrot.slane %v3002, 4
        %v3165 = vadd.f32 %v3002, %v3164
        %v3166 = vrot.slane %v3165, 2
        %v3167 = vadd.f32 %v3165, %v3166
        %v3168 = vrot.slane %v3167, 1
        %v3169 = vadd.f32 %v3167, %v3168
        %v3170 = vrot.slane %v3003, 4
        %v3171 = vadd.f32 %v3003, %v3170
        %v3172 = vrot.slane %v3171, 2
        %v3173 = vadd.f32 %v3171, %v3172
        %v3174 = vrot.slane %v3173, 1
        %v3175 = vadd.f32 %v3173, %v3174
        %v3176 = vrot.slane %v3004, 4
        %v3177 = vadd.f32 %v3004, %v3176
        %v3178 = vrot.slane %v3177, 2
        %v3179 = vadd.f32 %v3177, %v3178
        %v3180 = vrot.slane %v3179, 1
        %v3181 = vadd.f32 %v3179, %v3180
        %v3182 = vrot.slane %v3005, 4
        %v3183 = vadd.f32 %v3005, %v3182
        %v3184 = vrot.slane %v3183, 2
        %v3185 = vadd.f32 %v3183, %v3184
        %v3186 = vrot.slane %v3185, 1
        %v3187 = vadd.f32 %v3185, %v3186
        %v3188 = vrot.slane %v3006, 4
        %v3189 = vadd.f32 %v3006, %v3188
        %v3190 = vrot.slane %v3189, 2
        %v3191 = vadd.f32 %v3189, %v3190
        %v3192 = vrot.slane %v3191, 1
        %v3193 = vadd.f32 %v3191, %v3192
        %v3194 = vrot.slane %v3007, 4
        %v3195 = vadd.f32 %v3007, %v3194
        %v3196 = vrot.slane %v3195, 2
        %v3197 = vadd.f32 %v3195, %v3196
        %v3198 = vrot.slane %v3197, 1
        %v3199 = vadd.f32 %v3197, %v3198
        %v3200 = vmul.f32 %v3013, %v512
        %v3201 = vmul.f32 %v3019, %v512
        %v3202 = vmul.f32 %v3025, %v512
        %v3203 = vmul.f32 %v3031, %v512
        %v3204 = vmul.f32 %v3037, %v512
        %v3205 = vmul.f32 %v3043, %v512
        %v3206 = vmul.f32 %v3049, %v512
        %v3207 = vmul.f32 %v3055, %v512
        %v3208 = vmul.f32 %v3061, %v512
        %v3209 = vmul.f32 %v3067, %v512
        %v3210 = vmul.f32 %v3073, %v512
        %v3211 = vmul.f32 %v3079, %v512
        %v3212 = vmul.f32 %v3085, %v512
        %v3213 = vmul.f32 %v3091, %v512
        %v3214 = vmul.f32 %v3097, %v512
        %v3215 = vmul.f32 %v3103, %v512
        %v3216 = vmul.f32 %v3109, %v512
        %v3217 = vmul.f32 %v3115, %v512
        %v3218 = vmul.f32 %v3121, %v512
        %v3219 = vmul.f32 %v3127, %v512
        %v3220 = vmul.f32 %v3133, %v512
        %v3221 = vmul.f32 %v3139, %v512
        %v3222 = vmul.f32 %v3145, %v512
        %v3223 = vmul.f32 %v3151, %v512
        %v3224 = vmul.f32 %v3157, %v512
        %v3225 = vmul.f32 %v3163, %v512
        %v3226 = vmul.f32 %v3169, %v512
        %v3227 = vmul.f32 %v3175, %v512
        %v3228 = vmul.f32 %v3181, %v512
        %v3229 = vmul.f32 %v3187, %v512
        %v3230 = vmul.f32 %v3193, %v512
        %v3231 = vmul.f32 %v3199, %v512
        %v3232 = vsub.f32 %v2976, %v3200
        %v3233 = vsub.f32 %v2977, %v3201
        %v3234 = vsub.f32 %v2978, %v3202
        %v3235 = vsub.f32 %v2979, %v3203
        %v3236 = vsub.f32 %v2980, %v3204
        %v3237 = vsub.f32 %v2981, %v3205
        %v3238 = vsub.f32 %v2982, %v3206
        %v3239 = vsub.f32 %v2983, %v3207
        %v3240 = vsub.f32 %v2984, %v3208
        %v3241 = vsub.f32 %v2985, %v3209
        %v3242 = vsub.f32 %v2986, %v3210
        %v3243 = vsub.f32 %v2987, %v3211
        %v3244 = vsub.f32 %v2988, %v3212
        %v3245 = vsub.f32 %v2989, %v3213
        %v3246 = vsub.f32 %v2990, %v3214
        %v3247 = vsub.f32 %v2991, %v3215
        %v3248 = vsub.f32 %v2992, %v3216
        %v3249 = vsub.f32 %v2993, %v3217
        %v3250 = vsub.f32 %v2994, %v3218
        %v3251 = vsub.f32 %v2995, %v3219
        %v3252 = vsub.f32 %v2996, %v3220
        %v3253 = vsub.f32 %v2997, %v3221
        %v3254 = vsub.f32 %v2998, %v3222
        %v3255 = vsub.f32 %v2999, %v3223
        %v3256 = vsub.f32 %v3000, %v3224
        %v3257 = vsub.f32 %v3001, %v3225
        %v3258 = vsub.f32 %v3002, %v3226
        %v3259 = vsub.f32 %v3003, %v3227
        %v3260 = vsub.f32 %v3004, %v3228
        %v3261 = vsub.f32 %v3005, %v3229
        %v3262 = vsub.f32 %v3006, %v3230
        %v3263 = vsub.f32 %v3007, %v3231
        %v3264 = vmul.f32 %v3232, %v3232
        %v3265 = vmul.f32 %v3233, %v3233
        %v3266 = vmul.f32 %v3234, %v3234
        %v3267 = vmul.f32 %v3235, %v3235
        %v3268 = vmul.f32 %v3236, %v3236
        %v3269 = vmul.f32 %v3237, %v3237
        %v3270 = vmul.f32 %v3238, %v3238
        %v3271 = vmul.f32 %v3239, %v3239
        %v3272 = vmul.f32 %v3240, %v3240
        %v3273 = vmul.f32 %v3241, %v3241
        %v3274 = vmul.f32 %v3242, %v3242
        %v3275 = vmul.f32 %v3243, %v3243
        %v3276 = vmul.f32 %v3244, %v3244
        %v3277 = vmul.f32 %v3245, %v3245
        %v3278 = vmul.f32 %v3246, %v3246
        %v3279 = vmul.f32 %v3247, %v3247
        %v3280 = vmul.f32 %v3248, %v3248
        %v3281 = vmul.f32 %v3249, %v3249
        %v3282 = vmul.f32 %v3250, %v3250
        %v3283 = vmul.f32 %v3251, %v3251
        %v3284 = vmul.f32 %v3252, %v3252
        %v3285 = vmul.f32 %v3253, %v3253
        %v3286 = vmul.f32 %v3254, %v3254
        %v3287 = vmul.f32 %v3255, %v3255
        %v3288 = vmul.f32 %v3256, %v3256
        %v3289 = vmul.f32 %v3257, %v3257
        %v3290 = vmul.f32 %v3258, %v3258
        %v3291 = vmul.f32 %v3259, %v3259
        %v3292 = vmul.f32 %v3260, %v3260
        %v3293 = vmul.f32 %v3261, %v3261
        %v3294 = vmul.f32 %v3262, %v3262
        %v3295 = vmul.f32 %v3263, %v3263
        %v3296 = vrot.slane %v3264, 4
        %v3297 = vadd.f32 %v3264, %v3296
        %v3298 = vrot.slane %v3297, 2
        %v3299 = vadd.f32 %v3297, %v3298
        %v3300 = vrot.slane %v3299, 1
        %v3301 = vadd.f32 %v3299, %v3300
        %v3302 = vrot.slane %v3265, 4
        %v3303 = vadd.f32 %v3265, %v3302
        %v3304 = vrot.slane %v3303, 2
        %v3305 = vadd.f32 %v3303, %v3304
        %v3306 = vrot.slane %v3305, 1
        %v3307 = vadd.f32 %v3305, %v3306
        %v3308 = vrot.slane %v3266, 4
        %v3309 = vadd.f32 %v3266, %v3308
        %v3310 = vrot.slane %v3309, 2
        %v3311 = vadd.f32 %v3309, %v3310
        %v3312 = vrot.slane %v3311, 1
        %v3313 = vadd.f32 %v3311, %v3312
        %v3314 = vrot.slane %v3267, 4
        %v3315 = vadd.f32 %v3267, %v3314
        %v3316 = vrot.slane %v3315, 2
        %v3317 = vadd.f32 %v3315, %v3316
        %v3318 = vrot.slane %v3317, 1
        %v3319 = vadd.f32 %v3317, %v3318
        %v3320 = vrot.slane %v3268, 4
        %v3321 = vadd.f32 %v3268, %v3320
        %v3322 = vrot.slane %v3321, 2
        %v3323 = vadd.f32 %v3321, %v3322
        %v3324 = vrot.slane %v3323, 1
        %v3325 = vadd.f32 %v3323, %v3324
        %v3326 = vrot.slane %v3269, 4
        %v3327 = vadd.f32 %v3269, %v3326
        %v3328 = vrot.slane %v3327, 2
        %v3329 = vadd.f32 %v3327, %v3328
        %v3330 = vrot.slane %v3329, 1
        %v3331 = vadd.f32 %v3329, %v3330
        %v3332 = vrot.slane %v3270, 4
        %v3333 = vadd.f32 %v3270, %v3332
        %v3334 = vrot.slane %v3333, 2
        %v3335 = vadd.f32 %v3333, %v3334
        %v3336 = vrot.slane %v3335, 1
        %v3337 = vadd.f32 %v3335, %v3336
        %v3338 = vrot.slane %v3271, 4
        %v3339 = vadd.f32 %v3271, %v3338
        %v3340 = vrot.slane %v3339, 2
        %v3341 = vadd.f32 %v3339, %v3340
        %v3342 = vrot.slane %v3341, 1
        %v3343 = vadd.f32 %v3341, %v3342
        %v3344 = vrot.slane %v3272, 4
        %v3345 = vadd.f32 %v3272, %v3344
        %v3346 = vrot.slane %v3345, 2
        %v3347 = vadd.f32 %v3345, %v3346
        %v3348 = vrot.slane %v3347, 1
        %v3349 = vadd.f32 %v3347, %v3348
        %v3350 = vrot.slane %v3273, 4
        %v3351 = vadd.f32 %v3273, %v3350
        %v3352 = vrot.slane %v3351, 2
        %v3353 = vadd.f32 %v3351, %v3352
        %v3354 = vrot.slane %v3353, 1
        %v3355 = vadd.f32 %v3353, %v3354
        %v3356 = vrot.slane %v3274, 4
        %v3357 = vadd.f32 %v3274, %v3356
        %v3358 = vrot.slane %v3357, 2
        %v3359 = vadd.f32 %v3357, %v3358
        %v3360 = vrot.slane %v3359, 1
        %v3361 = vadd.f32 %v3359, %v3360
        %v3362 = vrot.slane %v3275, 4
        %v3363 = vadd.f32 %v3275, %v3362
        %v3364 = vrot.slane %v3363, 2
        %v3365 = vadd.f32 %v3363, %v3364
        %v3366 = vrot.slane %v3365, 1
        %v3367 = vadd.f32 %v3365, %v3366
        %v3368 = vrot.slane %v3276, 4
        %v3369 = vadd.f32 %v3276, %v3368
        %v3370 = vrot.slane %v3369, 2
        %v3371 = vadd.f32 %v3369, %v3370
        %v3372 = vrot.slane %v3371, 1
        %v3373 = vadd.f32 %v3371, %v3372
        %v3374 = vrot.slane %v3277, 4
        %v3375 = vadd.f32 %v3277, %v3374
        %v3376 = vrot.slane %v3375, 2
        %v3377 = vadd.f32 %v3375, %v3376
        %v3378 = vrot.slane %v3377, 1
        %v3379 = vadd.f32 %v3377, %v3378
        %v3380 = vrot.slane %v3278, 4
        %v3381 = vadd.f32 %v3278, %v3380
        %v3382 = vrot.slane %v3381, 2
        %v3383 = vadd.f32 %v3381, %v3382
        %v3384 = vrot.slane %v3383, 1
        %v3385 = vadd.f32 %v3383, %v3384
        %v3386 = vrot.slane %v3279, 4
        %v3387 = vadd.f32 %v3279, %v3386
        %v3388 = vrot.slane %v3387, 2
        %v3389 = vadd.f32 %v3387, %v3388
        %v3390 = vrot.slane %v3389, 1
        %v3391 = vadd.f32 %v3389, %v3390
        %v3392 = vrot.slane %v3280, 4
        %v3393 = vadd.f32 %v3280, %v3392
        %v3394 = vrot.slane %v3393, 2
        %v3395 = vadd.f32 %v3393, %v3394
        %v3396 = vrot.slane %v3395, 1
        %v3397 = vadd.f32 %v3395, %v3396
        %v3398 = vrot.slane %v3281, 4
        %v3399 = vadd.f32 %v3281, %v3398
        %v3400 = vrot.slane %v3399, 2
        %v3401 = vadd.f32 %v3399, %v3400
        %v3402 = vrot.slane %v3401, 1
        %v3403 = vadd.f32 %v3401, %v3402
        %v3404 = vrot.slane %v3282, 4
        %v3405 = vadd.f32 %v3282, %v3404
        %v3406 = vrot.slane %v3405, 2
        %v3407 = vadd.f32 %v3405, %v3406
        %v3408 = vrot.slane %v3407, 1
        %v3409 = vadd.f32 %v3407, %v3408
        %v3410 = vrot.slane %v3283, 4
        %v3411 = vadd.f32 %v3283, %v3410
        %v3412 = vrot.slane %v3411, 2
        %v3413 = vadd.f32 %v3411, %v3412
        %v3414 = vrot.slane %v3413, 1
        %v3415 = vadd.f32 %v3413, %v3414
        %v3416 = vrot.slane %v3284, 4
        %v3417 = vadd.f32 %v3284, %v3416
        %v3418 = vrot.slane %v3417, 2
        %v3419 = vadd.f32 %v3417, %v3418
        %v3420 = vrot.slane %v3419, 1
        %v3421 = vadd.f32 %v3419, %v3420
        %v3422 = vrot.slane %v3285, 4
        %v3423 = vadd.f32 %v3285, %v3422
        %v3424 = vrot.slane %v3423, 2
        %v3425 = vadd.f32 %v3423, %v3424
        %v3426 = vrot.slane %v3425, 1
        %v3427 = vadd.f32 %v3425, %v3426
        %v3428 = vrot.slane %v3286, 4
        %v3429 = vadd.f32 %v3286, %v3428
        %v3430 = vrot.slane %v3429, 2
        %v3431 = vadd.f32 %v3429, %v3430
        %v3432 = vrot.slane %v3431, 1
        %v3433 = vadd.f32 %v3431, %v3432
        %v3434 = vrot.slane %v3287, 4
        %v3435 = vadd.f32 %v3287, %v3434
        %v3436 = vrot.slane %v3435, 2
        %v3437 = vadd.f32 %v3435, %v3436
        %v3438 = vrot.slane %v3437, 1
        %v3439 = vadd.f32 %v3437, %v3438
        %v3440 = vrot.slane %v3288, 4
        %v3441 = vadd.f32 %v3288, %v3440
        %v3442 = vrot.slane %v3441, 2
        %v3443 = vadd.f32 %v3441, %v3442
        %v3444 = vrot.slane %v3443, 1
        %v3445 = vadd.f32 %v3443, %v3444
        %v3446 = vrot.slane %v3289, 4
        %v3447 = vadd.f32 %v3289, %v3446
        %v3448 = vrot.slane %v3447, 2
        %v3449 = vadd.f32 %v3447, %v3448
        %v3450 = vrot.slane %v3449, 1
        %v3451 = vadd.f32 %v3449, %v3450
        %v3452 = vrot.slane %v3290, 4
        %v3453 = vadd.f32 %v3290, %v3452
        %v3454 = vrot.slane %v3453, 2
        %v3455 = vadd.f32 %v3453, %v3454
        %v3456 = vrot.slane %v3455, 1
        %v3457 = vadd.f32 %v3455, %v3456
        %v3458 = vrot.slane %v3291, 4
        %v3459 = vadd.f32 %v3291, %v3458
        %v3460 = vrot.slane %v3459, 2
        %v3461 = vadd.f32 %v3459, %v3460
        %v3462 = vrot.slane %v3461, 1
        %v3463 = vadd.f32 %v3461, %v3462
        %v3464 = vrot.slane %v3292, 4
        %v3465 = vadd.f32 %v3292, %v3464
        %v3466 = vrot.slane %v3465, 2
        %v3467 = vadd.f32 %v3465, %v3466
        %v3468 = vrot.slane %v3467, 1
        %v3469 = vadd.f32 %v3467, %v3468
        %v3470 = vrot.slane %v3293, 4
        %v3471 = vadd.f32 %v3293, %v3470
        %v3472 = vrot.slane %v3471, 2
        %v3473 = vadd.f32 %v3471, %v3472
        %v3474 = vrot.slane %v3473, 1
        %v3475 = vadd.f32 %v3473, %v3474
        %v3476 = vrot.slane %v3294, 4
        %v3477 = vadd.f32 %v3294, %v3476
        %v3478 = vrot.slane %v3477, 2
        %v3479 = vadd.f32 %v3477, %v3478
        %v3480 = vrot.slane %v3479, 1
        %v3481 = vadd.f32 %v3479, %v3480
        %v3482 = vrot.slane %v3295, 4
        %v3483 = vadd.f32 %v3295, %v3482
        %v3484 = vrot.slane %v3483, 2
        %v3485 = vadd.f32 %v3483, %v3484
        %v3486 = vrot.slane %v3485, 1
        %v3487 = vadd.f32 %v3485, %v3486
        %v3488 = vmul.f32 %v3301, %v512
        %v3489 = vmul.f32 %v3307, %v512
        %v3490 = vmul.f32 %v3313, %v512
        %v3491 = vmul.f32 %v3319, %v512
        %v3492 = vmul.f32 %v3325, %v512
        %v3493 = vmul.f32 %v3331, %v512
        %v3494 = vmul.f32 %v3337, %v512
        %v3495 = vmul.f32 %v3343, %v512
        %v3496 = vmul.f32 %v3349, %v512
        %v3497 = vmul.f32 %v3355, %v512
        %v3498 = vmul.f32 %v3361, %v512
        %v3499 = vmul.f32 %v3367, %v512
        %v3500 = vmul.f32 %v3373, %v512
        %v3501 = vmul.f32 %v3379, %v512
        %v3502 = vmul.f32 %v3385, %v512
        %v3503 = vmul.f32 %v3391, %v512
        %v3504 = vmul.f32 %v3397, %v512
        %v3505 = vmul.f32 %v3403, %v512
        %v3506 = vmul.f32 %v3409, %v512
        %v3507 = vmul.f32 %v3415, %v512
        %v3508 = vmul.f32 %v3421, %v512
        %v3509 = vmul.f32 %v3427, %v512
        %v3510 = vmul.f32 %v3433, %v512
        %v3511 = vmul.f32 %v3439, %v512
        %v3512 = vmul.f32 %v3445, %v512
        %v3513 = vmul.f32 %v3451, %v512
        %v3514 = vmul.f32 %v3457, %v512
        %v3515 = vmul.f32 %v3463, %v512
        %v3516 = vmul.f32 %v3469, %v512
        %v3517 = vmul.f32 %v3475, %v512
        %v3518 = vmul.f32 %v3481, %v512
        %v3519 = vmul.f32 %v3487, %v512
        %v3520 = vadd.f32 %v3488, 1e-05
        %v3521 = vadd.f32 %v3489, 1e-05
        %v3522 = vadd.f32 %v3490, 1e-05
        %v3523 = vadd.f32 %v3491, 1e-05
        %v3524 = vadd.f32 %v3492, 1e-05
        %v3525 = vadd.f32 %v3493, 1e-05
        %v3526 = vadd.f32 %v3494, 1e-05
        %v3527 = vadd.f32 %v3495, 1e-05
        %v3528 = vadd.f32 %v3496, 1e-05
        %v3529 = vadd.f32 %v3497, 1e-05
        %v3530 = vadd.f32 %v3498, 1e-05
        %v3531 = vadd.f32 %v3499, 1e-05
        %v3532 = vadd.f32 %v3500, 1e-05
        %v3533 = vadd.f32 %v3501, 1e-05
        %v3534 = vadd.f32 %v3502, 1e-05
        %v3535 = vadd.f32 %v3503, 1e-05
        %v3536 = vadd.f32 %v3504, 1e-05
        %v3537 = vadd.f32 %v3505, 1e-05
        %v3538 = vadd.f32 %v3506, 1e-05
        %v3539 = vadd.f32 %v3507, 1e-05
        %v3540 = vadd.f32 %v3508, 1e-05
        %v3541 = vadd.f32 %v3509, 1e-05
        %v3542 = vadd.f32 %v3510, 1e-05
        %v3543 = vadd.f32 %v3511, 1e-05
        %v3544 = vadd.f32 %v3512, 1e-05
        %v3545 = vadd.f32 %v3513, 1e-05
        %v3546 = vadd.f32 %v3514, 1e-05
        %v3547 = vadd.f32 %v3515, 1e-05
        %v3548 = vadd.f32 %v3516, 1e-05
        %v3549 = vadd.f32 %v3517, 1e-05
        %v3550 = vadd.f32 %v3518, 1e-05
        %v3551 = vadd.f32 %v3519, 1e-05
        %v3552 = vrsqrt.pop %v3520
        %v3553 = vrsqrt.pop %v3521
        %v3554 = vrsqrt.pop %v3522
        %v3555 = vrsqrt.pop %v3523
        %v3556 = vrsqrt.pop %v3524
        %v3557 = vrsqrt.pop %v3525
        %v3558 = vrsqrt.pop %v3526
        %v3559 = vrsqrt.pop %v3527
        %v3560 = vrsqrt.pop %v3528
        %v3561 = vrsqrt.pop %v3529
        %v3562 = vrsqrt.pop %v3530
        %v3563 = vrsqrt.pop %v3531
        %v3564 = vrsqrt.pop %v3532
        %v3565 = vrsqrt.pop %v3533
        %v3566 = vrsqrt.pop %v3534
        %v3567 = vrsqrt.pop %v3535
        %v3568 = vrsqrt.pop %v3536
        %v3569 = vrsqrt.pop %v3537
        %v3570 = vrsqrt.pop %v3538
        %v3571 = vrsqrt.pop %v3539
        %v3572 = vrsqrt.pop %v3540
        %v3573 = vrsqrt.pop %v3541
        %v3574 = vrsqrt.pop %v3542
        %v3575 = vrsqrt.pop %v3543
        %v3576 = vrsqrt.pop %v3544
        %v3577 = vrsqrt.pop %v3545
        %v3578 = vrsqrt.pop %v3546
        %v3579 = vrsqrt.pop %v3547
        %v3580 = vrsqrt.pop %v3548
        %v3581 = vrsqrt.pop %v3549
        %v3582 = vrsqrt.pop %v3550
        %v3583 = vrsqrt.pop %v3551
        %v3584 = vmul.f32 %v3232, %v3552
        %v3585 = vmul.f32 %v3233, %v3553
        %v3586 = vmul.f32 %v3234, %v3554
        %v3587 = vmul.f32 %v3235, %v3555
        %v3588 = vmul.f32 %v3236, %v3556
        %v3589 = vmul.f32 %v3237, %v3557
        %v3590 = vmul.f32 %v3238, %v3558
        %v3591 = vmul.f32 %v3239, %v3559
        %v3592 = vmul.f32 %v3240, %v3560
        %v3593 = vmul.f32 %v3241, %v3561
        %v3594 = vmul.f32 %v3242, %v3562
        %v3595 = vmul.f32 %v3243, %v3563
        %v3596 = vmul.f32 %v3244, %v3564
        %v3597 = vmul.f32 %v3245, %v3565
        %v3598 = vmul.f32 %v3246, %v3566
        %v3599 = vmul.f32 %v3247, %v3567
        %v3600 = vmul.f32 %v3248, %v3568
        %v3601 = vmul.f32 %v3249, %v3569
        %v3602 = vmul.f32 %v3250, %v3570
        %v3603 = vmul.f32 %v3251, %v3571
        %v3604 = vmul.f32 %v3252, %v3572
        %v3605 = vmul.f32 %v3253, %v3573
        %v3606 = vmul.f32 %v3254, %v3574
        %v3607 = vmul.f32 %v3255, %v3575
        %v3608 = vmul.f32 %v3256, %v3576
        %v3609 = vmul.f32 %v3257, %v3577
        %v3610 = vmul.f32 %v3258, %v3578
        %v3611 = vmul.f32 %v3259, %v3579
        %v3612 = vmul.f32 %v3260, %v3580
        %v3613 = vmul.f32 %v3261, %v3581
        %v3614 = vmul.f32 %v3262, %v3582
        %v3615 = vmul.f32 %v3263, %v3583
        %v3616 = vpack.c.bf16 %v3585, %v3584
        %v3617 = vpack.c.bf16 %v3587, %v3586
        %v3618 = vpack.c.bf16 %v3589, %v3588
        %v3619 = vpack.c.bf16 %v3591, %v3590
        %v3620 = vpack.c.bf16 %v3593, %v3592
        %v3621 = vpack.c.bf16 %v3595, %v3594
        %v3622 = vpack.c.bf16 %v3597, %v3596
        %v3623 = vpack.c.bf16 %v3599, %v3598
        %v3624 = vpack.c.bf16 %v3601, %v3600
        %v3625 = vpack.c.bf16 %v3603, %v3602
        %v3626 = vpack.c.bf16 %v3605, %v3604
        %v3627 = vpack.c.bf16 %v3607, %v3606
        %v3628 = vpack.c.bf16 %v3609, %v3608
        %v3629 = vpack.c.bf16 %v3611, %v3610
        %v3630 = vpack.c.bf16 %v3613, %v3612
        %v3631 = vpack.c.bf16 %v3615, %v3614
        %v3632 = vld [vmem:[%s4] sm:$0xf]
        %v3633 = vld [vmem:[%s4 + $0x4] sm:$0xf]
        %v3634 = vld [vmem:[%s4 + $0x8] sm:$0xf]
        %v3635 = vld [vmem:[%s4 + $0xc] sm:$0xf]
        %v3636 = vld [vmem:[%s4 + $0x10] sm:$0xf]
        %v3637 = vld [vmem:[%s4 + $0x14] sm:$0xf]
        %v3638 = vld [vmem:[%s4 + $0x18] sm:$0xf]
        %v3639 = vld [vmem:[%s4 + $0x1c] sm:$0xf]
        %v3640 = vld [vmem:[%s4 + $0x20] sm:$0xf]
        %v3641 = vld [vmem:[%s4 + $0x24] sm:$0xf]
        %v3642 = vld [vmem:[%s4 + $0x28] sm:$0xf]
        %v3643 = vld [vmem:[%s4 + $0x2c] sm:$0xf]
        %v3644 = vld [vmem:[%s4 + $0x30] sm:$0xf]
        %v3645 = vld [vmem:[%s4 + $0x34] sm:$0xf]
        %v3646 = vld [vmem:[%s4 + $0x38] sm:$0xf]
        %v3647 = vld [vmem:[%s4 + $0x3c] sm:$0xf]
        %v3648 = vlaneseq
        %v3649 = vshrl.u32 %v3648, 7
        %v3650 = vsub.s32 3, %v3649
        %v3651 = vrot.slane %v254, %v3650
        %v3668 = vunpack.c.l.b16 %v3632
        %v3669 = vunpack.c.l.b16 %v3633
        %v3670 = vunpack.c.l.b16 %v3634
        %v3671 = vunpack.c.l.b16 %v3635
        %v3672 = vunpack.c.l.b16 %v3636
        %v3673 = vunpack.c.l.b16 %v3637
        %v3674 = vunpack.c.l.b16 %v3638
        %v3675 = vunpack.c.l.b16 %v3639
        %v3676 = vunpack.c.l.b16 %v3640
        %v3677 = vunpack.c.l.b16 %v3641
        %v3678 = vunpack.c.l.b16 %v3642
        %v3679 = vunpack.c.l.b16 %v3643
        %v3680 = vunpack.c.l.b16 %v3644
        %v3681 = vunpack.c.l.b16 %v3645
        %v3682 = vunpack.c.l.b16 %v3646
        %v3683 = vunpack.c.l.b16 %v3647
        %v3684 = vpack.c.b16 %v3669, %v3668
        %v3685 = vpack.c.b16 %v3671, %v3670
        %v3686 = vpack.c.b16 %v3673, %v3672
        %v3687 = vpack.c.b16 %v3675, %v3674
        %v3688 = vpack.c.b16 %v3677, %v3676
        %v3689 = vpack.c.b16 %v3679, %v3678
        %v3690 = vpack.c.b16 %v3681, %v3680
        %v3691 = vpack.c.b16 %v3683, %v3682
        %3700 = vmatprep.subr.bf16.mxu0 0
        %3701 = vmatpush1.bf16.msra.mxu0 %v3684
        %3702 = vmatprep.subr.bf16.mxu0 0
        %3703 = vmatpush1.bf16.msra.mxu0 %v3685
        %3704 = vmatprep.subr.bf16.mxu0 0
        %3705 = vmatpush1.bf16.msra.mxu0 %v3686
        %3706 = vmatprep.subr.bf16.mxu0 0
        %3707 = vmatpush1.bf16.msra.mxu0 %v3687
        %3708 = vmatprep.subr.bf16.mxu0 0
        %3709 = vmatpush1.bf16.msra.mxu0 %v3688
        %3710 = vmatprep.subr.bf16.mxu0 0
        %3711 = vmatpush1.bf16.msra.mxu0 %v3689
        %3712 = vmatprep.subr.bf16.mxu0 0
        %3713 = vmatpush1.bf16.msra.mxu0 %v3690
        %3714 = vmatprep.subr.bf16.mxu0 0
        %3715 = vmatpush1.bf16.msra.mxu0 %v3691
        %3716 = vmatprep.subr.bf16.mxu0 0
        %3717 = vmatpush1.bf16.msra.mxu0 0
        %3718 = vmatprep.subr.bf16.mxu0 0
        %3719 = vmatpush1.bf16.msra.mxu0 0
        %3720 = vmatprep.subr.bf16.mxu0 0
        %3721 = vmatpush1.bf16.msra.mxu0 0
        %3722 = vmatprep.subr.bf16.mxu0 0
        %3723 = vmatpush1.bf16.msra.mxu0 0
        %3724 = vmatprep.subr.bf16.mxu0 0
        %3725 = vmatpush1.bf16.msra.mxu0 0
        %3726 = vmatprep.subr.bf16.mxu0 0
        %3727 = vmatpush1.bf16.msra.mxu0 0
        %3728 = vmatprep.subr.bf16.mxu0 0
        %3729 = vmatpush1.bf16.msra.mxu0 0
        %3730 = vmatprep.subr.bf16.mxu0 0
        %3731 = vmatpush1.bf16.msra.mxu0 0
        %3732 = vmatprep.mubr.bf16.mxu0 0
        %3733 = vmatmul.mubr.bf16.gmra.mrb[0].mxu0 %v3616
        %v3734 = vpop.f32.mrb[0].mxu0
        %v3735 = vadd.f32 %v3651, %v3734
        %v3736 = vpop.f32.mrb[0].mxu0
        %v3737 = vpop.f32.mrb[0].mxu0
        %v3738 = vadd.f32 %v3651, %v3737
        %v3739 = vpop.f32.mrb[0].mxu0
        %3740 = vmatprep.mubr.bf16.mxu0 0
        %3741 = vmatmul.mubr.bf16.gmra.mrb[0].mxu0 %v3617
        %v3742 = vpop.f32.mrb[0].mxu0
        %v3743 = vadd.f32 %v3651, %v3742
        %v3744 = vpop.f32.mrb[0].mxu0
        %v3745 = vpop.f32.mrb[0].mxu0
        %v3746 = vadd.f32 %v3651, %v3745
        %v3747 = vpop.f32.mrb[0].mxu0
        %3748 = vmatprep.mubr.bf16.mxu0 0
        %3749 = vmatmul.mubr.bf16.gmra.mrb[0].mxu0 %v3618
        %v3750 = vpop.f32.mrb[0].mxu0
        %v3751 = vadd.f32 %v3651, %v3750
        %v3752 = vpop.f32.mrb[0].mxu0
        %v3753 = vpop.f32.mrb[0].mxu0
        %v3754 = vadd.f32 %v3651, %v3753
        %v3755 = vpop.f32.mrb[0].mxu0
        %3756 = vmatprep.mubr.bf16.mxu0 0
        %3757 = vmatmul.mubr.bf16.gmra.mrb[0].mxu0 %v3619
        %v3758 = vpop.f32.mrb[0].mxu0
        %v3759 = vadd.f32 %v3651, %v3758
        %v3760 = vpop.f32.mrb[0].mxu0
        %v3761 = vpop.f32.mrb[0].mxu0
        %v3762 = vadd.f32 %v3651, %v3761
        %v3763 = vpop.f32.mrb[0].mxu0
        %3764 = vmatprep.mubr.bf16.mxu0 0
        %3765 = vmatmul.mubr.bf16.gmra.mrb[0].mxu0 %v3620
        %v3766 = vpop.f32.mrb[0].mxu0
        %v3767 = vadd.f32 %v3651, %v3766
        %v3768 = vpop.f32.mrb[0].mxu0
        %v3769 = vpop.f32.mrb[0].mxu0
        %v3770 = vadd.f32 %v3651, %v3769
        %v3771 = vpop.f32.mrb[0].mxu0
        %3772 = vmatprep.mubr.bf16.mxu0 0
        %3773 = vmatmul.mubr.bf16.gmra.mrb[0].mxu0 %v3621
        %v3774 = vpop.f32.mrb[0].mxu0
        %v3775 = vadd.f32 %v3651, %v3774
        %v3776 = vpop.f32.mrb[0].mxu0
        %v3777 = vpop.f32.mrb[0].mxu0
        %v3778 = vadd.f32 %v3651, %v3777
        %v3779 = vpop.f32.mrb[0].mxu0
        %3780 = vmatprep.mubr.bf16.mxu0 0
        %3781 = vmatmul.mubr.bf16.gmra.mrb[0].mxu0 %v3622
        %v3782 = vpop.f32.mrb[0].mxu0
        %v3783 = vadd.f32 %v3651, %v3782
        %v3784 = vpop.f32.mrb[0].mxu0
        %v3785 = vpop.f32.mrb[0].mxu0
        %v3786 = vadd.f32 %v3651, %v3785
        %v3787 = vpop.f32.mrb[0].mxu0
        %3788 = vmatprep.mubr.bf16.mxu0 0
        %3789 = vmatmul.mubr.bf16.gmra.mrb[0].mxu0 %v3623
        %v3790 = vpop.f32.mrb[0].mxu0
        %v3791 = vadd.f32 %v3651, %v3790
        %v3792 = vpop.f32.mrb[0].mxu0
        %v3793 = vpop.f32.mrb[0].mxu0
        %v3794 = vadd.f32 %v3651, %v3793
        %v3795 = vpop.f32.mrb[0].mxu0
        %3796 = vmatprep.mubr.bf16.mxu0 0
        %3797 = vmatmul.mubr.bf16.gmra.mrb[0].mxu0 %v3624
        %v3798 = vpop.f32.mrb[0].mxu0
        %v3799 = vadd.f32 %v3651, %v3798
        %v3800 = vpop.f32.mrb[0].mxu0
        %v3801 = vpop.f32.mrb[0].mxu0
        %v3802 = vadd.f32 %v3651, %v3801
        %v3803 = vpop.f32.mrb[0].mxu0
        %3804 = vmatprep.mubr.bf16.mxu0 0
        %3805 = vmatmul.mubr.bf16.gmra.mrb[0].mxu0 %v3625
        %v3806 = vpop.f32.mrb[0].mxu0
        %v3807 = vadd.f32 %v3651, %v3806
        %v3808 = vpop.f32.mrb[0].mxu0
        %v3809 = vpop.f32.mrb[0].mxu0
        %v3810 = vadd.f32 %v3651, %v3809
        %v3811 = vpop.f32.mrb[0].mxu0
        %3812 = vmatprep.mubr.bf16.mxu0 0
        %3813 = vmatmul.mubr.bf16.gmra.mrb[0].mxu0 %v3626
        %v3814 = vpop.f32.mrb[0].mxu0
        %v3815 = vadd.f32 %v3651, %v3814
        %v3816 = vpop.f32.mrb[0].mxu0
        %v3817 = vpop.f32.mrb[0].mxu0
        %v3818 = vadd.f32 %v3651, %v3817
        %v3819 = vpop.f32.mrb[0].mxu0
        %3820 = vmatprep.mubr.bf16.mxu0 0
        %3821 = vmatmul.mubr.bf16.gmra.mrb[0].mxu0 %v3627
        %v3822 = vpop.f32.mrb[0].mxu0
        %v3823 = vadd.f32 %v3651, %v3822
        %v3824 = vpop.f32.mrb[0].mxu0
        %v3825 = vpop.f32.mrb[0].mxu0
        %v3826 = vadd.f32 %v3651, %v3825
        %v3827 = vpop.f32.mrb[0].mxu0
        %3828 = vmatprep.mubr.bf16.mxu0 0
        %3829 = vmatmul.mubr.bf16.gmra.mrb[0].mxu0 %v3628
        %v3830 = vpop.f32.mrb[0].mxu0
        %v3831 = vadd.f32 %v3651, %v3830
        %v3832 = vpop.f32.mrb[0].mxu0
        %v3833 = vpop.f32.mrb[0].mxu0
        %v3834 = vadd.f32 %v3651, %v3833
        %v3835 = vpop.f32.mrb[0].mxu0
        %3836 = vmatprep.mubr.bf16.mxu0 0
        %3837 = vmatmul.mubr.bf16.gmra.mrb[0].mxu0 %v3629
        %v3838 = vpop.f32.mrb[0].mxu0
        %v3839 = vadd.f32 %v3651, %v3838
        %v3840 = vpop.f32.mrb[0].mxu0
        %v3841 = vpop.f32.mrb[0].mxu0
        %v3842 = vadd.f32 %v3651, %v3841
        %v3843 = vpop.f32.mrb[0].mxu0
        %3844 = vmatprep.mubr.bf16.mxu0 0
        %3845 = vmatmul.mubr.bf16.gmra.mrb[0].mxu0 %v3630
        %v3846 = vpop.f32.mrb[0].mxu0
        %v3847 = vadd.f32 %v3651, %v3846
        %v3848 = vpop.f32.mrb[0].mxu0
        %v3849 = vpop.f32.mrb[0].mxu0
        %v3850 = vadd.f32 %v3651, %v3849
        %v3851 = vpop.f32.mrb[0].mxu0
        %3852 = vmatprep.mubr.bf16.mxu0 0
        %3853 = vmatmul.mubr.bf16.gmra.mrb[0].mxu0 %v3631
        %v3854 = vpop.f32.mrb[0].mxu0
        %v3855 = vadd.f32 %v3651, %v3854
        %v3856 = vpop.f32.mrb[0].mxu0
        %v3857 = vpop.f32.mrb[0].mxu0
        %v3858 = vadd.f32 %v3651, %v3857
        %v3859 = vpop.f32.mrb[0].mxu0
        %3860 = vdwg.mxu0
        %3861 = vst [vmem:[%s245] sm:$0xff] %v3735
        %3862 = vst [vmem:[%s245 + $0x8] sm:$0xff] %v3738
        %3863 = vst [vmem:[%s245 + $0x10] sm:$0xff] %v3743
        %3864 = vst [vmem:[%s245 + $0x18] sm:$0xff] %v3746
        %3865 = vst [vmem:[%s245 + $0x20] sm:$0xff] %v3751
        %3866 = vst [vmem:[%s245 + $0x28] sm:$0xff] %v3754
        %3867 = vst [vmem:[%s245 + $0x30] sm:$0xff] %v3759
        %3868 = vst [vmem:[%s245 + $0x38] sm:$0xff] %v3762
        %3869 = vst [vmem:[%s245 + $0x40] sm:$0xff] %v3767
        %3870 = vst [vmem:[%s245 + $0x48] sm:$0xff] %v3770
        %3871 = vst [vmem:[%s245 + $0x50] sm:$0xff] %v3775
        %3872 = vst [vmem:[%s245 + $0x58] sm:$0xff] %v3778
        %3873 = vst [vmem:[%s245 + $0x60] sm:$0xff] %v3783
        %3874 = vst [vmem:[%s245 + $0x68] sm:$0xff] %v3786
        %3875 = vst [vmem:[%s245 + $0x70] sm:$0xff] %v3791
        %3876 = vst [vmem:[%s245 + $0x78] sm:$0xff] %v3794
        %3877 = vst [vmem:[%s245 + $0x80] sm:$0xff] %v3799
        %3878 = vst [vmem:[%s245 + $0x88] sm:$0xff] %v3802
        %3879 = vst [vmem:[%s245 + $0x90] sm:$0xff] %v3807
        %3880 = vst [vmem:[%s245 + $0x98] sm:$0xff] %v3810
        %3881 = vst [vmem:[%s245 + $0xa0] sm:$0xff] %v3815
        %3882 = vst [vmem:[%s245 + $0xa8] sm:$0xff] %v3818
        %3883 = vst [vmem:[%s245 + $0xb0] sm:$0xff] %v3823
        %3884 = vst [vmem:[%s245 + $0xb8] sm:$0xff] %v3826
        %3885 = vst [vmem:[%s245 + $0xc0] sm:$0xff] %v3831
        %3886 = vst [vmem:[%s245 + $0xc8] sm:$0xff] %v3834
        %3887 = vst [vmem:[%s245 + $0xd0] sm:$0xff] %v3839
        %3888 = vst [vmem:[%s245 + $0xd8] sm:$0xff] %v3842
        %3889 = vst [vmem:[%s245 + $0xe0] sm:$0xff] %v3847
        %3890 = vst [vmem:[%s245 + $0xe8] sm:$0xff] %v3850
        %3891 = vst [vmem:[%s245 + $0xf0] sm:$0xff] %v3855
        %3892 = vst [vmem:[%s245 + $0xf8] sm:$0xff] %v3858
        %s3893 = sand.u32 %s159, 1
        %s3894 = scalar_lea.sflag [#allocation3], %s3893
        %s3895 = sand.u32 %s159, 1
        %s3896 = smul.addr %s3895, 256
        %s3897 = scalar_lea.vmem [#allocation2], %s3896
        // Predicated region
        $region45: #{tpu_custom_call.1} parent=43 // pred_check
          %p3898 = pneg %p169
        $region46: #{tpu_custom_call.1} parent=43 // pred_check_branch
          %3900 = sbr.rel (%p3898) target = $region48
        $region47: #{tpu_custom_call.1} parent=43 // pred_region
          %s3901 = smul.u32 32, %s20
          %s3903 = ssub.s32 4096, 4096
          %3904 = vsyncadd %s3894, %s3903
          %s3905 = smul.addr %s3901, 128
          %s3906 = scalar_lea.hbm %s6, %s3905
          %s3907 = sshll.u32 %s3897, 4
          %s3908 = int_to_ptr.vmem [resolvable:$true] %s3907
          %3913 = dma.vmem_to_hbm [thread:$0]  %s3908, 4096, %s3906, %s3894, 128, 128, 8
        $region48: #{tpu_custom_call.1} parent=43 // pred_fallthru
          _
      $region44: #{tpu_custom_call.1} parent=5 // pred_fallthru
        _
      %p3914 = scmp.le.s32.totalorder 2, %s15
      // Predicated region
      $region49: #{tpu_custom_call.1} parent=5 // pred_check
        %p3915 = pneg %p3914
      $region50: #{tpu_custom_call.1} parent=5 // pred_check_branch
        %3917 = sbr.rel (%p3915) target = $region52
      $region51: #{tpu_custom_call.1} parent=5 // pred_region
        %s3918 = ssub.s32 %s15, 2
        // Predicated region
        $region53: #{tpu_custom_call.1} parent=51 // pred_check
          %p3919 = pneg %p175
        $region54: #{tpu_custom_call.1} parent=51 // pred_check_branch
          %3921 = sbr.rel (%p3919) target = $region56
        $region55: #{tpu_custom_call.1} parent=51 // pred_region
          %s3922 = sand.u32 %s160, 1
          %s3923 = scalar_lea.sflag [#allocation3], %s3922
          %s3924 = sand.u32 %s160, 1
          %s3925 = smul.addr %s3924, 256
          %s3926 = scalar_lea.vmem [#allocation2], %s3925
          %3927 = dma.done %s3923, 4096
        $region56: #{tpu_custom_call.1} parent=51 // pred_fallthru
          _
      $region52: #{tpu_custom_call.1} parent=5 // pred_fallthru
        _
    $region6: #{tpu_custom_call.1} parent=1 // loop_footer
      %s19 = sadd.s32 1, %s15
    $region7: #{tpu_custom_call.1} parent=1 // loop_footer_branch
      %14 = sbr.rel target = $region3
    $region8: #{tpu_custom_call.1} parent=1 // loop_exit
      _
    %3928 = vsyncpa [#allocation3], 1
    %s3929 = scalar_lea.sflag [#allocation3], 1
    %3930 = vsyncpa %s3929, 1

</llo_original>
